<compile_context>
chip_gen: v7x
topology: tpu7x:2x2x1
jax: 0.10.0
libtpu: 0.0.40
codegen_flags: <defaults>
</compile_context>

<pallas_src>
import functools
import math

import jax
import jax.numpy as jnp
from jax import lax
from jax.experimental import pallas as pl
from jax.experimental.pallas import tpu as pltpu

LN_EPS = 1e-5     # nn.LayerNorm default
VROWS = 8         # vector-blob rows per layer: bqkv, bo, b1, b2, g1, be1, g2, be2


def _layernorm(x, gamma, beta):
    # Single-pass: E[x] and E[x^2] together, var = E[x^2] - mean^2.
    mean = jnp.mean(x, axis=-1, keepdims=True)
    meansq = jnp.mean(x * x, axis=-1, keepdims=True)
    var = meansq - mean * mean
    return (x - mean) * lax.rsqrt(var + LN_EPS) * gamma + beta


# ----------------------------- fused Pallas kernel ---------------------------

def fused_forward_kernel(num_heads, num_layers, d, hid, out_width,
                         x_ref, wqkv_ref, w1_ref, w32_ref, vec_ref, o_ref):
    """All encoder layers + the 2-layer SiLU MLP head in one gridless call.

    Blob layouts (all static offsets, sublane offsets multiples of 8):
      wqkv_ref: (L*d, 3d)        layer l rows [l*d, (l+1)*d)   (scale folded in)
      w1_ref:   (L*d, hid)       layer l rows [l*d, (l+1)*d)
      w32_ref:  (L*d + L*hid + 2d, max(d, out_width))
                rows [0, L*d)              : per-layer wo
                rows [L*d, L*d + L*hid)    : per-layer w2
                rows [L*(d+hid), +d)       : wa,   next d rows: wb
      vec_ref:  (L*8 + 2, 3d)    per-layer rows bqkv,bo,b1,b2,g1,be1,g2,be2
                then ba, bb.
    """
    x = x_ref[...]                                  # (N, d) f32, read once
    dh = d // num_heads
    w2_base = num_layers * d
    wa_base = num_layers * (d + hid)

    for l in range(num_layers):                     # static unroll over layers
        wqkv = wqkv_ref[l * d:(l + 1) * d, :]                               # (d, 3d)
        w1 = w1_ref[l * d:(l + 1) * d, :]                                   # (d, hid)
        wo = w32_ref[l * d:(l + 1) * d, :d]                                 # (d, d)
        w2 = w32_ref[w2_base + l * hid: w2_base + (l + 1) * hid, :d]        # (hid, d)
        lv = vec_ref[l * VROWS:(l + 1) * VROWS, :]                          # (8, 3d)
        bqkv = lv[0:1, :]
        bo = lv[1:2, :d]
        b1 = lv[2:3, :hid]
        b2 = lv[3:4, :d]
        g1, be1 = lv[4:5, :d], lv[5:6, :d]
        g2, be2 = lv[6:7, :d], lv[7:8, :d]

        # One fused QKV matmul (1/sqrt(dh) already folded into the q slice).
        qkv = jnp.dot(x, wqkv, preferred_element_type=jnp.float32) + bqkv   # (N, 3d)
        q, k, v = qkv[:, :d], qkv[:, d:2 * d], qkv[:, 2 * d:3 * d]

        heads = []
        for h in range(num_heads):                  # static loop over heads
            sl = slice(h * dh, (h + 1) * dh)
            qh, kh, vh = q[:, sl], k[:, sl], v[:, sl]
            s = lax.dot_general(qh, kh, (((1,), (1,)), ((), ())),
                                preferred_element_type=jnp.float32)         # (N, N)
            s = s - jnp.max(s, axis=-1, keepdims=True)
            p = jnp.exp(s)
            denom = jnp.sum(p, axis=-1, keepdims=True)
            # Exact normalization applied to the (N, dh) head output.
            heads.append(jnp.dot(p, vh, preferred_element_type=jnp.float32) / denom)

        # Single fused output projection on the lane-concat of all heads.
        attn = jnp.dot(jnp.concatenate(heads, axis=-1), wo,
                       preferred_element_type=jnp.float32) + bo

        # dropout layers are identity (eval-mode semantics)
        x = _layernorm(x + attn, g1, be1)

        ff = jnp.dot(x, w1, preferred_element_type=jnp.float32) + b1
        ff = jnp.maximum(ff, 0.0)                   # relu
        ff = jnp.dot(ff, w2, preferred_element_type=jnp.float32) + b2
        x = _layernorm(x + ff, g2, be2)

    # 2-layer SiLU MLP head, still inside the same kernel.
    wa = w32_ref[wa_base:wa_base + d, :d]
    wb = w32_ref[wa_base + d:wa_base + 2 * d, :out_width]
    hv = vec_ref[num_layers * VROWS:num_layers * VROWS + 2, :]
    ba = hv[0:1, :d]
    bb = hv[1:2, :out_width]
    hmid = jnp.dot(x, wa, preferred_element_type=jnp.float32) + ba
    hmid = hmid * jax.nn.sigmoid(hmid)              # SiLU
    o_ref[...] = jnp.dot(hmid, wb, preferred_element_type=jnp.float32) + bb


# ----------------------------- host-side packing ------------------------------

def pack_params(layer_params, mlp_params, num_heads):
    """Concatenate all parameters into 4 blobs (done once, outside the kernel)."""
    d = layer_params[0][0].shape[0]
    hid = layer_params[0][10].shape[1]
    wa, ba, wb, bb = mlp_params
    out_width = wb.shape[1]
    dh = d // num_heads
    scale = 1.0 / math.sqrt(dh)
    vec_w = max(3 * d, hid, d, out_width)
    w32_w = max(d, out_width)

    def padw(m, w):
        return jnp.pad(m, ((0, 0), (0, w - m.shape[1])))

    wqkv_rows, w1_rows, wo_rows, w2_rows, vec_rows = [], [], [], [], []
    for (wq, wk, wv, bq, bk, bv, wo, bo,
         g1, be1, w1, b1, w2, b2, g2, be2) in layer_params:
        # fold softmax 1/sqrt(dh) into Wq / bq
        wqkv_rows.append(jnp.concatenate([wq * scale, wk, wv], axis=1))
        w1_rows.append(w1)
        wo_rows.append(padw(wo, w32_w))
        w2_rows.append(padw(w2, w32_w))
        vec_rows.extend([
            padw(jnp.concatenate([bq * scale, bk, bv], axis=1), vec_w),
            padw(bo, vec_w), padw(b1, vec_w), padw(b2, vec_w),
            padw(g1, vec_w), padw(be1, vec_w),
            padw(g2, vec_w), padw(be2, vec_w),
        ])
    vec_rows.extend([padw(ba, vec_w), padw(bb, vec_w)])

    wqkv_blob = jnp.concatenate(wqkv_rows, axis=0)                        # (L*d, 3d)
    w1_blob = jnp.concatenate(w1_rows, axis=0)                            # (L*d, hid)
    w32_blob = jnp.concatenate(
        wo_rows + w2_rows + [padw(wa, w32_w), padw(wb, w32_w)], axis=0)   # (L*(d+hid)+2d, w32)
    vec_blob = jnp.concatenate(vec_rows, axis=0)                          # (L*8+2, 3d)
    return wqkv_blob, w1_blob, w32_blob, vec_blob


# --------------------------------- wrapper -----------------------------------

def transformer_dms_forward(edge_attr, packed, num_heads, num_layers, d, hid, out_width):
    x = edge_attr.astype(jnp.float32)
    n = x.shape[0]
    wqkv_blob, w1_blob, w32_blob, vec_blob = packed

    kernel = functools.partial(fused_forward_kernel,
                               num_heads, num_layers, d, hid, out_width)
    return pl.pallas_call(
        kernel,
        out_shape=jax.ShapeDtypeStruct((n, out_width), jnp.float32),
        in_specs=[pl.BlockSpec(memory_space=pltpu.MemorySpace.VMEM)] * 5,
        out_specs=pl.BlockSpec(memory_space=pltpu.MemorySpace.VMEM),
    )(x, wqkv_blob, w1_blob, w32_blob, vec_blob)


# ---------------------------- deterministic init ------------------------------

def _dense(key, fan_in, fan_out):
    kw, kb = jax.random.split(key)
    bound = 1.0 / math.sqrt(fan_in)
    # stored as (in, out) == transpose of torch Linear weight
    w = jax.random.uniform(kw, (fan_in, fan_out), jnp.float32, -bound, bound)
    b = jax.random.uniform(kb, (1, fan_out), jnp.float32, -bound, bound)
    return w, b


def init_params(key, in_dim, hid_dim, out_dim, num_heads, num_layers, seq_len):
    layer_params = []
    for _ in range(num_layers):
        key, kq, kk, kv, ko, k1, k2 = jax.random.split(key, 7)
        wq, bq = _dense(kq, in_dim, in_dim)
        wk, bk = _dense(kk, in_dim, in_dim)
        wv, bv = _dense(kv, in_dim, in_dim)
        wo, bo = _dense(ko, in_dim, in_dim)
        w1, b1 = _dense(k1, in_dim, hid_dim)
        w2, b2 = _dense(k2, hid_dim, in_dim)
        g1 = jnp.ones((1, in_dim), jnp.float32)
        be1 = jnp.zeros((1, in_dim), jnp.float32)
        g2 = jnp.ones((1, in_dim), jnp.float32)
        be2 = jnp.zeros((1, in_dim), jnp.float32)
        layer_params.append((wq, wk, wv, bq, bk, bv, wo, bo,
                             g1, be1, w1, b1, w2, b2, g2, be2))
    key, ka, kb = jax.random.split(key, 3)
    # MLP(in_dim, out_dim=seq_len*out_dim, n_layers=2): Linear(d,d)->SiLU->Linear(d, seq_len*out_dim)
    wa, ba = _dense(ka, in_dim, in_dim)
    wb, bb = _dense(kb, in_dim, seq_len * out_dim)
    return layer_params, (wa, ba, wb, bb)


# ----------------------------- pure-JAX reference -----------------------------

def reference_forward(edge_attr, layer_params, mlp_params, num_heads):
    x = edge_attr.astype(jnp.float32)
    n, d = x.shape
    dh = d // num_heads
    for (wq, wk, wv, bq, bk, bv, wo, bo,
         g1, be1, w1, b1, w2, b2, g2, be2) in layer_params:
        q = x @ wq + bq
        k = x @ wk + bk
        v = x @ wv + bv
        heads = []
        for h in range(num_heads):
            qh = q[:, h * dh:(h + 1) * dh]
            kh = k[:, h * dh:(h + 1) * dh]
            vh = v[:, h * dh:(h + 1) * dh]
            s = (qh @ kh.T) / math.sqrt(dh)
            p = jax.nn.softmax(s, axis=-1)
            heads.append(p @ vh)
        attn = jnp.concatenate(heads, axis=-1) @ wo + bo
        mu = jnp.mean(x + attn, axis=-1, keepdims=True)
        var = jnp.mean(((x + attn) - mu) ** 2, axis=-1, keepdims=True)
        x = ((x + attn) - mu) * lax.rsqrt(var + LN_EPS) * g1 + be1
        ff = jnp.maximum(x @ w1 + b1, 0.0) @ w2 + b2
        mu = jnp.mean(x + ff, axis=-1, keepdims=True)
        var = jnp.mean(((x + ff) - mu) ** 2, axis=-1, keepdims=True)
        x = ((x + ff) - mu) * lax.rsqrt(var + LN_EPS) * g2 + be2
    wa, ba, wb, bb = mlp_params
    h = x @ wa + ba
    h = h * jax.nn.sigmoid(h)
    return h @ wb + bb


# ------------------------------------ main -------------------------------------

if __name__ == "__main__":
    in_dim, hid_dim, out_dim = 32, 64, 4
    num_heads, num_layers, seq_len = 4, 2, 8
    num_edges = 16
    out_width = seq_len * out_dim

    root = jax.random.PRNGKey(0)
    k_param, k_x = jax.random.split(root)
    layer_params, mlp_params = init_params(
        k_param, in_dim, hid_dim, out_dim, num_heads, num_layers, seq_len)

    edge_attr = jax.random.normal(k_x, (num_edges, in_dim), jnp.float32)

    packed = pack_params(layer_params, mlp_params, num_heads)

    out = transformer_dms_forward(edge_attr, packed, num_heads, num_layers,
                                  in_dim, hid_dim, out_width)
    out = jax.block_until_ready(out)

    ref = jax.block_until_ready(
        reference_forward(edge_attr, layer_params, mlp_params, num_heads))

    assert out.shape == (num_edges, out_width), out.shape
    assert jnp.max(jnp.abs(out - ref)) < 2e-3, float(jnp.max(jnp.abs(out - ref)))

    print("KERNEL_OK")
</pallas_src>

<mosaic_0001>
module attributes {stable_mosaic.version = 11 : i64} {
  func.func @fused_forward_kernel(%arg0: memref<16x32xf32, #tpu.memory_space<vmem>>, %arg1: memref<64x96xf32, #tpu.memory_space<vmem>>, %arg2: memref<64x64xf32, #tpu.memory_space<vmem>>, %arg3: memref<256x32xf32, #tpu.memory_space<vmem>>, %arg4: memref<18x96xf32, #tpu.memory_space<vmem>>, %arg5: memref<16x32xf32, #tpu.memory_space<vmem>>) attributes {dimension_semantics = [], scalar_prefetch = 0 : i64, scratch_operands = 0 : i64, tpu.core_type = #tpu.core_type<tc>} {
    %c0 = arith.constant 0 : index
    %c0_0 = arith.constant 0 : index
    %0 = vector.load %arg0[%c0, %c0_0] : memref<16x32xf32, #tpu.memory_space<vmem>>, vector<16x32xf32>
    %c0_1 = arith.constant 0 : index
    %c0_2 = arith.constant 0 : index
    %1 = vector.load %arg1[%c0_1, %c0_2] : memref<64x96xf32, #tpu.memory_space<vmem>>, vector<32x96xf32>
    %c0_3 = arith.constant 0 : index
    %c0_4 = arith.constant 0 : index
    %2 = vector.load %arg2[%c0_3, %c0_4] : memref<64x64xf32, #tpu.memory_space<vmem>>, vector<32x64xf32>
    %c0_5 = arith.constant 0 : index
    %c0_6 = arith.constant 0 : index
    %3 = vector.load %arg3[%c0_5, %c0_6] : memref<256x32xf32, #tpu.memory_space<vmem>>, vector<32x32xf32>
    %c64 = arith.constant 64 : index
    %c0_7 = arith.constant 0 : index
    %4 = vector.load %arg3[%c64, %c0_7] : memref<256x32xf32, #tpu.memory_space<vmem>>, vector<64x32xf32>
    %c0_8 = arith.constant 0 : index
    %c0_9 = arith.constant 0 : index
    %5 = vector.load %arg4[%c0_8, %c0_9] : memref<18x96xf32, #tpu.memory_space<vmem>>, vector<8x96xf32>
    %6 = vector.extract_strided_slice %5 {offsets = [0, 0], sizes = [1, 96], strides = [1, 1]} : vector<8x96xf32> to vector<1x96xf32>
    %7 = vector.extract_strided_slice %5 {offsets = [1, 0], sizes = [1, 32], strides = [1, 1]} : vector<8x96xf32> to vector<1x32xf32>
    %8 = vector.extract_strided_slice %5 {offsets = [2, 0], sizes = [1, 64], strides = [1, 1]} : vector<8x96xf32> to vector<1x64xf32>
    %9 = vector.extract_strided_slice %5 {offsets = [3, 0], sizes = [1, 32], strides = [1, 1]} : vector<8x96xf32> to vector<1x32xf32>
    %10 = vector.extract_strided_slice %5 {offsets = [4, 0], sizes = [1, 32], strides = [1, 1]} : vector<8x96xf32> to vector<1x32xf32>
    %11 = vector.extract_strided_slice %5 {offsets = [5, 0], sizes = [1, 32], strides = [1, 1]} : vector<8x96xf32> to vector<1x32xf32>
    %12 = vector.extract_strided_slice %5 {offsets = [6, 0], sizes = [1, 32], strides = [1, 1]} : vector<8x96xf32> to vector<1x32xf32>
    %13 = vector.extract_strided_slice %5 {offsets = [7, 0], sizes = [1, 32], strides = [1, 1]} : vector<8x96xf32> to vector<1x32xf32>
    %cst = arith.constant dense<0.000000e+00> : vector<16x96xf32>
    %14 = tpu.matmul %0, %1, %cst {dimension_numbers = #tpu.dot_dimension_numbers<[1], [0], [0], [1], [0, 0, 1, 1], [], []>} : vector<16x32xf32>, vector<32x96xf32>, vector<16x96xf32> -> vector<16x96xf32>
    %15 = vector.broadcast %6 : vector<1x96xf32> to vector<16x96xf32>
    %16 = arith.addf %14, %15 : vector<16x96xf32>
    %17 = vector.extract_strided_slice %16 {offsets = [0, 0], sizes = [16, 32], strides = [1, 1]} : vector<16x96xf32> to vector<16x32xf32>
    %18 = vector.extract_strided_slice %16 {offsets = [0, 32], sizes = [16, 32], strides = [1, 1]} : vector<16x96xf32> to vector<16x32xf32>
    %19 = vector.extract_strided_slice %16 {offsets = [0, 64], sizes = [16, 32], strides = [1, 1]} : vector<16x96xf32> to vector<16x32xf32>
    %20 = vector.extract_strided_slice %17 {offsets = [0, 0], sizes = [16, 8], strides = [1, 1]} : vector<16x32xf32> to vector<16x8xf32>
    %21 = vector.extract_strided_slice %18 {offsets = [0, 0], sizes = [16, 8], strides = [1, 1]} : vector<16x32xf32> to vector<16x8xf32>
    %22 = vector.extract_strided_slice %19 {offsets = [0, 0], sizes = [16, 8], strides = [1, 1]} : vector<16x32xf32> to vector<16x8xf32>
    %cst_10 = arith.constant dense<0.000000e+00> : vector<16x16xf32>
    %23 = tpu.matmul %20, %21, %cst_10 {dimension_numbers = #tpu.dot_dimension_numbers<[1], [1], [0], [0], [0, 0, 1, 0], [], []>} : vector<16x8xf32>, vector<16x8xf32>, vector<16x16xf32> -> vector<16x16xf32>
    %cst_11 = arith.constant dense<0xFF800000> : vector<16xf32>
    %24 = vector.multi_reduction <maximumf>, %23, %cst_11 [1] : vector<16x16xf32> to vector<16xf32>
    %25 = vector.shape_cast %24 : vector<16xf32> to vector<16x1xf32>
    %26 = vector.broadcast %25 : vector<16x1xf32> to vector<16x16xf32>
    %27 = arith.subf %23, %26 : vector<16x16xf32>
    %28 = math.exp %27 : vector<16x16xf32>
    %cst_12 = arith.constant dense<0.000000e+00> : vector<16xf32>
    %29 = vector.multi_reduction <add>, %28, %cst_12 [1] : vector<16x16xf32> to vector<16xf32>
    %30 = vector.shape_cast %29 : vector<16xf32> to vector<16x1xf32>
    %cst_13 = arith.constant dense<0.000000e+00> : vector<16x8xf32>
    %31 = tpu.matmul %28, %22, %cst_13 {dimension_numbers = #tpu.dot_dimension_numbers<[1], [0], [0], [1], [0, 0, 1, 1], [], []>} : vector<16x16xf32>, vector<16x8xf32>, vector<16x8xf32> -> vector<16x8xf32>
    %32 = vector.broadcast %30 : vector<16x1xf32> to vector<16x8xf32>
    %33 = arith.divf %31, %32 : vector<16x8xf32>
    %34 = vector.extract_strided_slice %17 {offsets = [0, 8], sizes = [16, 8], strides = [1, 1]} : vector<16x32xf32> to vector<16x8xf32>
    %35 = vector.extract_strided_slice %18 {offsets = [0, 8], sizes = [16, 8], strides = [1, 1]} : vector<16x32xf32> to vector<16x8xf32>
    %36 = vector.extract_strided_slice %19 {offsets = [0, 8], sizes = [16, 8], strides = [1, 1]} : vector<16x32xf32> to vector<16x8xf32>
    %cst_14 = arith.constant dense<0.000000e+00> : vector<16x16xf32>
    %37 = tpu.matmul %34, %35, %cst_14 {dimension_numbers = #tpu.dot_dimension_numbers<[1], [1], [0], [0], [0, 0, 1, 0], [], []>} : vector<16x8xf32>, vector<16x8xf32>, vector<16x16xf32> -> vector<16x16xf32>
    %cst_15 = arith.constant dense<0xFF800000> : vector<16xf32>
    %38 = vector.multi_reduction <maximumf>, %37, %cst_15 [1] : vector<16x16xf32> to vector<16xf32>
    %39 = vector.shape_cast %38 : vector<16xf32> to vector<16x1xf32>
    %40 = vector.broadcast %39 : vector<16x1xf32> to vector<16x16xf32>
    %41 = arith.subf %37, %40 : vector<16x16xf32>
    %42 = math.exp %41 : vector<16x16xf32>
    %cst_16 = arith.constant dense<0.000000e+00> : vector<16xf32>
    %43 = vector.multi_reduction <add>, %42, %cst_16 [1] : vector<16x16xf32> to vector<16xf32>
    %44 = vector.shape_cast %43 : vector<16xf32> to vector<16x1xf32>
    %cst_17 = arith.constant dense<0.000000e+00> : vector<16x8xf32>
    %45 = tpu.matmul %42, %36, %cst_17 {dimension_numbers = #tpu.dot_dimension_numbers<[1], [0], [0], [1], [0, 0, 1, 1], [], []>} : vector<16x16xf32>, vector<16x8xf32>, vector<16x8xf32> -> vector<16x8xf32>
    %46 = vector.broadcast %44 : vector<16x1xf32> to vector<16x8xf32>
    %47 = arith.divf %45, %46 : vector<16x8xf32>
    %48 = vector.extract_strided_slice %17 {offsets = [0, 16], sizes = [16, 8], strides = [1, 1]} : vector<16x32xf32> to vector<16x8xf32>
    %49 = vector.extract_strided_slice %18 {offsets = [0, 16], sizes = [16, 8], strides = [1, 1]} : vector<16x32xf32> to vector<16x8xf32>
    %50 = vector.extract_strided_slice %19 {offsets = [0, 16], sizes = [16, 8], strides = [1, 1]} : vector<16x32xf32> to vector<16x8xf32>
    %cst_18 = arith.constant dense<0.000000e+00> : vector<16x16xf32>
    %51 = tpu.matmul %48, %49, %cst_18 {dimension_numbers = #tpu.dot_dimension_numbers<[1], [1], [0], [0], [0, 0, 1, 0], [], []>} : vector<16x8xf32>, vector<16x8xf32>, vector<16x16xf32> -> vector<16x16xf32>
    %cst_19 = arith.constant dense<0xFF800000> : vector<16xf32>
    %52 = vector.multi_reduction <maximumf>, %51, %cst_19 [1] : vector<16x16xf32> to vector<16xf32>
    %53 = vector.shape_cast %52 : vector<16xf32> to vector<16x1xf32>
    %54 = vector.broadcast %53 : vector<16x1xf32> to vector<16x16xf32>
    %55 = arith.subf %51, %54 : vector<16x16xf32>
    %56 = math.exp %55 : vector<16x16xf32>
    %cst_20 = arith.constant dense<0.000000e+00> : vector<16xf32>
    %57 = vector.multi_reduction <add>, %56, %cst_20 [1] : vector<16x16xf32> to vector<16xf32>
    %58 = vector.shape_cast %57 : vector<16xf32> to vector<16x1xf32>
    %cst_21 = arith.constant dense<0.000000e+00> : vector<16x8xf32>
    %59 = tpu.matmul %56, %50, %cst_21 {dimension_numbers = #tpu.dot_dimension_numbers<[1], [0], [0], [1], [0, 0, 1, 1], [], []>} : vector<16x16xf32>, vector<16x8xf32>, vector<16x8xf32> -> vector<16x8xf32>
    %60 = vector.broadcast %58 : vector<16x1xf32> to vector<16x8xf32>
    %61 = arith.divf %59, %60 : vector<16x8xf32>
    %62 = vector.extract_strided_slice %17 {offsets = [0, 24], sizes = [16, 8], strides = [1, 1]} : vector<16x32xf32> to vector<16x8xf32>
    %63 = vector.extract_strided_slice %18 {offsets = [0, 24], sizes = [16, 8], strides = [1, 1]} : vector<16x32xf32> to vector<16x8xf32>
    %64 = vector.extract_strided_slice %19 {offsets = [0, 24], sizes = [16, 8], strides = [1, 1]} : vector<16x32xf32> to vector<16x8xf32>
    %cst_22 = arith.constant dense<0.000000e+00> : vector<16x16xf32>
    %65 = tpu.matmul %62, %63, %cst_22 {dimension_numbers = #tpu.dot_dimension_numbers<[1], [1], [0], [0], [0, 0, 1, 0], [], []>} : vector<16x8xf32>, vector<16x8xf32>, vector<16x16xf32> -> vector<16x16xf32>
    %cst_23 = arith.constant dense<0xFF800000> : vector<16xf32>
    %66 = vector.multi_reduction <maximumf>, %65, %cst_23 [1] : vector<16x16xf32> to vector<16xf32>
    %67 = vector.shape_cast %66 : vector<16xf32> to vector<16x1xf32>
    %68 = vector.broadcast %67 : vector<16x1xf32> to vector<16x16xf32>
    %69 = arith.subf %65, %68 : vector<16x16xf32>
    %70 = math.exp %69 : vector<16x16xf32>
    %cst_24 = arith.constant dense<0.000000e+00> : vector<16xf32>
    %71 = vector.multi_reduction <add>, %70, %cst_24 [1] : vector<16x16xf32> to vector<16xf32>
    %72 = vector.shape_cast %71 : vector<16xf32> to vector<16x1xf32>
    %cst_25 = arith.constant dense<0.000000e+00> : vector<16x8xf32>
    %73 = tpu.matmul %70, %64, %cst_25 {dimension_numbers = #tpu.dot_dimension_numbers<[1], [0], [0], [1], [0, 0, 1, 1], [], []>} : vector<16x16xf32>, vector<16x8xf32>, vector<16x8xf32> -> vector<16x8xf32>
    %74 = vector.broadcast %72 : vector<16x1xf32> to vector<16x8xf32>
    %75 = arith.divf %73, %74 : vector<16x8xf32>
    %76 = tpu.concatenate %33, %47, %61, %75 in 1 : vector<16x8xf32>, vector<16x8xf32>, vector<16x8xf32>, vector<16x8xf32> -> vector<16x32xf32>
    %cst_26 = arith.constant dense<0.000000e+00> : vector<16x32xf32>
    %77 = tpu.matmul %76, %3, %cst_26 {dimension_numbers = #tpu.dot_dimension_numbers<[1], [0], [0], [1], [0, 0, 1, 1], [], []>} : vector<16x32xf32>, vector<32x32xf32>, vector<16x32xf32> -> vector<16x32xf32>
    %78 = vector.broadcast %7 : vector<1x32xf32> to vector<16x32xf32>
    %79 = arith.addf %77, %78 : vector<16x32xf32>
    %80 = arith.addf %0, %79 : vector<16x32xf32>
    %cst_27 = arith.constant dense<0.000000e+00> : vector<16xf32>
    %81 = vector.multi_reduction <add>, %80, %cst_27 [1] : vector<16x32xf32> to vector<16xf32>
    %82 = vector.shape_cast %81 : vector<16xf32> to vector<16x1xf32>
    %cst_28 = arith.constant 3.200000e+01 : f32
    %83 = vector.broadcast %cst_28 : f32 to vector<16x1xf32>
    %84 = arith.divf %82, %83 : vector<16x1xf32>
    %85 = arith.mulf %80, %80 : vector<16x32xf32>
    %cst_29 = arith.constant dense<0.000000e+00> : vector<16xf32>
    %86 = vector.multi_reduction <add>, %85, %cst_29 [1] : vector<16x32xf32> to vector<16xf32>
    %87 = vector.shape_cast %86 : vector<16xf32> to vector<16x1xf32>
    %cst_30 = arith.constant 3.200000e+01 : f32
    %88 = vector.broadcast %cst_30 : f32 to vector<16x1xf32>
    %89 = arith.divf %87, %88 : vector<16x1xf32>
    %90 = arith.mulf %84, %84 : vector<16x1xf32>
    %91 = arith.subf %89, %90 : vector<16x1xf32>
    %92 = vector.broadcast %84 : vector<16x1xf32> to vector<16x32xf32>
    %93 = arith.subf %80, %92 : vector<16x32xf32>
    %cst_31 = arith.constant 9.99999974E-6 : f32
    %94 = vector.broadcast %cst_31 : f32 to vector<16x1xf32>
    %95 = arith.addf %91, %94 : vector<16x1xf32>
    %96 = math.rsqrt %95 : vector<16x1xf32>
    %97 = vector.broadcast %96 : vector<16x1xf32> to vector<16x32xf32>
    %98 = arith.mulf %93, %97 : vector<16x32xf32>
    %99 = vector.broadcast %10 : vector<1x32xf32> to vector<16x32xf32>
    %100 = arith.mulf %98, %99 : vector<16x32xf32>
    %101 = vector.broadcast %11 : vector<1x32xf32> to vector<16x32xf32>
    %102 = arith.addf %100, %101 : vector<16x32xf32>
    %cst_32 = arith.constant dense<0.000000e+00> : vector<16x64xf32>
    %103 = tpu.matmul %102, %2, %cst_32 {dimension_numbers = #tpu.dot_dimension_numbers<[1], [0], [0], [1], [0, 0, 1, 1], [], []>} : vector<16x32xf32>, vector<32x64xf32>, vector<16x64xf32> -> vector<16x64xf32>
    %104 = vector.broadcast %8 : vector<1x64xf32> to vector<16x64xf32>
    %105 = arith.addf %103, %104 : vector<16x64xf32>
    %cst_33 = arith.constant 0.000000e+00 : f32
    %106 = vector.broadcast %cst_33 : f32 to vector<16x64xf32>
    %107 = arith.maximumf %105, %106 : vector<16x64xf32>
    %cst_34 = arith.constant dense<0.000000e+00> : vector<16x32xf32>
    %108 = tpu.matmul %107, %4, %cst_34 {dimension_numbers = #tpu.dot_dimension_numbers<[1], [0], [0], [1], [0, 0, 1, 1], [], []>} : vector<16x64xf32>, vector<64x32xf32>, vector<16x32xf32> -> vector<16x32xf32>
    %109 = vector.broadcast %9 : vector<1x32xf32> to vector<16x32xf32>
    %110 = arith.addf %108, %109 : vector<16x32xf32>
    %111 = arith.addf %102, %110 : vector<16x32xf32>
    %cst_35 = arith.constant dense<0.000000e+00> : vector<16xf32>
    %112 = vector.multi_reduction <add>, %111, %cst_35 [1] : vector<16x32xf32> to vector<16xf32>
    %113 = vector.shape_cast %112 : vector<16xf32> to vector<16x1xf32>
    %cst_36 = arith.constant 3.200000e+01 : f32
    %114 = vector.broadcast %cst_36 : f32 to vector<16x1xf32>
    %115 = arith.divf %113, %114 : vector<16x1xf32>
    %116 = arith.mulf %111, %111 : vector<16x32xf32>
    %cst_37 = arith.constant dense<0.000000e+00> : vector<16xf32>
    %117 = vector.multi_reduction <add>, %116, %cst_37 [1] : vector<16x32xf32> to vector<16xf32>
    %118 = vector.shape_cast %117 : vector<16xf32> to vector<16x1xf32>
    %cst_38 = arith.constant 3.200000e+01 : f32
    %119 = vector.broadcast %cst_38 : f32 to vector<16x1xf32>
    %120 = arith.divf %118, %119 : vector<16x1xf32>
    %121 = arith.mulf %115, %115 : vector<16x1xf32>
    %122 = arith.subf %120, %121 : vector<16x1xf32>
    %123 = vector.broadcast %115 : vector<16x1xf32> to vector<16x32xf32>
    %124 = arith.subf %111, %123 : vector<16x32xf32>
    %cst_39 = arith.constant 9.99999974E-6 : f32
    %125 = vector.broadcast %cst_39 : f32 to vector<16x1xf32>
    %126 = arith.addf %122, %125 : vector<16x1xf32>
    %127 = math.rsqrt %126 : vector<16x1xf32>
    %128 = vector.broadcast %127 : vector<16x1xf32> to vector<16x32xf32>
    %129 = arith.mulf %124, %128 : vector<16x32xf32>
    %130 = vector.broadcast %12 : vector<1x32xf32> to vector<16x32xf32>
    %131 = arith.mulf %129, %130 : vector<16x32xf32>
    %132 = vector.broadcast %13 : vector<1x32xf32> to vector<16x32xf32>
    %133 = arith.addf %131, %132 : vector<16x32xf32>
    %c32 = arith.constant 32 : index
    %c0_40 = arith.constant 0 : index
    %134 = vector.load %arg1[%c32, %c0_40] : memref<64x96xf32, #tpu.memory_space<vmem>>, vector<32x96xf32>
    %c32_41 = arith.constant 32 : index
    %c0_42 = arith.constant 0 : index
    %135 = vector.load %arg2[%c32_41, %c0_42] : memref<64x64xf32, #tpu.memory_space<vmem>>, vector<32x64xf32>
    %c32_43 = arith.constant 32 : index
    %c0_44 = arith.constant 0 : index
    %136 = vector.load %arg3[%c32_43, %c0_44] : memref<256x32xf32, #tpu.memory_space<vmem>>, vector<32x32xf32>
    %c128 = arith.constant 128 : index
    %c0_45 = arith.constant 0 : index
    %137 = vector.load %arg3[%c128, %c0_45] : memref<256x32xf32, #tpu.memory_space<vmem>>, vector<64x32xf32>
    %c8 = arith.constant 8 : index
    %c0_46 = arith.constant 0 : index
    %138 = vector.load %arg4[%c8, %c0_46] : memref<18x96xf32, #tpu.memory_space<vmem>>, vector<8x96xf32>
    %139 = vector.extract_strided_slice %138 {offsets = [0, 0], sizes = [1, 96], strides = [1, 1]} : vector<8x96xf32> to vector<1x96xf32>
    %140 = vector.extract_strided_slice %138 {offsets = [1, 0], sizes = [1, 32], strides = [1, 1]} : vector<8x96xf32> to vector<1x32xf32>
    %141 = vector.extract_strided_slice %138 {offsets = [2, 0], sizes = [1, 64], strides = [1, 1]} : vector<8x96xf32> to vector<1x64xf32>
    %142 = vector.extract_strided_slice %138 {offsets = [3, 0], sizes = [1, 32], strides = [1, 1]} : vector<8x96xf32> to vector<1x32xf32>
    %143 = vector.extract_strided_slice %138 {offsets = [4, 0], sizes = [1, 32], strides = [1, 1]} : vector<8x96xf32> to vector<1x32xf32>
    %144 = vector.extract_strided_slice %138 {offsets = [5, 0], sizes = [1, 32], strides = [1, 1]} : vector<8x96xf32> to vector<1x32xf32>
    %145 = vector.extract_strided_slice %138 {offsets = [6, 0], sizes = [1, 32], strides = [1, 1]} : vector<8x96xf32> to vector<1x32xf32>
    %146 = vector.extract_strided_slice %138 {offsets = [7, 0], sizes = [1, 32], strides = [1, 1]} : vector<8x96xf32> to vector<1x32xf32>
    %cst_47 = arith.constant dense<0.000000e+00> : vector<16x96xf32>
    %147 = tpu.matmul %133, %134, %cst_47 {dimension_numbers = #tpu.dot_dimension_numbers<[1], [0], [0], [1], [0, 0, 1, 1], [], []>} : vector<16x32xf32>, vector<32x96xf32>, vector<16x96xf32> -> vector<16x96xf32>
    %148 = vector.broadcast %139 : vector<1x96xf32> to vector<16x96xf32>
    %149 = arith.addf %147, %148 : vector<16x96xf32>
    %150 = vector.extract_strided_slice %149 {offsets = [0, 0], sizes = [16, 32], strides = [1, 1]} : vector<16x96xf32> to vector<16x32xf32>
    %151 = vector.extract_strided_slice %149 {offsets = [0, 32], sizes = [16, 32], strides = [1, 1]} : vector<16x96xf32> to vector<16x32xf32>
    %152 = vector.extract_strided_slice %149 {offsets = [0, 64], sizes = [16, 32], strides = [1, 1]} : vector<16x96xf32> to vector<16x32xf32>
    %153 = vector.extract_strided_slice %150 {offsets = [0, 0], sizes = [16, 8], strides = [1, 1]} : vector<16x32xf32> to vector<16x8xf32>
    %154 = vector.extract_strided_slice %151 {offsets = [0, 0], sizes = [16, 8], strides = [1, 1]} : vector<16x32xf32> to vector<16x8xf32>
    %155 = vector.extract_strided_slice %152 {offsets = [0, 0], sizes = [16, 8], strides = [1, 1]} : vector<16x32xf32> to vector<16x8xf32>
    %cst_48 = arith.constant dense<0.000000e+00> : vector<16x16xf32>
    %156 = tpu.matmul %153, %154, %cst_48 {dimension_numbers = #tpu.dot_dimension_numbers<[1], [1], [0], [0], [0, 0, 1, 0], [], []>} : vector<16x8xf32>, vector<16x8xf32>, vector<16x16xf32> -> vector<16x16xf32>
    %cst_49 = arith.constant dense<0xFF800000> : vector<16xf32>
    %157 = vector.multi_reduction <maximumf>, %156, %cst_49 [1] : vector<16x16xf32> to vector<16xf32>
    %158 = vector.shape_cast %157 : vector<16xf32> to vector<16x1xf32>
    %159 = vector.broadcast %158 : vector<16x1xf32> to vector<16x16xf32>
    %160 = arith.subf %156, %159 : vector<16x16xf32>
    %161 = math.exp %160 : vector<16x16xf32>
    %cst_50 = arith.constant dense<0.000000e+00> : vector<16xf32>
    %162 = vector.multi_reduction <add>, %161, %cst_50 [1] : vector<16x16xf32> to vector<16xf32>
    %163 = vector.shape_cast %162 : vector<16xf32> to vector<16x1xf32>
    %cst_51 = arith.constant dense<0.000000e+00> : vector<16x8xf32>
    %164 = tpu.matmul %161, %155, %cst_51 {dimension_numbers = #tpu.dot_dimension_numbers<[1], [0], [0], [1], [0, 0, 1, 1], [], []>} : vector<16x16xf32>, vector<16x8xf32>, vector<16x8xf32> -> vector<16x8xf32>
    %165 = vector.broadcast %163 : vector<16x1xf32> to vector<16x8xf32>
    %166 = arith.divf %164, %165 : vector<16x8xf32>
    %167 = vector.extract_strided_slice %150 {offsets = [0, 8], sizes = [16, 8], strides = [1, 1]} : vector<16x32xf32> to vector<16x8xf32>
    %168 = vector.extract_strided_slice %151 {offsets = [0, 8], sizes = [16, 8], strides = [1, 1]} : vector<16x32xf32> to vector<16x8xf32>
    %169 = vector.extract_strided_slice %152 {offsets = [0, 8], sizes = [16, 8], strides = [1, 1]} : vector<16x32xf32> to vector<16x8xf32>
    %cst_52 = arith.constant dense<0.000000e+00> : vector<16x16xf32>
    %170 = tpu.matmul %167, %168, %cst_52 {dimension_numbers = #tpu.dot_dimension_numbers<[1], [1], [0], [0], [0, 0, 1, 0], [], []>} : vector<16x8xf32>, vector<16x8xf32>, vector<16x16xf32> -> vector<16x16xf32>
    %cst_53 = arith.constant dense<0xFF800000> : vector<16xf32>
    %171 = vector.multi_reduction <maximumf>, %170, %cst_53 [1] : vector<16x16xf32> to vector<16xf32>
    %172 = vector.shape_cast %171 : vector<16xf32> to vector<16x1xf32>
    %173 = vector.broadcast %172 : vector<16x1xf32> to vector<16x16xf32>
    %174 = arith.subf %170, %173 : vector<16x16xf32>
    %175 = math.exp %174 : vector<16x16xf32>
    %cst_54 = arith.constant dense<0.000000e+00> : vector<16xf32>
    %176 = vector.multi_reduction <add>, %175, %cst_54 [1] : vector<16x16xf32> to vector<16xf32>
    %177 = vector.shape_cast %176 : vector<16xf32> to vector<16x1xf32>
    %cst_55 = arith.constant dense<0.000000e+00> : vector<16x8xf32>
    %178 = tpu.matmul %175, %169, %cst_55 {dimension_numbers = #tpu.dot_dimension_numbers<[1], [0], [0], [1], [0, 0, 1, 1], [], []>} : vector<16x16xf32>, vector<16x8xf32>, vector<16x8xf32> -> vector<16x8xf32>
    %179 = vector.broadcast %177 : vector<16x1xf32> to vector<16x8xf32>
    %180 = arith.divf %178, %179 : vector<16x8xf32>
    %181 = vector.extract_strided_slice %150 {offsets = [0, 16], sizes = [16, 8], strides = [1, 1]} : vector<16x32xf32> to vector<16x8xf32>
    %182 = vector.extract_strided_slice %151 {offsets = [0, 16], sizes = [16, 8], strides = [1, 1]} : vector<16x32xf32> to vector<16x8xf32>
    %183 = vector.extract_strided_slice %152 {offsets = [0, 16], sizes = [16, 8], strides = [1, 1]} : vector<16x32xf32> to vector<16x8xf32>
    %cst_56 = arith.constant dense<0.000000e+00> : vector<16x16xf32>
    %184 = tpu.matmul %181, %182, %cst_56 {dimension_numbers = #tpu.dot_dimension_numbers<[1], [1], [0], [0], [0, 0, 1, 0], [], []>} : vector<16x8xf32>, vector<16x8xf32>, vector<16x16xf32> -> vector<16x16xf32>
    %cst_57 = arith.constant dense<0xFF800000> : vector<16xf32>
    %185 = vector.multi_reduction <maximumf>, %184, %cst_57 [1] : vector<16x16xf32> to vector<16xf32>
    %186 = vector.shape_cast %185 : vector<16xf32> to vector<16x1xf32>
    %187 = vector.broadcast %186 : vector<16x1xf32> to vector<16x16xf32>
    %188 = arith.subf %184, %187 : vector<16x16xf32>
    %189 = math.exp %188 : vector<16x16xf32>
    %cst_58 = arith.constant dense<0.000000e+00> : vector<16xf32>
    %190 = vector.multi_reduction <add>, %189, %cst_58 [1] : vector<16x16xf32> to vector<16xf32>
    %191 = vector.shape_cast %190 : vector<16xf32> to vector<16x1xf32>
    %cst_59 = arith.constant dense<0.000000e+00> : vector<16x8xf32>
    %192 = tpu.matmul %189, %183, %cst_59 {dimension_numbers = #tpu.dot_dimension_numbers<[1], [0], [0], [1], [0, 0, 1, 1], [], []>} : vector<16x16xf32>, vector<16x8xf32>, vector<16x8xf32> -> vector<16x8xf32>
    %193 = vector.broadcast %191 : vector<16x1xf32> to vector<16x8xf32>
    %194 = arith.divf %192, %193 : vector<16x8xf32>
    %195 = vector.extract_strided_slice %150 {offsets = [0, 24], sizes = [16, 8], strides = [1, 1]} : vector<16x32xf32> to vector<16x8xf32>
    %196 = vector.extract_strided_slice %151 {offsets = [0, 24], sizes = [16, 8], strides = [1, 1]} : vector<16x32xf32> to vector<16x8xf32>
    %197 = vector.extract_strided_slice %152 {offsets = [0, 24], sizes = [16, 8], strides = [1, 1]} : vector<16x32xf32> to vector<16x8xf32>
    %cst_60 = arith.constant dense<0.000000e+00> : vector<16x16xf32>
    %198 = tpu.matmul %195, %196, %cst_60 {dimension_numbers = #tpu.dot_dimension_numbers<[1], [1], [0], [0], [0, 0, 1, 0], [], []>} : vector<16x8xf32>, vector<16x8xf32>, vector<16x16xf32> -> vector<16x16xf32>
    %cst_61 = arith.constant dense<0xFF800000> : vector<16xf32>
    %199 = vector.multi_reduction <maximumf>, %198, %cst_61 [1] : vector<16x16xf32> to vector<16xf32>
    %200 = vector.shape_cast %199 : vector<16xf32> to vector<16x1xf32>
    %201 = vector.broadcast %200 : vector<16x1xf32> to vector<16x16xf32>
    %202 = arith.subf %198, %201 : vector<16x16xf32>
    %203 = math.exp %202 : vector<16x16xf32>
    %cst_62 = arith.constant dense<0.000000e+00> : vector<16xf32>
    %204 = vector.multi_reduction <add>, %203, %cst_62 [1] : vector<16x16xf32> to vector<16xf32>
    %205 = vector.shape_cast %204 : vector<16xf32> to vector<16x1xf32>
    %cst_63 = arith.constant dense<0.000000e+00> : vector<16x8xf32>
    %206 = tpu.matmul %203, %197, %cst_63 {dimension_numbers = #tpu.dot_dimension_numbers<[1], [0], [0], [1], [0, 0, 1, 1], [], []>} : vector<16x16xf32>, vector<16x8xf32>, vector<16x8xf32> -> vector<16x8xf32>
    %207 = vector.broadcast %205 : vector<16x1xf32> to vector<16x8xf32>
    %208 = arith.divf %206, %207 : vector<16x8xf32>
    %209 = tpu.concatenate %166, %180, %194, %208 in 1 : vector<16x8xf32>, vector<16x8xf32>, vector<16x8xf32>, vector<16x8xf32> -> vector<16x32xf32>
    %cst_64 = arith.constant dense<0.000000e+00> : vector<16x32xf32>
    %210 = tpu.matmul %209, %136, %cst_64 {dimension_numbers = #tpu.dot_dimension_numbers<[1], [0], [0], [1], [0, 0, 1, 1], [], []>} : vector<16x32xf32>, vector<32x32xf32>, vector<16x32xf32> -> vector<16x32xf32>
    %211 = vector.broadcast %140 : vector<1x32xf32> to vector<16x32xf32>
    %212 = arith.addf %210, %211 : vector<16x32xf32>
    %213 = arith.addf %133, %212 : vector<16x32xf32>
    %cst_65 = arith.constant dense<0.000000e+00> : vector<16xf32>
    %214 = vector.multi_reduction <add>, %213, %cst_65 [1] : vector<16x32xf32> to vector<16xf32>
    %215 = vector.shape_cast %214 : vector<16xf32> to vector<16x1xf32>
    %cst_66 = arith.constant 3.200000e+01 : f32
    %216 = vector.broadcast %cst_66 : f32 to vector<16x1xf32>
    %217 = arith.divf %215, %216 : vector<16x1xf32>
    %218 = arith.mulf %213, %213 : vector<16x32xf32>
    %cst_67 = arith.constant dense<0.000000e+00> : vector<16xf32>
    %219 = vector.multi_reduction <add>, %218, %cst_67 [1] : vector<16x32xf32> to vector<16xf32>
    %220 = vector.shape_cast %219 : vector<16xf32> to vector<16x1xf32>
    %cst_68 = arith.constant 3.200000e+01 : f32
    %221 = vector.broadcast %cst_68 : f32 to vector<16x1xf32>
    %222 = arith.divf %220, %221 : vector<16x1xf32>
    %223 = arith.mulf %217, %217 : vector<16x1xf32>
    %224 = arith.subf %222, %223 : vector<16x1xf32>
    %225 = vector.broadcast %217 : vector<16x1xf32> to vector<16x32xf32>
    %226 = arith.subf %213, %225 : vector<16x32xf32>
    %cst_69 = arith.constant 9.99999974E-6 : f32
    %227 = vector.broadcast %cst_69 : f32 to vector<16x1xf32>
    %228 = arith.addf %224, %227 : vector<16x1xf32>
    %229 = math.rsqrt %228 : vector<16x1xf32>
    %230 = vector.broadcast %229 : vector<16x1xf32> to vector<16x32xf32>
    %231 = arith.mulf %226, %230 : vector<16x32xf32>
    %232 = vector.broadcast %143 : vector<1x32xf32> to vector<16x32xf32>
    %233 = arith.mulf %231, %232 : vector<16x32xf32>
    %234 = vector.broadcast %144 : vector<1x32xf32> to vector<16x32xf32>
    %235 = arith.addf %233, %234 : vector<16x32xf32>
    %cst_70 = arith.constant dense<0.000000e+00> : vector<16x64xf32>
    %236 = tpu.matmul %235, %135, %cst_70 {dimension_numbers = #tpu.dot_dimension_numbers<[1], [0], [0], [1], [0, 0, 1, 1], [], []>} : vector<16x32xf32>, vector<32x64xf32>, vector<16x64xf32> -> vector<16x64xf32>
    %237 = vector.broadcast %141 : vector<1x64xf32> to vector<16x64xf32>
    %238 = arith.addf %236, %237 : vector<16x64xf32>
    %cst_71 = arith.constant 0.000000e+00 : f32
    %239 = vector.broadcast %cst_71 : f32 to vector<16x64xf32>
    %240 = arith.maximumf %238, %239 : vector<16x64xf32>
    %cst_72 = arith.constant dense<0.000000e+00> : vector<16x32xf32>
    %241 = tpu.matmul %240, %137, %cst_72 {dimension_numbers = #tpu.dot_dimension_numbers<[1], [0], [0], [1], [0, 0, 1, 1], [], []>} : vector<16x64xf32>, vector<64x32xf32>, vector<16x32xf32> -> vector<16x32xf32>
    %242 = vector.broadcast %142 : vector<1x32xf32> to vector<16x32xf32>
    %243 = arith.addf %241, %242 : vector<16x32xf32>
    %244 = arith.addf %235, %243 : vector<16x32xf32>
    %cst_73 = arith.constant dense<0.000000e+00> : vector<16xf32>
    %245 = vector.multi_reduction <add>, %244, %cst_73 [1] : vector<16x32xf32> to vector<16xf32>
    %246 = vector.shape_cast %245 : vector<16xf32> to vector<16x1xf32>
    %cst_74 = arith.constant 3.200000e+01 : f32
    %247 = vector.broadcast %cst_74 : f32 to vector<16x1xf32>
    %248 = arith.divf %246, %247 : vector<16x1xf32>
    %249 = arith.mulf %244, %244 : vector<16x32xf32>
    %cst_75 = arith.constant dense<0.000000e+00> : vector<16xf32>
    %250 = vector.multi_reduction <add>, %249, %cst_75 [1] : vector<16x32xf32> to vector<16xf32>
    %251 = vector.shape_cast %250 : vector<16xf32> to vector<16x1xf32>
    %cst_76 = arith.constant 3.200000e+01 : f32
    %252 = vector.broadcast %cst_76 : f32 to vector<16x1xf32>
    %253 = arith.divf %251, %252 : vector<16x1xf32>
    %254 = arith.mulf %248, %248 : vector<16x1xf32>
    %255 = arith.subf %253, %254 : vector<16x1xf32>
    %256 = vector.broadcast %248 : vector<16x1xf32> to vector<16x32xf32>
    %257 = arith.subf %244, %256 : vector<16x32xf32>
    %cst_77 = arith.constant 9.99999974E-6 : f32
    %258 = vector.broadcast %cst_77 : f32 to vector<16x1xf32>
    %259 = arith.addf %255, %258 : vector<16x1xf32>
    %260 = math.rsqrt %259 : vector<16x1xf32>
    %261 = vector.broadcast %260 : vector<16x1xf32> to vector<16x32xf32>
    %262 = arith.mulf %257, %261 : vector<16x32xf32>
    %263 = vector.broadcast %145 : vector<1x32xf32> to vector<16x32xf32>
    %264 = arith.mulf %262, %263 : vector<16x32xf32>
    %265 = vector.broadcast %146 : vector<1x32xf32> to vector<16x32xf32>
    %266 = arith.addf %264, %265 : vector<16x32xf32>
    %c192 = arith.constant 192 : index
    %c0_78 = arith.constant 0 : index
    %267 = vector.load %arg3[%c192, %c0_78] : memref<256x32xf32, #tpu.memory_space<vmem>>, vector<32x32xf32>
    %c224 = arith.constant 224 : index
    %c0_79 = arith.constant 0 : index
    %268 = vector.load %arg3[%c224, %c0_79] : memref<256x32xf32, #tpu.memory_space<vmem>>, vector<32x32xf32>
    %c16 = arith.constant 16 : index
    %c0_80 = arith.constant 0 : index
    %269 = vector.load %arg4[%c16, %c0_80] : memref<18x96xf32, #tpu.memory_space<vmem>>, vector<2x96xf32>
    %270 = vector.extract_strided_slice %269 {offsets = [0, 0], sizes = [1, 32], strides = [1, 1]} : vector<2x96xf32> to vector<1x32xf32>
    %271 = vector.extract_strided_slice %269 {offsets = [1, 0], sizes = [1, 32], strides = [1, 1]} : vector<2x96xf32> to vector<1x32xf32>
    %cst_81 = arith.constant dense<0.000000e+00> : vector<16x32xf32>
    %272 = tpu.matmul %266, %267, %cst_81 {dimension_numbers = #tpu.dot_dimension_numbers<[1], [0], [0], [1], [0, 0, 1, 1], [], []>} : vector<16x32xf32>, vector<32x32xf32>, vector<16x32xf32> -> vector<16x32xf32>
    %273 = vector.broadcast %270 : vector<1x32xf32> to vector<16x32xf32>
    %274 = arith.addf %272, %273 : vector<16x32xf32>
    %275 = arith.negf %274 : vector<16x32xf32>
    %276 = math.exp %275 : vector<16x32xf32>
    %cst_82 = arith.constant 1.000000e+00 : f32
    %277 = vector.broadcast %cst_82 : f32 to vector<16x32xf32>
    %278 = arith.addf %277, %276 : vector<16x32xf32>
    %279 = arith.divf %277, %278 : vector<16x32xf32>
    %280 = arith.mulf %274, %279 : vector<16x32xf32>
    %cst_83 = arith.constant dense<0.000000e+00> : vector<16x32xf32>
    %281 = tpu.matmul %280, %268, %cst_83 {dimension_numbers = #tpu.dot_dimension_numbers<[1], [0], [0], [1], [0, 0, 1, 1], [], []>} : vector<16x32xf32>, vector<32x32xf32>, vector<16x32xf32> -> vector<16x32xf32>
    %282 = vector.broadcast %271 : vector<1x32xf32> to vector<16x32xf32>
    %283 = arith.addf %281, %282 : vector<16x32xf32>
    %c0_84 = arith.constant 0 : index
    %c0_85 = arith.constant 0 : index
    %284 = vector.load %arg5[%c0_84, %c0_85] : memref<16x32xf32, #tpu.memory_space<vmem>>, vector<16x32xf32>
    tpu.vector_store %arg5[%c0_84, %c0_85], %283 {strides = array<i32>} : memref<16x32xf32, #tpu.memory_space<vmem>>, vector<16x32xf32>,
    return
  }
}

</mosaic_0001>

<llo_original>
// kernel: tpu_custom_call.1
$region0: #{tpu_custom_call.1}
  #allocation0 [shape = 'u32[]', space=smem, size = 0x4, offset = 0x4, fixed_abs, tag = 'smem constant byte address 0x4 - core index']
  #allocation1 [shape = 'u32[144,128]{1,0:T(1,128)}', space=vmem, size = 0x12000, scoped, tag = 'internal scratch']
  %s0 = inlined_call_operand.vmem [shape: f32[16,32], index: 0, kind: input, shape index: {}]
  %s1 = inlined_call_operand.vmem [shape: f32[64,96], index: 1, kind: input, shape index: {}]
  %s2 = inlined_call_operand.vmem [shape: f32[64,64], index: 2, kind: input, shape index: {}]
  %s3 = inlined_call_operand.vmem [shape: f32[256,32], index: 3, kind: input, shape index: {}]
  %s4 = inlined_call_operand.vmem [shape: f32[18,96], index: 4, kind: input, shape index: {}]
  %s5 = inlined_call_operand.hbm [shape: f32[16,32], index: 5, kind: output, shape index: {}]
  %s6 = sld [smem:[#allocation0]]
  $region30: #{tpu_custom_call.1} parent=0
    _
  %s8 = ssub.s32 1, %s6
  %s9 = scalar_select 0, %s8, %s6
  $region1: #{tpu_custom_call.1} parent=0
    #allocation2 [shape = 'u8[8192]{0}', space=vmem, size = 0x2000, scoped, tag = 'output window, operand 0, single buffered']
    #allocation3 [shape = 's32[1]{0}', space=sflag, size = 0x4, scoped, tag = 'scoped memory for tpu_custom_call.1']
    %10 = vsyncpa [#allocation3], 0
    // Predicated region
    $region2: #{tpu_custom_call.1} parent=1 // pred_check
      _
    $region3: #{tpu_custom_call.1} parent=1 // pred_check_branch
      %12 = sbr.rel (0) target = $region5
    $region4: #{tpu_custom_call.1} parent=1 // pred_region
      _
    $region5: #{tpu_custom_call.1} parent=1 // pred_fallthru
      _
    // Predicated region
    $region6: #{tpu_custom_call.1} parent=1 // pred_check
      _
    $region7: #{tpu_custom_call.1} parent=1 // pred_check_branch
      %14 = sbr.rel (0) target = $region9
    $region8: #{tpu_custom_call.1} parent=1 // pred_region
      _
    $region9: #{tpu_custom_call.1} parent=1 // pred_fallthru
      _
    // Predicated region
    $region10: #{tpu_custom_call.1} parent=1 // pred_check
      _
    $region11: #{tpu_custom_call.1} parent=1 // pred_check_branch
      %16 = sbr.rel (0) target = $region13
    $region12: #{tpu_custom_call.1} parent=1 // pred_region
      _
    $region13: #{tpu_custom_call.1} parent=1 // pred_fallthru
      _
    // Predicated region
    $region14: #{tpu_custom_call.1} parent=1 // pred_check
      _
    $region15: #{tpu_custom_call.1} parent=1 // pred_check_branch
      %18 = sbr.rel (0) target = $region17
    $region16: #{tpu_custom_call.1} parent=1 // pred_region
      _
    $region17: #{tpu_custom_call.1} parent=1 // pred_fallthru
      _
    // Predicated region
    $region18: #{tpu_custom_call.1} parent=1 // pred_check
      _
    $region19: #{tpu_custom_call.1} parent=1 // pred_check_branch
      %20 = sbr.rel (0) target = $region21
    $region20: #{tpu_custom_call.1} parent=1 // pred_region
      _
    $region21: #{tpu_custom_call.1} parent=1 // pred_fallthru
      _
    %v21 = vld [vmem:[%s0] sm:$0xff]
    %v22 = vld [vmem:[%s0 + $0x8] sm:$0xff]
    %v23 = vld [vmem:[%s1] sm:$0xff]
    %v24 = vld [vmem:[%s1 + $0x8] sm:$0xff]
    %v25 = vld [vmem:[%s1 + $0x10] sm:$0xff]
    %v26 = vld [vmem:[%s1 + $0x18] sm:$0xff]
    %v27 = vld [vmem:[%s2] sm:$0xff]
    %v28 = vld [vmem:[%s2 + $0x8] sm:$0xff]
    %v29 = vld [vmem:[%s2 + $0x10] sm:$0xff]
    %v30 = vld [vmem:[%s2 + $0x18] sm:$0xff]
    %v31 = vld [vmem:[%s3] sm:$0xff]
    %v32 = vld [vmem:[%s3 + $0x8] sm:$0xff]
    %v33 = vld [vmem:[%s3 + $0x10] sm:$0xff]
    %v34 = vld [vmem:[%s3 + $0x18] sm:$0xff]
    %v35 = vld [vmem:[%s3 + $0x40] sm:$0xff]
    %v36 = vld [vmem:[%s3 + $0x48] sm:$0xff]
    %v37 = vld [vmem:[%s3 + $0x50] sm:$0xff]
    %v38 = vld [vmem:[%s3 + $0x58] sm:$0xff]
    %v39 = vld [vmem:[%s3 + $0x60] sm:$0xff]
    %v40 = vld [vmem:[%s3 + $0x68] sm:$0xff]
    %v41 = vld [vmem:[%s3 + $0x70] sm:$0xff]
    %v42 = vld [vmem:[%s3 + $0x78] sm:$0xff]
    %v43 = vld [vmem:[%s4] sm:$0xff]
    %v44 = vlaneseq
    %v45 = vshrl.u32 %v44, 7
    %v46 = vsub.s32 0, %v45
    %v47 = vrot.slane %v43, %v46
    %vm48 = vcmask 261120
    %v50 = vsel %vm48, %v21, 0
    %v53 = vsel %vm48, %v22, 0
    %55 = vmatprep.subr.mxu0 0.0
    %56 = vmatpush1.msra.mxu0 %v23
    %57 = vmatprep.subr.mxu0 0.0
    %58 = vmatpush1.msra.mxu0 %v24
    %59 = vmatprep.subr.mxu0 0.0
    %60 = vmatpush1.msra.mxu0 %v25
    %61 = vmatprep.subr.mxu0 0.0
    %62 = vmatpush1.msra.mxu0 %v26
    %63 = vmatprep.subr.mxu0 0.0
    %64 = vmatpush1.msra.mxu0 0.0
    %65 = vmatprep.subr.mxu0 0.0
    %66 = vmatpush1.msra.mxu0 0.0
    %67 = vmatprep.subr.mxu0 0.0
    %68 = vmatpush1.msra.mxu0 0.0
    %69 = vmatprep.subr.mxu0 0.0
    %70 = vmatpush1.msra.mxu0 0.0
    %71 = vmatprep.subr.mxu0 0.0
    %72 = vmatpush1.msra.mxu0 0.0
    %73 = vmatprep.subr.mxu0 0.0
    %74 = vmatpush1.msra.mxu0 0.0
    %75 = vmatprep.subr.mxu0 0.0
    %76 = vmatpush1.msra.mxu0 0.0
    %77 = vmatprep.subr.mxu0 0.0
    %78 = vmatpush1.msra.mxu0 0.0
    %79 = vmatprep.subr.mxu0 0.0
    %80 = vmatpush1.msra.mxu0 0.0
    %81 = vmatprep.subr.mxu0 0.0
    %82 = vmatpush1.msra.mxu0 0.0
    %83 = vmatprep.subr.mxu0 0.0
    %84 = vmatpush1.msra.mxu0 0.0
    %85 = vmatprep.subr.mxu0 0.0
    %86 = vmatpush1.msra.mxu0 0.0
    %87 = vmatprep.subr.mxu0 0.0
    %88 = vmatpush1.msra.mxu0 0.0
    %89 = vmatprep.subr.mxu0 0.0
    %90 = vmatpush1.msra.mxu0 0.0
    %91 = vmatprep.subr.mxu0 0.0
    %92 = vmatpush1.msra.mxu0 0.0
    %93 = vmatprep.subr.mxu0 0.0
    %94 = vmatpush1.msra.mxu0 0.0
    %95 = vmatprep.subr.mxu0 0.0
    %96 = vmatpush1.msra.mxu0 0.0
    %97 = vmatprep.subr.mxu0 0.0
    %98 = vmatpush1.msra.mxu0 0.0
    %99 = vmatprep.subr.mxu0 0.0
    %100 = vmatpush1.msra.mxu0 0.0
    %101 = vmatprep.subr.mxu0 0.0
    %102 = vmatpush1.msra.mxu0 0.0
    %103 = vmatprep.subr.mxu0 0.0
    %104 = vmatpush1.msra.mxu0 0.0
    %105 = vmatprep.subr.mxu0 0.0
    %106 = vmatpush1.msra.mxu0 0.0
    %107 = vmatprep.subr.mxu0 0.0
    %108 = vmatpush1.msra.mxu0 0.0
    %109 = vmatprep.subr.mxu0 0.0
    %110 = vmatpush1.msra.mxu0 0.0
    %111 = vmatprep.subr.mxu0 0.0
    %112 = vmatpush1.msra.mxu0 0.0
    %113 = vmatprep.subr.mxu0 0.0
    %114 = vmatpush1.msra.mxu0 0.0
    %115 = vmatprep.subr.mxu0 0.0
    %116 = vmatpush1.msra.mxu0 0.0
    %117 = vmatprep.subr.mxu0 0.0
    %118 = vmatpush1.msra.mxu0 0.0
    %119 = vmatprep.mubr.f32.mxu0 0.0
    %120 = vmatmul.mubr.f32.gmra.mrb[0].mxu0 %v50
    %v121 = vpop.f32.mrb[0].mxu0
    %v122 = vadd.f32 %v47, %v121
    %v123 = vpop.f32.mrb[0].mxu0
    %124 = vmatprep.mubr.f32.mxu0 0.0
    %125 = vmatmul.mubr.f32.gmra.mrb[0].mxu0 %v53
    %v126 = vpop.f32.mrb[0].mxu0
    %v127 = vadd.f32 %v47, %v126
    %v128 = vpop.f32.mrb[0].mxu0
    %129 = vdwg.mxu0
    %132 = vrot.lane.b32.xlu0 %v122, 96
    %v133 = vpop.permute.xlu0 %132
    %134 = vrot.lane.b32.xlu0 %v127, 96
    %v135 = vpop.permute.xlu0 %134
    %vm136 = vcmask 64512
    %v137 = vsel %vm136, %v122, 0
    %v139 = vsel %vm136, %v127, 0
    %v141 = vsel %vm136, %v133, 0
    %v143 = vsel %vm136, %v135, 0
    %145 = vmatprep.subr.mxu0 0.0
    %146 = vmatpush1.xpose.msra.mxu0 %v141
    %147 = vmatprep.subr.mxu0 0.0
    %148 = vmatpush1.xpose.msra.mxu0 %v143
    %149 = vmatprep.subr.mxu0 0.0
    %150 = vmatpush1.xpose.msra.mxu0 0.0
    %151 = vmatprep.subr.mxu0 0.0
    %152 = vmatpush1.xpose.msra.mxu0 0.0
    %153 = vmatprep.subr.mxu0 0.0
    %154 = vmatpush1.xpose.msra.mxu0 0.0
    %155 = vmatprep.subr.mxu0 0.0
    %156 = vmatpush1.xpose.msra.mxu0 0.0
    %157 = vmatprep.subr.mxu0 0.0
    %158 = vmatpush1.xpose.msra.mxu0 0.0
    %159 = vmatprep.subr.mxu0 0.0
    %160 = vmatpush1.xpose.msra.mxu0 0.0
    %161 = vmatprep.subr.mxu0 0.0
    %162 = vmatpush1.xpose.msra.mxu0 0.0
    %163 = vmatprep.subr.mxu0 0.0
    %164 = vmatpush1.xpose.msra.mxu0 0.0
    %165 = vmatprep.subr.mxu0 0.0
    %166 = vmatpush1.xpose.msra.mxu0 0.0
    %167 = vmatprep.subr.mxu0 0.0
    %168 = vmatpush1.xpose.msra.mxu0 0.0
    %169 = vmatprep.subr.mxu0 0.0
    %170 = vmatpush1.xpose.msra.mxu0 0.0
    %171 = vmatprep.subr.mxu0 0.0
    %172 = vmatpush1.xpose.msra.mxu0 0.0
    %173 = vmatprep.subr.mxu0 0.0
    %174 = vmatpush1.xpose.msra.mxu0 0.0
    %175 = vmatprep.subr.mxu0 0.0
    %176 = vmatpush1.xpose.msra.mxu0 0.0
    %177 = vmatprep.subr.mxu0 0.0
    %178 = vmatpush1.xpose.msra.mxu0 0.0
    %179 = vmatprep.subr.mxu0 0.0
    %180 = vmatpush1.xpose.msra.mxu0 0.0
    %181 = vmatprep.subr.mxu0 0.0
    %182 = vmatpush1.xpose.msra.mxu0 0.0
    %183 = vmatprep.subr.mxu0 0.0
    %184 = vmatpush1.xpose.msra.mxu0 0.0
    %185 = vmatprep.subr.mxu0 0.0
    %186 = vmatpush1.xpose.msra.mxu0 0.0
    %187 = vmatprep.subr.mxu0 0.0
    %188 = vmatpush1.xpose.msra.mxu0 0.0
    %189 = vmatprep.subr.mxu0 0.0
    %190 = vmatpush1.xpose.msra.mxu0 0.0
    %191 = vmatprep.subr.mxu0 0.0
    %192 = vmatpush1.xpose.msra.mxu0 0.0
    %193 = vmatprep.subr.mxu0 0.0
    %194 = vmatpush1.xpose.msra.mxu0 0.0
    %195 = vmatprep.subr.mxu0 0.0
    %196 = vmatpush1.xpose.msra.mxu0 0.0
    %197 = vmatprep.subr.mxu0 0.0
    %198 = vmatpush1.xpose.msra.mxu0 0.0
    %199 = vmatprep.subr.mxu0 0.0
    %200 = vmatpush1.xpose.msra.mxu0 0.0
    %201 = vmatprep.subr.mxu0 0.0
    %202 = vmatpush1.xpose.msra.mxu0 0.0
    %203 = vmatprep.subr.mxu0 0.0
    %204 = vmatpush1.xpose.msra.mxu0 0.0
    %205 = vmatprep.subr.mxu0 0.0
    %206 = vmatpush1.xpose.msra.mxu0 0.0
    %207 = vmatprep.subr.mxu0 0.0
    %208 = vmatpush1.xpose.msra.mxu0 0.0
    %209 = vmatprep.mubr.f32.mxu0 0.0
    %210 = vmatmul.mubr.f32.gmra.mrb[0].mxu0 %v137
    %v211 = vpop.f32.mrb[0].mxu0
    %v212 = vadd.f32 0.0, %v211
    %v213 = vpop.f32.mrb[0].mxu0
    %214 = vmatprep.mubr.f32.mxu0 0.0
    %215 = vmatmul.mubr.f32.gmra.mrb[0].mxu0 %v139
    %v216 = vpop.f32.mrb[0].mxu0
    %v217 = vadd.f32 0.0, %v216
    %v218 = vpop.f32.mrb[0].mxu0
    %219 = vdwg.mxu0
    %vm220 = vcmask 130048
    %v221 = vsel %vm220, %v212, -inf
    %222 = vmax.xlane.f32.xlu0 %v221
    %v223 = vpop.xlane.xlu0 %222
    %v224 = vsel %vm220, %v217, -inf
    %225 = vmax.xlane.f32.xlu0 %v224
    %v226 = vpop.xlane.xlu0 %225
    %v227 = vsub.f32 %v212, %v223
    %v228 = vsub.f32 %v217, %v226
    %v229 = vmul.f32 %v227, 1.442695
    %v230 = vpow.pop %v229
    %v231 = vmul.f32 %v228, 1.442695
    %v232 = vpow.pop %v231
    %v233 = vsel %vm220, %v230, 0.0
    %234 = vadd.xlane.f32.xlu0 %v233
    %v235 = vpop.xlane.xlu0 %234
    %v236 = vsel %vm220, %v232, 0.0
    %237 = vadd.xlane.f32.xlu0 %v236
    %v238 = vpop.xlane.xlu0 %237
    %239 = vrot.lane.b32.xlu0 %v122, 64
    %v240 = vpop.permute.xlu0 %239
    %241 = vrot.lane.b32.xlu0 %v127, 64
    %v242 = vpop.permute.xlu0 %241
    %v246 = vsel %vm220, %v230, 0
    %v249 = vsel %vm220, %v232, 0
    %251 = vmatprep.subr.mxu0 0.0
    %252 = vmatpush1.msra.mxu0 %v240
    %253 = vmatprep.subr.mxu0 0.0
    %254 = vmatpush1.msra.mxu0 %v242
    %255 = vmatprep.subr.mxu0 0.0
    %256 = vmatpush1.msra.mxu0 0.0
    %257 = vmatprep.subr.mxu0 0.0
    %258 = vmatpush1.msra.mxu0 0.0
    %259 = vmatprep.subr.mxu0 0.0
    %260 = vmatpush1.msra.mxu0 0.0
    %261 = vmatprep.subr.mxu0 0.0
    %262 = vmatpush1.msra.mxu0 0.0
    %263 = vmatprep.subr.mxu0 0.0
    %264 = vmatpush1.msra.mxu0 0.0
    %265 = vmatprep.subr.mxu0 0.0
    %266 = vmatpush1.msra.mxu0 0.0
    %267 = vmatprep.subr.mxu0 0.0
    %268 = vmatpush1.msra.mxu0 0.0
    %269 = vmatprep.subr.mxu0 0.0
    %270 = vmatpush1.msra.mxu0 0.0
    %271 = vmatprep.subr.mxu0 0.0
    %272 = vmatpush1.msra.mxu0 0.0
    %273 = vmatprep.subr.mxu0 0.0
    %274 = vmatpush1.msra.mxu0 0.0
    %275 = vmatprep.subr.mxu0 0.0
    %276 = vmatpush1.msra.mxu0 0.0
    %277 = vmatprep.subr.mxu0 0.0
    %278 = vmatpush1.msra.mxu0 0.0
    %279 = vmatprep.subr.mxu0 0.0
    %280 = vmatpush1.msra.mxu0 0.0
    %281 = vmatprep.subr.mxu0 0.0
    %282 = vmatpush1.msra.mxu0 0.0
    %283 = vmatprep.subr.mxu0 0.0
    %284 = vmatpush1.msra.mxu0 0.0
    %285 = vmatprep.subr.mxu0 0.0
    %286 = vmatpush1.msra.mxu0 0.0
    %287 = vmatprep.subr.mxu0 0.0
    %288 = vmatpush1.msra.mxu0 0.0
    %289 = vmatprep.subr.mxu0 0.0
    %290 = vmatpush1.msra.mxu0 0.0
    %291 = vmatprep.subr.mxu0 0.0
    %292 = vmatpush1.msra.mxu0 0.0
    %293 = vmatprep.subr.mxu0 0.0
    %294 = vmatpush1.msra.mxu0 0.0
    %295 = vmatprep.subr.mxu0 0.0
    %296 = vmatpush1.msra.mxu0 0.0
    %297 = vmatprep.subr.mxu0 0.0
    %298 = vmatpush1.msra.mxu0 0.0
    %299 = vmatprep.subr.mxu0 0.0
    %300 = vmatpush1.msra.mxu0 0.0
    %301 = vmatprep.subr.mxu0 0.0
    %302 = vmatpush1.msra.mxu0 0.0
    %303 = vmatprep.subr.mxu0 0.0
    %304 = vmatpush1.msra.mxu0 0.0
    %305 = vmatprep.subr.mxu0 0.0
    %306 = vmatpush1.msra.mxu0 0.0
    %307 = vmatprep.subr.mxu0 0.0
    %308 = vmatpush1.msra.mxu0 0.0
    %309 = vmatprep.subr.mxu0 0.0
    %310 = vmatpush1.msra.mxu0 0.0
    %311 = vmatprep.subr.mxu0 0.0
    %312 = vmatpush1.msra.mxu0 0.0
    %313 = vmatprep.subr.mxu0 0.0
    %314 = vmatpush1.msra.mxu0 0.0
    %315 = vmatprep.mubr.f32.mxu0 0.0
    %316 = vmatmul.mubr.f32.gmra.mrb[0].mxu0 %v246
    %v317 = vpop.f32.mrb[0].mxu0
    %v318 = vadd.f32 0.0, %v317
    %v319 = vpop.f32.mrb[0].mxu0
    %320 = vmatprep.mubr.f32.mxu0 0.0
    %321 = vmatmul.mubr.f32.gmra.mrb[0].mxu0 %v249
    %v322 = vpop.f32.mrb[0].mxu0
    %v323 = vadd.f32 0.0, %v322
    %v324 = vpop.f32.mrb[0].mxu0
    %325 = vdwg.mxu0
    %v326 = vrcp.pop %v235
    %v327 = vmul.f32 %v318, %v326
    %v328 = vrcp.pop %v238
    %v329 = vmul.f32 %v323, %v328
    %330 = vrot.lane.b32.xlu0 %v122, 120
    %v331 = vpop.permute.xlu0 %330
    %332 = vrot.lane.b32.xlu0 %v127, 120
    %v333 = vpop.permute.xlu0 %332
    %334 = vrot.lane.b32.xlu0 %v122, 88
    %v335 = vpop.permute.xlu0 %334
    %336 = vrot.lane.b32.xlu0 %v127, 88
    %v337 = vpop.permute.xlu0 %336
    %v338 = vsel %vm136, %v331, 0
    %v340 = vsel %vm136, %v333, 0
    %v342 = vsel %vm136, %v335, 0
    %v344 = vsel %vm136, %v337, 0
    %346 = vmatprep.subr.mxu0 0.0
    %347 = vmatpush1.xpose.msra.mxu0 %v342
    %348 = vmatprep.subr.mxu0 0.0
    %349 = vmatpush1.xpose.msra.mxu0 %v344
    %350 = vmatprep.subr.mxu0 0.0
    %351 = vmatpush1.xpose.msra.mxu0 0.0
    %352 = vmatprep.subr.mxu0 0.0
    %353 = vmatpush1.xpose.msra.mxu0 0.0
    %354 = vmatprep.subr.mxu0 0.0
    %355 = vmatpush1.xpose.msra.mxu0 0.0
    %356 = vmatprep.subr.mxu0 0.0
    %357 = vmatpush1.xpose.msra.mxu0 0.0
    %358 = vmatprep.subr.mxu0 0.0
    %359 = vmatpush1.xpose.msra.mxu0 0.0
    %360 = vmatprep.subr.mxu0 0.0
    %361 = vmatpush1.xpose.msra.mxu0 0.0
    %362 = vmatprep.subr.mxu0 0.0
    %363 = vmatpush1.xpose.msra.mxu0 0.0
    %364 = vmatprep.subr.mxu0 0.0
    %365 = vmatpush1.xpose.msra.mxu0 0.0
    %366 = vmatprep.subr.mxu0 0.0
    %367 = vmatpush1.xpose.msra.mxu0 0.0
    %368 = vmatprep.subr.mxu0 0.0
    %369 = vmatpush1.xpose.msra.mxu0 0.0
    %370 = vmatprep.subr.mxu0 0.0
    %371 = vmatpush1.xpose.msra.mxu0 0.0
    %372 = vmatprep.subr.mxu0 0.0
    %373 = vmatpush1.xpose.msra.mxu0 0.0
    %374 = vmatprep.subr.mxu0 0.0
    %375 = vmatpush1.xpose.msra.mxu0 0.0
    %376 = vmatprep.subr.mxu0 0.0
    %377 = vmatpush1.xpose.msra.mxu0 0.0
    %378 = vmatprep.subr.mxu0 0.0
    %379 = vmatpush1.xpose.msra.mxu0 0.0
    %380 = vmatprep.subr.mxu0 0.0
    %381 = vmatpush1.xpose.msra.mxu0 0.0
    %382 = vmatprep.subr.mxu0 0.0
    %383 = vmatpush1.xpose.msra.mxu0 0.0
    %384 = vmatprep.subr.mxu0 0.0
    %385 = vmatpush1.xpose.msra.mxu0 0.0
    %386 = vmatprep.subr.mxu0 0.0
    %387 = vmatpush1.xpose.msra.mxu0 0.0
    %388 = vmatprep.subr.mxu0 0.0
    %389 = vmatpush1.xpose.msra.mxu0 0.0
    %390 = vmatprep.subr.mxu0 0.0
    %391 = vmatpush1.xpose.msra.mxu0 0.0
    %392 = vmatprep.subr.mxu0 0.0
    %393 = vmatpush1.xpose.msra.mxu0 0.0
    %394 = vmatprep.subr.mxu0 0.0
    %395 = vmatpush1.xpose.msra.mxu0 0.0
    %396 = vmatprep.subr.mxu0 0.0
    %397 = vmatpush1.xpose.msra.mxu0 0.0
    %398 = vmatprep.subr.mxu0 0.0
    %399 = vmatpush1.xpose.msra.mxu0 0.0
    %400 = vmatprep.subr.mxu0 0.0
    %401 = vmatpush1.xpose.msra.mxu0 0.0
    %402 = vmatprep.subr.mxu0 0.0
    %403 = vmatpush1.xpose.msra.mxu0 0.0
    %404 = vmatprep.subr.mxu0 0.0
    %405 = vmatpush1.xpose.msra.mxu0 0.0
    %406 = vmatprep.subr.mxu0 0.0
    %407 = vmatpush1.xpose.msra.mxu0 0.0
    %408 = vmatprep.subr.mxu0 0.0
    %409 = vmatpush1.xpose.msra.mxu0 0.0
    %410 = vmatprep.mubr.f32.mxu0 0.0
    %411 = vmatmul.mubr.f32.gmra.mrb[0].mxu0 %v338
    %v412 = vpop.f32.mrb[0].mxu0
    %v413 = vadd.f32 0.0, %v412
    %v414 = vpop.f32.mrb[0].mxu0
    %415 = vmatprep.mubr.f32.mxu0 0.0
    %416 = vmatmul.mubr.f32.gmra.mrb[0].mxu0 %v340
    %v417 = vpop.f32.mrb[0].mxu0
    %v418 = vadd.f32 0.0, %v417
    %v419 = vpop.f32.mrb[0].mxu0
    %420 = vdwg.mxu0
    %v421 = vsel %vm220, %v413, -inf
    %422 = vmax.xlane.f32.xlu0 %v421
    %v423 = vpop.xlane.xlu0 %422
    %v424 = vsel %vm220, %v418, -inf
    %425 = vmax.xlane.f32.xlu0 %v424
    %v426 = vpop.xlane.xlu0 %425
    %v427 = vsub.f32 %v413, %v423
    %v428 = vsub.f32 %v418, %v426
    %v429 = vmul.f32 %v427, 1.442695
    %v430 = vpow.pop %v429
    %v431 = vmul.f32 %v428, 1.442695
    %v432 = vpow.pop %v431
    %v433 = vsel %vm220, %v430, 0.0
    %434 = vadd.xlane.f32.xlu0 %v433
    %v435 = vpop.xlane.xlu0 %434
    %v436 = vsel %vm220, %v432, 0.0
    %437 = vadd.xlane.f32.xlu0 %v436
    %v438 = vpop.xlane.xlu0 %437
    %439 = vrot.lane.b32.xlu0 %v122, 56
    %v440 = vpop.permute.xlu0 %439
    %441 = vrot.lane.b32.xlu0 %v127, 56
    %v442 = vpop.permute.xlu0 %441
    %v446 = vsel %vm220, %v430, 0
    %v449 = vsel %vm220, %v432, 0
    %451 = vmatprep.subr.mxu0 0.0
    %452 = vmatpush1.msra.mxu0 %v440
    %453 = vmatprep.subr.mxu0 0.0
    %454 = vmatpush1.msra.mxu0 %v442
    %455 = vmatprep.subr.mxu0 0.0
    %456 = vmatpush1.msra.mxu0 0.0
    %457 = vmatprep.subr.mxu0 0.0
    %458 = vmatpush1.msra.mxu0 0.0
    %459 = vmatprep.subr.mxu0 0.0
    %460 = vmatpush1.msra.mxu0 0.0
    %461 = vmatprep.subr.mxu0 0.0
    %462 = vmatpush1.msra.mxu0 0.0
    %463 = vmatprep.subr.mxu0 0.0
    %464 = vmatpush1.msra.mxu0 0.0
    %465 = vmatprep.subr.mxu0 0.0
    %466 = vmatpush1.msra.mxu0 0.0
    %467 = vmatprep.subr.mxu0 0.0
    %468 = vmatpush1.msra.mxu0 0.0
    %469 = vmatprep.subr.mxu0 0.0
    %470 = vmatpush1.msra.mxu0 0.0
    %471 = vmatprep.subr.mxu0 0.0
    %472 = vmatpush1.msra.mxu0 0.0
    %473 = vmatprep.subr.mxu0 0.0
    %474 = vmatpush1.msra.mxu0 0.0
    %475 = vmatprep.subr.mxu0 0.0
    %476 = vmatpush1.msra.mxu0 0.0
    %477 = vmatprep.subr.mxu0 0.0
    %478 = vmatpush1.msra.mxu0 0.0
    %479 = vmatprep.subr.mxu0 0.0
    %480 = vmatpush1.msra.mxu0 0.0
    %481 = vmatprep.subr.mxu0 0.0
    %482 = vmatpush1.msra.mxu0 0.0
    %483 = vmatprep.subr.mxu0 0.0
    %484 = vmatpush1.msra.mxu0 0.0
    %485 = vmatprep.subr.mxu0 0.0
    %486 = vmatpush1.msra.mxu0 0.0
    %487 = vmatprep.subr.mxu0 0.0
    %488 = vmatpush1.msra.mxu0 0.0
    %489 = vmatprep.subr.mxu0 0.0
    %490 = vmatpush1.msra.mxu0 0.0
    %491 = vmatprep.subr.mxu0 0.0
    %492 = vmatpush1.msra.mxu0 0.0
    %493 = vmatprep.subr.mxu0 0.0
    %494 = vmatpush1.msra.mxu0 0.0
    %495 = vmatprep.subr.mxu0 0.0
    %496 = vmatpush1.msra.mxu0 0.0
    %497 = vmatprep.subr.mxu0 0.0
    %498 = vmatpush1.msra.mxu0 0.0
    %499 = vmatprep.subr.mxu0 0.0
    %500 = vmatpush1.msra.mxu0 0.0
    %501 = vmatprep.subr.mxu0 0.0
    %502 = vmatpush1.msra.mxu0 0.0
    %503 = vmatprep.subr.mxu0 0.0
    %504 = vmatpush1.msra.mxu0 0.0
    %505 = vmatprep.subr.mxu0 0.0
    %506 = vmatpush1.msra.mxu0 0.0
    %507 = vmatprep.subr.mxu0 0.0
    %508 = vmatpush1.msra.mxu0 0.0
    %509 = vmatprep.subr.mxu0 0.0
    %510 = vmatpush1.msra.mxu0 0.0
    %511 = vmatprep.subr.mxu0 0.0
    %512 = vmatpush1.msra.mxu0 0.0
    %513 = vmatprep.subr.mxu0 0.0
    %514 = vmatpush1.msra.mxu0 0.0
    %515 = vmatprep.mubr.f32.mxu0 0.0
    %516 = vmatmul.mubr.f32.gmra.mrb[0].mxu0 %v446
    %v517 = vpop.f32.mrb[0].mxu0
    %v518 = vadd.f32 0.0, %v517
    %v519 = vpop.f32.mrb[0].mxu0
    %520 = vmatprep.mubr.f32.mxu0 0.0
    %521 = vmatmul.mubr.f32.gmra.mrb[0].mxu0 %v449
    %v522 = vpop.f32.mrb[0].mxu0
    %v523 = vadd.f32 0.0, %v522
    %v524 = vpop.f32.mrb[0].mxu0
    %525 = vdwg.mxu0
    %v526 = vrcp.pop %v435
    %v527 = vmul.f32 %v518, %v526
    %v528 = vrcp.pop %v438
    %v529 = vmul.f32 %v523, %v528
    %530 = vrot.lane.b32.xlu0 %v122, 112
    %v531 = vpop.permute.xlu0 %530
    %532 = vrot.lane.b32.xlu0 %v127, 112
    %v533 = vpop.permute.xlu0 %532
    %534 = vrot.lane.b32.xlu0 %v122, 80
    %v535 = vpop.permute.xlu0 %534
    %536 = vrot.lane.b32.xlu0 %v127, 80
    %v537 = vpop.permute.xlu0 %536
    %v538 = vsel %vm136, %v531, 0
    %v540 = vsel %vm136, %v533, 0
    %v542 = vsel %vm136, %v535, 0
    %v544 = vsel %vm136, %v537, 0
    %546 = vmatprep.subr.mxu0 0.0
    %547 = vmatpush1.xpose.msra.mxu0 %v542
    %548 = vmatprep.subr.mxu0 0.0
    %549 = vmatpush1.xpose.msra.mxu0 %v544
    %550 = vmatprep.subr.mxu0 0.0
    %551 = vmatpush1.xpose.msra.mxu0 0.0
    %552 = vmatprep.subr.mxu0 0.0
    %553 = vmatpush1.xpose.msra.mxu0 0.0
    %554 = vmatprep.subr.mxu0 0.0
    %555 = vmatpush1.xpose.msra.mxu0 0.0
    %556 = vmatprep.subr.mxu0 0.0
    %557 = vmatpush1.xpose.msra.mxu0 0.0
    %558 = vmatprep.subr.mxu0 0.0
    %559 = vmatpush1.xpose.msra.mxu0 0.0
    %560 = vmatprep.subr.mxu0 0.0
    %561 = vmatpush1.xpose.msra.mxu0 0.0
    %562 = vmatprep.subr.mxu0 0.0
    %563 = vmatpush1.xpose.msra.mxu0 0.0
    %564 = vmatprep.subr.mxu0 0.0
    %565 = vmatpush1.xpose.msra.mxu0 0.0
    %566 = vmatprep.subr.mxu0 0.0
    %567 = vmatpush1.xpose.msra.mxu0 0.0
    %568 = vmatprep.subr.mxu0 0.0
    %569 = vmatpush1.xpose.msra.mxu0 0.0
    %570 = vmatprep.subr.mxu0 0.0
    %571 = vmatpush1.xpose.msra.mxu0 0.0
    %572 = vmatprep.subr.mxu0 0.0
    %573 = vmatpush1.xpose.msra.mxu0 0.0
    %574 = vmatprep.subr.mxu0 0.0
    %575 = vmatpush1.xpose.msra.mxu0 0.0
    %576 = vmatprep.subr.mxu0 0.0
    %577 = vmatpush1.xpose.msra.mxu0 0.0
    %578 = vmatprep.subr.mxu0 0.0
    %579 = vmatpush1.xpose.msra.mxu0 0.0
    %580 = vmatprep.subr.mxu0 0.0
    %581 = vmatpush1.xpose.msra.mxu0 0.0
    %582 = vmatprep.subr.mxu0 0.0
    %583 = vmatpush1.xpose.msra.mxu0 0.0
    %584 = vmatprep.subr.mxu0 0.0
    %585 = vmatpush1.xpose.msra.mxu0 0.0
    %586 = vmatprep.subr.mxu0 0.0
    %587 = vmatpush1.xpose.msra.mxu0 0.0
    %588 = vmatprep.subr.mxu0 0.0
    %589 = vmatpush1.xpose.msra.mxu0 0.0
    %590 = vmatprep.subr.mxu0 0.0
    %591 = vmatpush1.xpose.msra.mxu0 0.0
    %592 = vmatprep.subr.mxu0 0.0
    %593 = vmatpush1.xpose.msra.mxu0 0.0
    %594 = vmatprep.subr.mxu0 0.0
    %595 = vmatpush1.xpose.msra.mxu0 0.0
    %596 = vmatprep.subr.mxu0 0.0
    %597 = vmatpush1.xpose.msra.mxu0 0.0
    %598 = vmatprep.subr.mxu0 0.0
    %599 = vmatpush1.xpose.msra.mxu0 0.0
    %600 = vmatprep.subr.mxu0 0.0
    %601 = vmatpush1.xpose.msra.mxu0 0.0
    %602 = vmatprep.subr.mxu0 0.0
    %603 = vmatpush1.xpose.msra.mxu0 0.0
    %604 = vmatprep.subr.mxu0 0.0
    %605 = vmatpush1.xpose.msra.mxu0 0.0
    %606 = vmatprep.subr.mxu0 0.0
    %607 = vmatpush1.xpose.msra.mxu0 0.0
    %608 = vmatprep.subr.mxu0 0.0
    %609 = vmatpush1.xpose.msra.mxu0 0.0
    %610 = vmatprep.mubr.f32.mxu0 0.0
    %611 = vmatmul.mubr.f32.gmra.mrb[0].mxu0 %v538
    %v612 = vpop.f32.mrb[0].mxu0
    %v613 = vadd.f32 0.0, %v612
    %v614 = vpop.f32.mrb[0].mxu0
    %615 = vmatprep.mubr.f32.mxu0 0.0
    %616 = vmatmul.mubr.f32.gmra.mrb[0].mxu0 %v540
    %v617 = vpop.f32.mrb[0].mxu0
    %v618 = vadd.f32 0.0, %v617
    %v619 = vpop.f32.mrb[0].mxu0
    %620 = vdwg.mxu0
    %v621 = vsel %vm220, %v613, -inf
    %622 = vmax.xlane.f32.xlu0 %v621
    %v623 = vpop.xlane.xlu0 %622
    %v624 = vsel %vm220, %v618, -inf
    %625 = vmax.xlane.f32.xlu0 %v624
    %v626 = vpop.xlane.xlu0 %625
    %v627 = vsub.f32 %v613, %v623
    %v628 = vsub.f32 %v618, %v626
    %v629 = vmul.f32 %v627, 1.442695
    %v630 = vpow.pop %v629
    %v631 = vmul.f32 %v628, 1.442695
    %v632 = vpow.pop %v631
    %v633 = vsel %vm220, %v630, 0.0
    %634 = vadd.xlane.f32.xlu0 %v633
    %v635 = vpop.xlane.xlu0 %634
    %v636 = vsel %vm220, %v632, 0.0
    %637 = vadd.xlane.f32.xlu0 %v636
    %v638 = vpop.xlane.xlu0 %637
    %639 = vrot.lane.b32.xlu0 %v122, 48
    %v640 = vpop.permute.xlu0 %639
    %641 = vrot.lane.b32.xlu0 %v127, 48
    %v642 = vpop.permute.xlu0 %641
    %v646 = vsel %vm220, %v630, 0
    %v649 = vsel %vm220, %v632, 0
    %651 = vmatprep.subr.mxu0 0.0
    %652 = vmatpush1.msra.mxu0 %v640
    %653 = vmatprep.subr.mxu0 0.0
    %654 = vmatpush1.msra.mxu0 %v642
    %655 = vmatprep.subr.mxu0 0.0
    %656 = vmatpush1.msra.mxu0 0.0
    %657 = vmatprep.subr.mxu0 0.0
    %658 = vmatpush1.msra.mxu0 0.0
    %659 = vmatprep.subr.mxu0 0.0
    %660 = vmatpush1.msra.mxu0 0.0
    %661 = vmatprep.subr.mxu0 0.0
    %662 = vmatpush1.msra.mxu0 0.0
    %663 = vmatprep.subr.mxu0 0.0
    %664 = vmatpush1.msra.mxu0 0.0
    %665 = vmatprep.subr.mxu0 0.0
    %666 = vmatpush1.msra.mxu0 0.0
    %667 = vmatprep.subr.mxu0 0.0
    %668 = vmatpush1.msra.mxu0 0.0
    %669 = vmatprep.subr.mxu0 0.0
    %670 = vmatpush1.msra.mxu0 0.0
    %671 = vmatprep.subr.mxu0 0.0
    %672 = vmatpush1.msra.mxu0 0.0
    %673 = vmatprep.subr.mxu0 0.0
    %674 = vmatpush1.msra.mxu0 0.0
    %675 = vmatprep.subr.mxu0 0.0
    %676 = vmatpush1.msra.mxu0 0.0
    %677 = vmatprep.subr.mxu0 0.0
    %678 = vmatpush1.msra.mxu0 0.0
    %679 = vmatprep.subr.mxu0 0.0
    %680 = vmatpush1.msra.mxu0 0.0
    %681 = vmatprep.subr.mxu0 0.0
    %682 = vmatpush1.msra.mxu0 0.0
    %683 = vmatprep.subr.mxu0 0.0
    %684 = vmatpush1.msra.mxu0 0.0
    %685 = vmatprep.subr.mxu0 0.0
    %686 = vmatpush1.msra.mxu0 0.0
    %687 = vmatprep.subr.mxu0 0.0
    %688 = vmatpush1.msra.mxu0 0.0
    %689 = vmatprep.subr.mxu0 0.0
    %690 = vmatpush1.msra.mxu0 0.0
    %691 = vmatprep.subr.mxu0 0.0
    %692 = vmatpush1.msra.mxu0 0.0
    %693 = vmatprep.subr.mxu0 0.0
    %694 = vmatpush1.msra.mxu0 0.0
    %695 = vmatprep.subr.mxu0 0.0
    %696 = vmatpush1.msra.mxu0 0.0
    %697 = vmatprep.subr.mxu0 0.0
    %698 = vmatpush1.msra.mxu0 0.0
    %699 = vmatprep.subr.mxu0 0.0
    %700 = vmatpush1.msra.mxu0 0.0
    %701 = vmatprep.subr.mxu0 0.0
    %702 = vmatpush1.msra.mxu0 0.0
    %703 = vmatprep.subr.mxu0 0.0
    %704 = vmatpush1.msra.mxu0 0.0
    %705 = vmatprep.subr.mxu0 0.0
    %706 = vmatpush1.msra.mxu0 0.0
    %707 = vmatprep.subr.mxu0 0.0
    %708 = vmatpush1.msra.mxu0 0.0
    %709 = vmatprep.subr.mxu0 0.0
    %710 = vmatpush1.msra.mxu0 0.0
    %711 = vmatprep.subr.mxu0 0.0
    %712 = vmatpush1.msra.mxu0 0.0
    %713 = vmatprep.subr.mxu0 0.0
    %714 = vmatpush1.msra.mxu0 0.0
    %715 = vmatprep.mubr.f32.mxu0 0.0
    %716 = vmatmul.mubr.f32.gmra.mrb[0].mxu0 %v646
    %v717 = vpop.f32.mrb[0].mxu0
    %v718 = vadd.f32 0.0, %v717
    %v719 = vpop.f32.mrb[0].mxu0
    %720 = vmatprep.mubr.f32.mxu0 0.0
    %721 = vmatmul.mubr.f32.gmra.mrb[0].mxu0 %v649
    %v722 = vpop.f32.mrb[0].mxu0
    %v723 = vadd.f32 0.0, %v722
    %v724 = vpop.f32.mrb[0].mxu0
    %725 = vdwg.mxu0
    %v726 = vrcp.pop %v635
    %v727 = vmul.f32 %v718, %v726
    %v728 = vrcp.pop %v638
    %v729 = vmul.f32 %v723, %v728
    %730 = vrot.lane.b32.xlu0 %v122, 104
    %v731 = vpop.permute.xlu0 %730
    %732 = vrot.lane.b32.xlu0 %v127, 104
    %v733 = vpop.permute.xlu0 %732
    %734 = vrot.lane.b32.xlu0 %v122, 72
    %v735 = vpop.permute.xlu0 %734
    %736 = vrot.lane.b32.xlu0 %v127, 72
    %v737 = vpop.permute.xlu0 %736
    %v738 = vsel %vm136, %v731, 0
    %v740 = vsel %vm136, %v733, 0
    %v742 = vsel %vm136, %v735, 0
    %v744 = vsel %vm136, %v737, 0
    %746 = vmatprep.subr.mxu0 0.0
    %747 = vmatpush1.xpose.msra.mxu0 %v742
    %748 = vmatprep.subr.mxu0 0.0
    %749 = vmatpush1.xpose.msra.mxu0 %v744
    %750 = vmatprep.subr.mxu0 0.0
    %751 = vmatpush1.xpose.msra.mxu0 0.0
    %752 = vmatprep.subr.mxu0 0.0
    %753 = vmatpush1.xpose.msra.mxu0 0.0
    %754 = vmatprep.subr.mxu0 0.0
    %755 = vmatpush1.xpose.msra.mxu0 0.0
    %756 = vmatprep.subr.mxu0 0.0
    %757 = vmatpush1.xpose.msra.mxu0 0.0
    %758 = vmatprep.subr.mxu0 0.0
    %759 = vmatpush1.xpose.msra.mxu0 0.0
    %760 = vmatprep.subr.mxu0 0.0
    %761 = vmatpush1.xpose.msra.mxu0 0.0
    %762 = vmatprep.subr.mxu0 0.0
    %763 = vmatpush1.xpose.msra.mxu0 0.0
    %764 = vmatprep.subr.mxu0 0.0
    %765 = vmatpush1.xpose.msra.mxu0 0.0
    %766 = vmatprep.subr.mxu0 0.0
    %767 = vmatpush1.xpose.msra.mxu0 0.0
    %768 = vmatprep.subr.mxu0 0.0
    %769 = vmatpush1.xpose.msra.mxu0 0.0
    %770 = vmatprep.subr.mxu0 0.0
    %771 = vmatpush1.xpose.msra.mxu0 0.0
    %772 = vmatprep.subr.mxu0 0.0
    %773 = vmatpush1.xpose.msra.mxu0 0.0
    %774 = vmatprep.subr.mxu0 0.0
    %775 = vmatpush1.xpose.msra.mxu0 0.0
    %776 = vmatprep.subr.mxu0 0.0
    %777 = vmatpush1.xpose.msra.mxu0 0.0
    %778 = vmatprep.subr.mxu0 0.0
    %779 = vmatpush1.xpose.msra.mxu0 0.0
    %780 = vmatprep.subr.mxu0 0.0
    %781 = vmatpush1.xpose.msra.mxu0 0.0
    %782 = vmatprep.subr.mxu0 0.0
    %783 = vmatpush1.xpose.msra.mxu0 0.0
    %784 = vmatprep.subr.mxu0 0.0
    %785 = vmatpush1.xpose.msra.mxu0 0.0
    %786 = vmatprep.subr.mxu0 0.0
    %787 = vmatpush1.xpose.msra.mxu0 0.0
    %788 = vmatprep.subr.mxu0 0.0
    %789 = vmatpush1.xpose.msra.mxu0 0.0
    %790 = vmatprep.subr.mxu0 0.0
    %791 = vmatpush1.xpose.msra.mxu0 0.0
    %792 = vmatprep.subr.mxu0 0.0
    %793 = vmatpush1.xpose.msra.mxu0 0.0
    %794 = vmatprep.subr.mxu0 0.0
    %795 = vmatpush1.xpose.msra.mxu0 0.0
    %796 = vmatprep.subr.mxu0 0.0
    %797 = vmatpush1.xpose.msra.mxu0 0.0
    %798 = vmatprep.subr.mxu0 0.0
    %799 = vmatpush1.xpose.msra.mxu0 0.0
    %800 = vmatprep.subr.mxu0 0.0
    %801 = vmatpush1.xpose.msra.mxu0 0.0
    %802 = vmatprep.subr.mxu0 0.0
    %803 = vmatpush1.xpose.msra.mxu0 0.0
    %804 = vmatprep.subr.mxu0 0.0
    %805 = vmatpush1.xpose.msra.mxu0 0.0
    %806 = vmatprep.subr.mxu0 0.0
    %807 = vmatpush1.xpose.msra.mxu0 0.0
    %808 = vmatprep.subr.mxu0 0.0
    %809 = vmatpush1.xpose.msra.mxu0 0.0
    %810 = vmatprep.mubr.f32.mxu0 0.0
    %811 = vmatmul.mubr.f32.gmra.mrb[0].mxu0 %v738
    %v812 = vpop.f32.mrb[0].mxu0
    %v813 = vadd.f32 0.0, %v812
    %v814 = vpop.f32.mrb[0].mxu0
    %815 = vmatprep.mubr.f32.mxu0 0.0
    %816 = vmatmul.mubr.f32.gmra.mrb[0].mxu0 %v740
    %v817 = vpop.f32.mrb[0].mxu0
    %v818 = vadd.f32 0.0, %v817
    %v819 = vpop.f32.mrb[0].mxu0
    %820 = vdwg.mxu0
    %v821 = vsel %vm220, %v813, -inf
    %822 = vmax.xlane.f32.xlu0 %v821
    %v823 = vpop.xlane.xlu0 %822
    %v824 = vsel %vm220, %v818, -inf
    %825 = vmax.xlane.f32.xlu0 %v824
    %v826 = vpop.xlane.xlu0 %825
    %v827 = vsub.f32 %v813, %v823
    %v828 = vsub.f32 %v818, %v826
    %v829 = vmul.f32 %v827, 1.442695
    %v830 = vpow.pop %v829
    %v831 = vmul.f32 %v828, 1.442695
    %v832 = vpow.pop %v831
    %v833 = vsel %vm220, %v830, 0.0
    %834 = vadd.xlane.f32.xlu0 %v833
    %v835 = vpop.xlane.xlu0 %834
    %v836 = vsel %vm220, %v832, 0.0
    %837 = vadd.xlane.f32.xlu0 %v836
    %v838 = vpop.xlane.xlu0 %837
    %839 = vrot.lane.b32.xlu0 %v122, 40
    %v840 = vpop.permute.xlu0 %839
    %841 = vrot.lane.b32.xlu0 %v127, 40
    %v842 = vpop.permute.xlu0 %841
    %v846 = vsel %vm220, %v830, 0
    %v849 = vsel %vm220, %v832, 0
    %851 = vmatprep.subr.mxu0 0.0
    %852 = vmatpush1.msra.mxu0 %v840
    %853 = vmatprep.subr.mxu0 0.0
    %854 = vmatpush1.msra.mxu0 %v842
    %855 = vmatprep.subr.mxu0 0.0
    %856 = vmatpush1.msra.mxu0 0.0
    %857 = vmatprep.subr.mxu0 0.0
    %858 = vmatpush1.msra.mxu0 0.0
    %859 = vmatprep.subr.mxu0 0.0
    %860 = vmatpush1.msra.mxu0 0.0
    %861 = vmatprep.subr.mxu0 0.0
    %862 = vmatpush1.msra.mxu0 0.0
    %863 = vmatprep.subr.mxu0 0.0
    %864 = vmatpush1.msra.mxu0 0.0
    %865 = vmatprep.subr.mxu0 0.0
    %866 = vmatpush1.msra.mxu0 0.0
    %867 = vmatprep.subr.mxu0 0.0
    %868 = vmatpush1.msra.mxu0 0.0
    %869 = vmatprep.subr.mxu0 0.0
    %870 = vmatpush1.msra.mxu0 0.0
    %871 = vmatprep.subr.mxu0 0.0
    %872 = vmatpush1.msra.mxu0 0.0
    %873 = vmatprep.subr.mxu0 0.0
    %874 = vmatpush1.msra.mxu0 0.0
    %875 = vmatprep.subr.mxu0 0.0
    %876 = vmatpush1.msra.mxu0 0.0
    %877 = vmatprep.subr.mxu0 0.0
    %878 = vmatpush1.msra.mxu0 0.0
    %879 = vmatprep.subr.mxu0 0.0
    %880 = vmatpush1.msra.mxu0 0.0
    %881 = vmatprep.subr.mxu0 0.0
    %882 = vmatpush1.msra.mxu0 0.0
    %883 = vmatprep.subr.mxu0 0.0
    %884 = vmatpush1.msra.mxu0 0.0
    %885 = vmatprep.subr.mxu0 0.0
    %886 = vmatpush1.msra.mxu0 0.0
    %887 = vmatprep.subr.mxu0 0.0
    %888 = vmatpush1.msra.mxu0 0.0
    %889 = vmatprep.subr.mxu0 0.0
    %890 = vmatpush1.msra.mxu0 0.0
    %891 = vmatprep.subr.mxu0 0.0
    %892 = vmatpush1.msra.mxu0 0.0
    %893 = vmatprep.subr.mxu0 0.0
    %894 = vmatpush1.msra.mxu0 0.0
    %895 = vmatprep.subr.mxu0 0.0
    %896 = vmatpush1.msra.mxu0 0.0
    %897 = vmatprep.subr.mxu0 0.0
    %898 = vmatpush1.msra.mxu0 0.0
    %899 = vmatprep.subr.mxu0 0.0
    %900 = vmatpush1.msra.mxu0 0.0
    %901 = vmatprep.subr.mxu0 0.0
    %902 = vmatpush1.msra.mxu0 0.0
    %903 = vmatprep.subr.mxu0 0.0
    %904 = vmatpush1.msra.mxu0 0.0
    %905 = vmatprep.subr.mxu0 0.0
    %906 = vmatpush1.msra.mxu0 0.0
    %907 = vmatprep.subr.mxu0 0.0
    %908 = vmatpush1.msra.mxu0 0.0
    %909 = vmatprep.subr.mxu0 0.0
    %910 = vmatpush1.msra.mxu0 0.0
    %911 = vmatprep.subr.mxu0 0.0
    %912 = vmatpush1.msra.mxu0 0.0
    %913 = vmatprep.subr.mxu0 0.0
    %914 = vmatpush1.msra.mxu0 0.0
    %915 = vmatprep.mubr.f32.mxu0 0.0
    %916 = vmatmul.mubr.f32.gmra.mrb[0].mxu0 %v846
    %v917 = vpop.f32.mrb[0].mxu0
    %v918 = vadd.f32 0.0, %v917
    %v919 = vpop.f32.mrb[0].mxu0
    %920 = vmatprep.mubr.f32.mxu0 0.0
    %921 = vmatmul.mubr.f32.gmra.mrb[0].mxu0 %v849
    %v922 = vpop.f32.mrb[0].mxu0
    %v923 = vadd.f32 0.0, %v922
    %v924 = vpop.f32.mrb[0].mxu0
    %925 = vdwg.mxu0
    %v926 = vrcp.pop %v835
    %v927 = vmul.f32 %v918, %v926
    %v928 = vrcp.pop %v838
    %v929 = vmul.f32 %v923, %v928
    %932 = vrot.lane.b32.xlu0 %v527, 8
    %v933 = vpop.permute.xlu0 %932
    %934 = vrot.lane.b32.xlu0 %v529, 8
    %v935 = vpop.permute.xlu0 %934
    %940 = vrot.lane.b32.xlu0 %v727, 16
    %v941 = vpop.permute.xlu0 %940
    %942 = vrot.lane.b32.xlu0 %v729, 16
    %v943 = vpop.permute.xlu0 %942
    %948 = vrot.lane.b32.xlu0 %v927, 24
    %v949 = vpop.permute.xlu0 %948
    %950 = vrot.lane.b32.xlu0 %v929, 24
    %v951 = vpop.permute.xlu0 %950
    %v954 = vsel %vm136, %v327, %v933
    %v955 = vsel %vm136, %v329, %v935
    %v956 = vsel %vm220, %v954, %v941
    %v957 = vsel %vm220, %v955, %v943
    %vm958 = vcmask 195584
    %v959 = vsel %vm958, %v956, %v949
    %v960 = vsel %vm958, %v957, %v951
    %v961 = vlaneseq
    %v962 = vshrl.u32 %v961, 7
    %v963 = vsub.s32 1, %v962
    %v964 = vrot.slane %v43, %v963
    %v966 = vsel %vm48, %v959, 0
    %v969 = vsel %vm48, %v960, 0
    %971 = vmatprep.subr.mxu0 0.0
    %972 = vmatpush1.msra.mxu0 %v31
    %973 = vmatprep.subr.mxu0 0.0
    %974 = vmatpush1.msra.mxu0 %v32
    %975 = vmatprep.subr.mxu0 0.0
    %976 = vmatpush1.msra.mxu0 %v33
    %977 = vmatprep.subr.mxu0 0.0
    %978 = vmatpush1.msra.mxu0 %v34
    %979 = vmatprep.subr.mxu0 0.0
    %980 = vmatpush1.msra.mxu0 0.0
    %981 = vmatprep.subr.mxu0 0.0
    %982 = vmatpush1.msra.mxu0 0.0
    %983 = vmatprep.subr.mxu0 0.0
    %984 = vmatpush1.msra.mxu0 0.0
    %985 = vmatprep.subr.mxu0 0.0
    %986 = vmatpush1.msra.mxu0 0.0
    %987 = vmatprep.subr.mxu0 0.0
    %988 = vmatpush1.msra.mxu0 0.0
    %989 = vmatprep.subr.mxu0 0.0
    %990 = vmatpush1.msra.mxu0 0.0
    %991 = vmatprep.subr.mxu0 0.0
    %992 = vmatpush1.msra.mxu0 0.0
    %993 = vmatprep.subr.mxu0 0.0
    %994 = vmatpush1.msra.mxu0 0.0
    %995 = vmatprep.subr.mxu0 0.0
    %996 = vmatpush1.msra.mxu0 0.0
    %997 = vmatprep.subr.mxu0 0.0
    %998 = vmatpush1.msra.mxu0 0.0
    %999 = vmatprep.subr.mxu0 0.0
    %1000 = vmatpush1.msra.mxu0 0.0
    %1001 = vmatprep.subr.mxu0 0.0
    %1002 = vmatpush1.msra.mxu0 0.0
    %1003 = vmatprep.subr.mxu0 0.0
    %1004 = vmatpush1.msra.mxu0 0.0
    %1005 = vmatprep.subr.mxu0 0.0
    %1006 = vmatpush1.msra.mxu0 0.0
    %1007 = vmatprep.subr.mxu0 0.0
    %1008 = vmatpush1.msra.mxu0 0.0
    %1009 = vmatprep.subr.mxu0 0.0
    %1010 = vmatpush1.msra.mxu0 0.0
    %1011 = vmatprep.subr.mxu0 0.0
    %1012 = vmatpush1.msra.mxu0 0.0
    %1013 = vmatprep.subr.mxu0 0.0
    %1014 = vmatpush1.msra.mxu0 0.0
    %1015 = vmatprep.subr.mxu0 0.0
    %1016 = vmatpush1.msra.mxu0 0.0
    %1017 = vmatprep.subr.mxu0 0.0
    %1018 = vmatpush1.msra.mxu0 0.0
    %1019 = vmatprep.subr.mxu0 0.0
    %1020 = vmatpush1.msra.mxu0 0.0
    %1021 = vmatprep.subr.mxu0 0.0
    %1022 = vmatpush1.msra.mxu0 0.0
    %1023 = vmatprep.subr.mxu0 0.0
    %1024 = vmatpush1.msra.mxu0 0.0
    %1025 = vmatprep.subr.mxu0 0.0
    %1026 = vmatpush1.msra.mxu0 0.0
    %1027 = vmatprep.subr.mxu0 0.0
    %1028 = vmatpush1.msra.mxu0 0.0
    %1029 = vmatprep.subr.mxu0 0.0
    %1030 = vmatpush1.msra.mxu0 0.0
    %1031 = vmatprep.subr.mxu0 0.0
    %1032 = vmatpush1.msra.mxu0 0.0
    %1033 = vmatprep.subr.mxu0 0.0
    %1034 = vmatpush1.msra.mxu0 0.0
    %1035 = vmatprep.mubr.f32.mxu0 0.0
    %1036 = vmatmul.mubr.f32.gmra.mrb[0].mxu0 %v966
    %v1037 = vpop.f32.mrb[0].mxu0
    %v1038 = vadd.f32 %v964, %v1037
    %v1039 = vpop.f32.mrb[0].mxu0
    %1040 = vmatprep.mubr.f32.mxu0 0.0
    %1041 = vmatmul.mubr.f32.gmra.mrb[0].mxu0 %v969
    %v1042 = vpop.f32.mrb[0].mxu0
    %v1043 = vadd.f32 %v964, %v1042
    %v1044 = vpop.f32.mrb[0].mxu0
    %1045 = vdwg.mxu0
    %v1046 = vadd.f32 %v21, %v1038
    %v1047 = vadd.f32 %v22, %v1043
    %v1048 = vsel %vm48, %v1046, 0.0
    %1049 = vadd.xlane.f32.xlu0 %v1048
    %v1050 = vpop.xlane.xlu0 %1049
    %v1051 = vsel %vm48, %v1047, 0.0
    %1052 = vadd.xlane.f32.xlu0 %v1051
    %v1053 = vpop.xlane.xlu0 %1052
    %v1054 = vrcp.pop 32.0
    %v1055 = vmul.f32 %v1050, %v1054
    %v1056 = vmul.f32 %v1053, %v1054
    %v1057 = vmul.f32 %v1046, %v1046
    %v1058 = vmul.f32 %v1047, %v1047
    %v1059 = vsel %vm48, %v1057, 0.0
    %1060 = vadd.xlane.f32.xlu0 %v1059
    %v1061 = vpop.xlane.xlu0 %1060
    %v1062 = vsel %vm48, %v1058, 0.0
    %1063 = vadd.xlane.f32.xlu0 %v1062
    %v1064 = vpop.xlane.xlu0 %1063
    %v1065 = vmul.f32 %v1061, %v1054
    %v1066 = vmul.f32 %v1064, %v1054
    %v1067 = vmul.f32 %v1055, %v1055
    %v1068 = vmul.f32 %v1056, %v1056
    %v1069 = vsub.f32 %v1065, %v1067
    %v1070 = vsub.f32 %v1066, %v1068
    %v1071 = vsub.f32 %v1046, %v1055
    %v1072 = vsub.f32 %v1047, %v1056
    %v1073 = vadd.f32 %v1069, 1e-05
    %v1074 = vadd.f32 %v1070, 1e-05
    %v1075 = vrsqrt.pop %v1073
    %v1076 = vrsqrt.pop %v1074
    %v1077 = vmul.f32 %v1071, %v1075
    %v1078 = vmul.f32 %v1072, %v1076
    %v1079 = vlaneseq
    %v1080 = vshrl.u32 %v1079, 7
    %v1081 = vsub.s32 4, %v1080
    %v1082 = vrot.slane %v43, %v1081
    %v1083 = vmul.f32 %v1077, %v1082
    %v1084 = vmul.f32 %v1078, %v1082
    %v1085 = vlaneseq
    %v1086 = vshrl.u32 %v1085, 7
    %v1087 = vsub.s32 5, %v1086
    %v1088 = vrot.slane %v43, %v1087
    %v1089 = vadd.f32 %v1083, %v1088
    %v1090 = vadd.f32 %v1084, %v1088
    %v1091 = vlaneseq
    %v1092 = vshrl.u32 %v1091, 7
    %v1093 = vsub.s32 2, %v1092
    %v1094 = vrot.slane %v43, %v1093
    %v1096 = vsel %vm48, %v1089, 0
    %v1099 = vsel %vm48, %v1090, 0
    %1101 = vmatprep.subr.mxu0 0.0
    %1102 = vmatpush1.msra.mxu0 %v27
    %1103 = vmatprep.subr.mxu0 0.0
    %1104 = vmatpush1.msra.mxu0 %v28
    %1105 = vmatprep.subr.mxu0 0.0
    %1106 = vmatpush1.msra.mxu0 %v29
    %1107 = vmatprep.subr.mxu0 0.0
    %1108 = vmatpush1.msra.mxu0 %v30
    %1109 = vmatprep.subr.mxu0 0.0
    %1110 = vmatpush1.msra.mxu0 0.0
    %1111 = vmatprep.subr.mxu0 0.0
    %1112 = vmatpush1.msra.mxu0 0.0
    %1113 = vmatprep.subr.mxu0 0.0
    %1114 = vmatpush1.msra.mxu0 0.0
    %1115 = vmatprep.subr.mxu0 0.0
    %1116 = vmatpush1.msra.mxu0 0.0
    %1117 = vmatprep.subr.mxu0 0.0
    %1118 = vmatpush1.msra.mxu0 0.0
    %1119 = vmatprep.subr.mxu0 0.0
    %1120 = vmatpush1.msra.mxu0 0.0
    %1121 = vmatprep.subr.mxu0 0.0
    %1122 = vmatpush1.msra.mxu0 0.0
    %1123 = vmatprep.subr.mxu0 0.0
    %1124 = vmatpush1.msra.mxu0 0.0
    %1125 = vmatprep.subr.mxu0 0.0
    %1126 = vmatpush1.msra.mxu0 0.0
    %1127 = vmatprep.subr.mxu0 0.0
    %1128 = vmatpush1.msra.mxu0 0.0
    %1129 = vmatprep.subr.mxu0 0.0
    %1130 = vmatpush1.msra.mxu0 0.0
    %1131 = vmatprep.subr.mxu0 0.0
    %1132 = vmatpush1.msra.mxu0 0.0
    %1133 = vmatprep.subr.mxu0 0.0
    %1134 = vmatpush1.msra.mxu0 0.0
    %1135 = vmatprep.subr.mxu0 0.0
    %1136 = vmatpush1.msra.mxu0 0.0
    %1137 = vmatprep.subr.mxu0 0.0
    %1138 = vmatpush1.msra.mxu0 0.0
    %1139 = vmatprep.subr.mxu0 0.0
    %1140 = vmatpush1.msra.mxu0 0.0
    %1141 = vmatprep.subr.mxu0 0.0
    %1142 = vmatpush1.msra.mxu0 0.0
    %1143 = vmatprep.subr.mxu0 0.0
    %1144 = vmatpush1.msra.mxu0 0.0
    %1145 = vmatprep.subr.mxu0 0.0
    %1146 = vmatpush1.msra.mxu0 0.0
    %1147 = vmatprep.subr.mxu0 0.0
    %1148 = vmatpush1.msra.mxu0 0.0
    %1149 = vmatprep.subr.mxu0 0.0
    %1150 = vmatpush1.msra.mxu0 0.0
    %1151 = vmatprep.subr.mxu0 0.0
    %1152 = vmatpush1.msra.mxu0 0.0
    %1153 = vmatprep.subr.mxu0 0.0
    %1154 = vmatpush1.msra.mxu0 0.0
    %1155 = vmatprep.subr.mxu0 0.0
    %1156 = vmatpush1.msra.mxu0 0.0
    %1157 = vmatprep.subr.mxu0 0.0
    %1158 = vmatpush1.msra.mxu0 0.0
    %1159 = vmatprep.subr.mxu0 0.0
    %1160 = vmatpush1.msra.mxu0 0.0
    %1161 = vmatprep.subr.mxu0 0.0
    %1162 = vmatpush1.msra.mxu0 0.0
    %1163 = vmatprep.subr.mxu0 0.0
    %1164 = vmatpush1.msra.mxu0 0.0
    %1165 = vmatprep.mubr.f32.mxu0 0.0
    %1166 = vmatmul.mubr.f32.gmra.mrb[0].mxu0 %v1096
    %v1167 = vpop.f32.mrb[0].mxu0
    %v1168 = vadd.f32 %v1094, %v1167
    %v1169 = vpop.f32.mrb[0].mxu0
    %1170 = vmatprep.mubr.f32.mxu0 0.0
    %1171 = vmatmul.mubr.f32.gmra.mrb[0].mxu0 %v1099
    %v1172 = vpop.f32.mrb[0].mxu0
    %v1173 = vadd.f32 %v1094, %v1172
    %v1174 = vpop.f32.mrb[0].mxu0
    %1175 = vdwg.mxu0
    %v1176 = vmax.f32 %v1168, 0.0
    %v1177 = vmax.f32 %v1173, 0.0
    %v1178 = vlaneseq
    %v1179 = vshrl.u32 %v1178, 7
    %v1180 = vsub.s32 3, %v1179
    %v1181 = vrot.slane %v43, %v1180
    %vm1182 = vcmask 523264
    %v1184 = vsel %vm1182, %v1176, 0
    %v1187 = vsel %vm1182, %v1177, 0
    %1189 = vmatprep.subr.mxu0 0.0
    %1190 = vmatpush1.msra.mxu0 %v35
    %1191 = vmatprep.subr.mxu0 0.0
    %1192 = vmatpush1.msra.mxu0 %v36
    %1193 = vmatprep.subr.mxu0 0.0
    %1194 = vmatpush1.msra.mxu0 %v37
    %1195 = vmatprep.subr.mxu0 0.0
    %1196 = vmatpush1.msra.mxu0 %v38
    %1197 = vmatprep.subr.mxu0 0.0
    %1198 = vmatpush1.msra.mxu0 %v39
    %1199 = vmatprep.subr.mxu0 0.0
    %1200 = vmatpush1.msra.mxu0 %v40
    %1201 = vmatprep.subr.mxu0 0.0
    %1202 = vmatpush1.msra.mxu0 %v41
    %1203 = vmatprep.subr.mxu0 0.0
    %1204 = vmatpush1.msra.mxu0 %v42
    %1205 = vmatprep.subr.mxu0 0.0
    %1206 = vmatpush1.msra.mxu0 0.0
    %1207 = vmatprep.subr.mxu0 0.0
    %1208 = vmatpush1.msra.mxu0 0.0
    %1209 = vmatprep.subr.mxu0 0.0
    %1210 = vmatpush1.msra.mxu0 0.0
    %1211 = vmatprep.subr.mxu0 0.0
    %1212 = vmatpush1.msra.mxu0 0.0
    %1213 = vmatprep.subr.mxu0 0.0
    %1214 = vmatpush1.msra.mxu0 0.0
    %1215 = vmatprep.subr.mxu0 0.0
    %1216 = vmatpush1.msra.mxu0 0.0
    %1217 = vmatprep.subr.mxu0 0.0
    %1218 = vmatpush1.msra.mxu0 0.0
    %1219 = vmatprep.subr.mxu0 0.0
    %1220 = vmatpush1.msra.mxu0 0.0
    %1221 = vmatprep.subr.mxu0 0.0
    %1222 = vmatpush1.msra.mxu0 0.0
    %1223 = vmatprep.subr.mxu0 0.0
    %1224 = vmatpush1.msra.mxu0 0.0
    %1225 = vmatprep.subr.mxu0 0.0
    %1226 = vmatpush1.msra.mxu0 0.0
    %1227 = vmatprep.subr.mxu0 0.0
    %1228 = vmatpush1.msra.mxu0 0.0
    %1229 = vmatprep.subr.mxu0 0.0
    %1230 = vmatpush1.msra.mxu0 0.0
    %1231 = vmatprep.subr.mxu0 0.0
    %1232 = vmatpush1.msra.mxu0 0.0
    %1233 = vmatprep.subr.mxu0 0.0
    %1234 = vmatpush1.msra.mxu0 0.0
    %1235 = vmatprep.subr.mxu0 0.0
    %1236 = vmatpush1.msra.mxu0 0.0
    %1237 = vmatprep.subr.mxu0 0.0
    %1238 = vmatpush1.msra.mxu0 0.0
    %1239 = vmatprep.subr.mxu0 0.0
    %1240 = vmatpush1.msra.mxu0 0.0
    %1241 = vmatprep.subr.mxu0 0.0
    %1242 = vmatpush1.msra.mxu0 0.0
    %1243 = vmatprep.subr.mxu0 0.0
    %1244 = vmatpush1.msra.mxu0 0.0
    %1245 = vmatprep.subr.mxu0 0.0
    %1246 = vmatpush1.msra.mxu0 0.0
    %1247 = vmatprep.subr.mxu0 0.0
    %1248 = vmatpush1.msra.mxu0 0.0
    %1249 = vmatprep.subr.mxu0 0.0
    %1250 = vmatpush1.msra.mxu0 0.0
    %1251 = vmatprep.subr.mxu0 0.0
    %1252 = vmatpush1.msra.mxu0 0.0
    %1253 = vmatprep.mubr.f32.mxu0 0.0
    %1254 = vmatmul.mubr.f32.gmra.mrb[0].mxu0 %v1184
    %v1255 = vpop.f32.mrb[0].mxu0
    %v1256 = vadd.f32 %v1181, %v1255
    %v1257 = vpop.f32.mrb[0].mxu0
    %1258 = vmatprep.mubr.f32.mxu0 0.0
    %1259 = vmatmul.mubr.f32.gmra.mrb[0].mxu0 %v1187
    %v1260 = vpop.f32.mrb[0].mxu0
    %v1261 = vadd.f32 %v1181, %v1260
    %v1262 = vpop.f32.mrb[0].mxu0
    %1263 = vdwg.mxu0
    %v1264 = vadd.f32 %v1089, %v1256
    %v1265 = vadd.f32 %v1090, %v1261
    %v1266 = vsel %vm48, %v1264, 0.0
    %1267 = vadd.xlane.f32.xlu0 %v1266
    %v1268 = vpop.xlane.xlu0 %1267
    %v1269 = vsel %vm48, %v1265, 0.0
    %1270 = vadd.xlane.f32.xlu0 %v1269
    %v1271 = vpop.xlane.xlu0 %1270
    %v1272 = vmul.f32 %v1268, %v1054
    %v1273 = vmul.f32 %v1271, %v1054
    %v1274 = vmul.f32 %v1264, %v1264
    %v1275 = vmul.f32 %v1265, %v1265
    %v1276 = vsel %vm48, %v1274, 0.0
    %1277 = vadd.xlane.f32.xlu0 %v1276
    %v1278 = vpop.xlane.xlu0 %1277
    %v1279 = vsel %vm48, %v1275, 0.0
    %1280 = vadd.xlane.f32.xlu0 %v1279
    %v1281 = vpop.xlane.xlu0 %1280
    %v1282 = vmul.f32 %v1278, %v1054
    %v1283 = vmul.f32 %v1281, %v1054
    %v1284 = vmul.f32 %v1272, %v1272
    %v1285 = vmul.f32 %v1273, %v1273
    %v1286 = vsub.f32 %v1282, %v1284
    %v1287 = vsub.f32 %v1283, %v1285
    %v1288 = vsub.f32 %v1264, %v1272
    %v1289 = vsub.f32 %v1265, %v1273
    %v1290 = vadd.f32 %v1286, 1e-05
    %v1291 = vadd.f32 %v1287, 1e-05
    %v1292 = vrsqrt.pop %v1290
    %v1293 = vrsqrt.pop %v1291
    %v1294 = vmul.f32 %v1288, %v1292
    %v1295 = vmul.f32 %v1289, %v1293
    %v1296 = vlaneseq
    %v1297 = vshrl.u32 %v1296, 7
    %v1298 = vsub.s32 6, %v1297
    %v1299 = vrot.slane %v43, %v1298
    %v1300 = vmul.f32 %v1294, %v1299
    %v1301 = vmul.f32 %v1295, %v1299
    %v1302 = vlaneseq
    %v1303 = vshrl.u32 %v1302, 7
    %v1304 = vsub.s32 7, %v1303
    %v1305 = vrot.slane %v43, %v1304
    %v1306 = vadd.f32 %v1300, %v1305
    %v1307 = vadd.f32 %v1301, %v1305
    %v1308 = vld [vmem:[%s1 + $0x20] sm:$0xff]
    %v1309 = vld [vmem:[%s1 + $0x28] sm:$0xff]
    %v1310 = vld [vmem:[%s1 + $0x30] sm:$0xff]
    %v1311 = vld [vmem:[%s1 + $0x38] sm:$0xff]
    %v1312 = vld [vmem:[%s2 + $0x20] sm:$0xff]
    %v1313 = vld [vmem:[%s2 + $0x28] sm:$0xff]
    %v1314 = vld [vmem:[%s2 + $0x30] sm:$0xff]
    %v1315 = vld [vmem:[%s2 + $0x38] sm:$0xff]
    %v1316 = vld [vmem:[%s3 + $0x20] sm:$0xff]
    %v1317 = vld [vmem:[%s3 + $0x28] sm:$0xff]
    %v1318 = vld [vmem:[%s3 + $0x30] sm:$0xff]
    %v1319 = vld [vmem:[%s3 + $0x38] sm:$0xff]
    %v1320 = vld [vmem:[%s3 + $0x80] sm:$0xff]
    %v1321 = vld [vmem:[%s3 + $0x88] sm:$0xff]
    %v1322 = vld [vmem:[%s3 + $0x90] sm:$0xff]
    %v1323 = vld [vmem:[%s3 + $0x98] sm:$0xff]
    %v1324 = vld [vmem:[%s3 + $0xa0] sm:$0xff]
    %v1325 = vld [vmem:[%s3 + $0xa8] sm:$0xff]
    %v1326 = vld [vmem:[%s3 + $0xb0] sm:$0xff]
    %v1327 = vld [vmem:[%s3 + $0xb8] sm:$0xff]
    %v1328 = vld [vmem:[%s4 + $0x8] sm:$0xff]
    %v1329 = vlaneseq
    %v1330 = vshrl.u32 %v1329, 7
    %v1331 = vsub.s32 0, %v1330
    %v1332 = vrot.slane %v1328, %v1331
    %v1334 = vsel %vm48, %v1306, 0
    %v1337 = vsel %vm48, %v1307, 0
    %1339 = vmatprep.subr.mxu0 0.0
    %1340 = vmatpush1.msra.mxu0 %v1308
    %1341 = vmatprep.subr.mxu0 0.0
    %1342 = vmatpush1.msra.mxu0 %v1309
    %1343 = vmatprep.subr.mxu0 0.0
    %1344 = vmatpush1.msra.mxu0 %v1310
    %1345 = vmatprep.subr.mxu0 0.0
    %1346 = vmatpush1.msra.mxu0 %v1311
    %1347 = vmatprep.subr.mxu0 0.0
    %1348 = vmatpush1.msra.mxu0 0.0
    %1349 = vmatprep.subr.mxu0 0.0
    %1350 = vmatpush1.msra.mxu0 0.0
    %1351 = vmatprep.subr.mxu0 0.0
    %1352 = vmatpush1.msra.mxu0 0.0
    %1353 = vmatprep.subr.mxu0 0.0
    %1354 = vmatpush1.msra.mxu0 0.0
    %1355 = vmatprep.subr.mxu0 0.0
    %1356 = vmatpush1.msra.mxu0 0.0
    %1357 = vmatprep.subr.mxu0 0.0
    %1358 = vmatpush1.msra.mxu0 0.0
    %1359 = vmatprep.subr.mxu0 0.0
    %1360 = vmatpush1.msra.mxu0 0.0
    %1361 = vmatprep.subr.mxu0 0.0
    %1362 = vmatpush1.msra.mxu0 0.0
    %1363 = vmatprep.subr.mxu0 0.0
    %1364 = vmatpush1.msra.mxu0 0.0
    %1365 = vmatprep.subr.mxu0 0.0
    %1366 = vmatpush1.msra.mxu0 0.0
    %1367 = vmatprep.subr.mxu0 0.0
    %1368 = vmatpush1.msra.mxu0 0.0
    %1369 = vmatprep.subr.mxu0 0.0
    %1370 = vmatpush1.msra.mxu0 0.0
    %1371 = vmatprep.subr.mxu0 0.0
    %1372 = vmatpush1.msra.mxu0 0.0
    %1373 = vmatprep.subr.mxu0 0.0
    %1374 = vmatpush1.msra.mxu0 0.0
    %1375 = vmatprep.subr.mxu0 0.0
    %1376 = vmatpush1.msra.mxu0 0.0
    %1377 = vmatprep.subr.mxu0 0.0
    %1378 = vmatpush1.msra.mxu0 0.0
    %1379 = vmatprep.subr.mxu0 0.0
    %1380 = vmatpush1.msra.mxu0 0.0
    %1381 = vmatprep.subr.mxu0 0.0
    %1382 = vmatpush1.msra.mxu0 0.0
    %1383 = vmatprep.subr.mxu0 0.0
    %1384 = vmatpush1.msra.mxu0 0.0
    %1385 = vmatprep.subr.mxu0 0.0
    %1386 = vmatpush1.msra.mxu0 0.0
    %1387 = vmatprep.subr.mxu0 0.0
    %1388 = vmatpush1.msra.mxu0 0.0
    %1389 = vmatprep.subr.mxu0 0.0
    %1390 = vmatpush1.msra.mxu0 0.0
    %1391 = vmatprep.subr.mxu0 0.0
    %1392 = vmatpush1.msra.mxu0 0.0
    %1393 = vmatprep.subr.mxu0 0.0
    %1394 = vmatpush1.msra.mxu0 0.0
    %1395 = vmatprep.subr.mxu0 0.0
    %1396 = vmatpush1.msra.mxu0 0.0
    %1397 = vmatprep.subr.mxu0 0.0
    %1398 = vmatpush1.msra.mxu0 0.0
    %1399 = vmatprep.subr.mxu0 0.0
    %1400 = vmatpush1.msra.mxu0 0.0
    %1401 = vmatprep.subr.mxu0 0.0
    %1402 = vmatpush1.msra.mxu0 0.0
    %1403 = vmatprep.mubr.f32.mxu0 0.0
    %1404 = vmatmul.mubr.f32.gmra.mrb[0].mxu0 %v1334
    %v1405 = vpop.f32.mrb[0].mxu0
    %v1406 = vadd.f32 %v1332, %v1405
    %v1407 = vpop.f32.mrb[0].mxu0
    %1408 = vmatprep.mubr.f32.mxu0 0.0
    %1409 = vmatmul.mubr.f32.gmra.mrb[0].mxu0 %v1337
    %v1410 = vpop.f32.mrb[0].mxu0
    %v1411 = vadd.f32 %v1332, %v1410
    %v1412 = vpop.f32.mrb[0].mxu0
    %1413 = vdwg.mxu0
    %1416 = vrot.lane.b32.xlu0 %v1406, 96
    %v1417 = vpop.permute.xlu0 %1416
    %1418 = vrot.lane.b32.xlu0 %v1411, 96
    %v1419 = vpop.permute.xlu0 %1418
    %v1420 = vsel %vm136, %v1406, 0
    %v1422 = vsel %vm136, %v1411, 0
    %v1424 = vsel %vm136, %v1417, 0
    %v1426 = vsel %vm136, %v1419, 0
    %1428 = vmatprep.subr.mxu0 0.0
    %1429 = vmatpush1.xpose.msra.mxu0 %v1424
    %1430 = vmatprep.subr.mxu0 0.0
    %1431 = vmatpush1.xpose.msra.mxu0 %v1426
    %1432 = vmatprep.subr.mxu0 0.0
    %1433 = vmatpush1.xpose.msra.mxu0 0.0
    %1434 = vmatprep.subr.mxu0 0.0
    %1435 = vmatpush1.xpose.msra.mxu0 0.0
    %1436 = vmatprep.subr.mxu0 0.0
    %1437 = vmatpush1.xpose.msra.mxu0 0.0
    %1438 = vmatprep.subr.mxu0 0.0
    %1439 = vmatpush1.xpose.msra.mxu0 0.0
    %1440 = vmatprep.subr.mxu0 0.0
    %1441 = vmatpush1.xpose.msra.mxu0 0.0
    %1442 = vmatprep.subr.mxu0 0.0
    %1443 = vmatpush1.xpose.msra.mxu0 0.0
    %1444 = vmatprep.subr.mxu0 0.0
    %1445 = vmatpush1.xpose.msra.mxu0 0.0
    %1446 = vmatprep.subr.mxu0 0.0
    %1447 = vmatpush1.xpose.msra.mxu0 0.0
    %1448 = vmatprep.subr.mxu0 0.0
    %1449 = vmatpush1.xpose.msra.mxu0 0.0
    %1450 = vmatprep.subr.mxu0 0.0
    %1451 = vmatpush1.xpose.msra.mxu0 0.0
    %1452 = vmatprep.subr.mxu0 0.0
    %1453 = vmatpush1.xpose.msra.mxu0 0.0
    %1454 = vmatprep.subr.mxu0 0.0
    %1455 = vmatpush1.xpose.msra.mxu0 0.0
    %1456 = vmatprep.subr.mxu0 0.0
    %1457 = vmatpush1.xpose.msra.mxu0 0.0
    %1458 = vmatprep.subr.mxu0 0.0
    %1459 = vmatpush1.xpose.msra.mxu0 0.0
    %1460 = vmatprep.subr.mxu0 0.0
    %1461 = vmatpush1.xpose.msra.mxu0 0.0
    %1462 = vmatprep.subr.mxu0 0.0
    %1463 = vmatpush1.xpose.msra.mxu0 0.0
    %1464 = vmatprep.subr.mxu0 0.0
    %1465 = vmatpush1.xpose.msra.mxu0 0.0
    %1466 = vmatprep.subr.mxu0 0.0
    %1467 = vmatpush1.xpose.msra.mxu0 0.0
    %1468 = vmatprep.subr.mxu0 0.0
    %1469 = vmatpush1.xpose.msra.mxu0 0.0
    %1470 = vmatprep.subr.mxu0 0.0
    %1471 = vmatpush1.xpose.msra.mxu0 0.0
    %1472 = vmatprep.subr.mxu0 0.0
    %1473 = vmatpush1.xpose.msra.mxu0 0.0
    %1474 = vmatprep.subr.mxu0 0.0
    %1475 = vmatpush1.xpose.msra.mxu0 0.0
    %1476 = vmatprep.subr.mxu0 0.0
    %1477 = vmatpush1.xpose.msra.mxu0 0.0
    %1478 = vmatprep.subr.mxu0 0.0
    %1479 = vmatpush1.xpose.msra.mxu0 0.0
    %1480 = vmatprep.subr.mxu0 0.0
    %1481 = vmatpush1.xpose.msra.mxu0 0.0
    %1482 = vmatprep.subr.mxu0 0.0
    %1483 = vmatpush1.xpose.msra.mxu0 0.0
    %1484 = vmatprep.subr.mxu0 0.0
    %1485 = vmatpush1.xpose.msra.mxu0 0.0
    %1486 = vmatprep.subr.mxu0 0.0
    %1487 = vmatpush1.xpose.msra.mxu0 0.0
    %1488 = vmatprep.subr.mxu0 0.0
    %1489 = vmatpush1.xpose.msra.mxu0 0.0
    %1490 = vmatprep.subr.mxu0 0.0
    %1491 = vmatpush1.xpose.msra.mxu0 0.0
    %1492 = vmatprep.mubr.f32.mxu0 0.0
    %1493 = vmatmul.mubr.f32.gmra.mrb[0].mxu0 %v1420
    %v1494 = vpop.f32.mrb[0].mxu0
    %v1495 = vadd.f32 0.0, %v1494
    %v1496 = vpop.f32.mrb[0].mxu0
    %1497 = vmatprep.mubr.f32.mxu0 0.0
    %1498 = vmatmul.mubr.f32.gmra.mrb[0].mxu0 %v1422
    %v1499 = vpop.f32.mrb[0].mxu0
    %v1500 = vadd.f32 0.0, %v1499
    %v1501 = vpop.f32.mrb[0].mxu0
    %1502 = vdwg.mxu0
    %v1503 = vsel %vm220, %v1495, -inf
    %1504 = vmax.xlane.f32.xlu0 %v1503
    %v1505 = vpop.xlane.xlu0 %1504
    %v1506 = vsel %vm220, %v1500, -inf
    %1507 = vmax.xlane.f32.xlu0 %v1506
    %v1508 = vpop.xlane.xlu0 %1507
    %v1509 = vsub.f32 %v1495, %v1505
    %v1510 = vsub.f32 %v1500, %v1508
    %v1511 = vmul.f32 %v1509, 1.442695
    %v1512 = vpow.pop %v1511
    %v1513 = vmul.f32 %v1510, 1.442695
    %v1514 = vpow.pop %v1513
    %v1515 = vsel %vm220, %v1512, 0.0
    %1516 = vadd.xlane.f32.xlu0 %v1515
    %v1517 = vpop.xlane.xlu0 %1516
    %v1518 = vsel %vm220, %v1514, 0.0
    %1519 = vadd.xlane.f32.xlu0 %v1518
    %v1520 = vpop.xlane.xlu0 %1519
    %1521 = vrot.lane.b32.xlu0 %v1406, 64
    %v1522 = vpop.permute.xlu0 %1521
    %1523 = vrot.lane.b32.xlu0 %v1411, 64
    %v1524 = vpop.permute.xlu0 %1523
    %v1528 = vsel %vm220, %v1512, 0
    %v1531 = vsel %vm220, %v1514, 0
    %1533 = vmatprep.subr.mxu0 0.0
    %1534 = vmatpush1.msra.mxu0 %v1522
    %1535 = vmatprep.subr.mxu0 0.0
    %1536 = vmatpush1.msra.mxu0 %v1524
    %1537 = vmatprep.subr.mxu0 0.0
    %1538 = vmatpush1.msra.mxu0 0.0
    %1539 = vmatprep.subr.mxu0 0.0
    %1540 = vmatpush1.msra.mxu0 0.0
    %1541 = vmatprep.subr.mxu0 0.0
    %1542 = vmatpush1.msra.mxu0 0.0
    %1543 = vmatprep.subr.mxu0 0.0
    %1544 = vmatpush1.msra.mxu0 0.0
    %1545 = vmatprep.subr.mxu0 0.0
    %1546 = vmatpush1.msra.mxu0 0.0
    %1547 = vmatprep.subr.mxu0 0.0
    %1548 = vmatpush1.msra.mxu0 0.0
    %1549 = vmatprep.subr.mxu0 0.0
    %1550 = vmatpush1.msra.mxu0 0.0
    %1551 = vmatprep.subr.mxu0 0.0
    %1552 = vmatpush1.msra.mxu0 0.0
    %1553 = vmatprep.subr.mxu0 0.0
    %1554 = vmatpush1.msra.mxu0 0.0
    %1555 = vmatprep.subr.mxu0 0.0
    %1556 = vmatpush1.msra.mxu0 0.0
    %1557 = vmatprep.subr.mxu0 0.0
    %1558 = vmatpush1.msra.mxu0 0.0
    %1559 = vmatprep.subr.mxu0 0.0
    %1560 = vmatpush1.msra.mxu0 0.0
    %1561 = vmatprep.subr.mxu0 0.0
    %1562 = vmatpush1.msra.mxu0 0.0
    %1563 = vmatprep.subr.mxu0 0.0
    %1564 = vmatpush1.msra.mxu0 0.0
    %1565 = vmatprep.subr.mxu0 0.0
    %1566 = vmatpush1.msra.mxu0 0.0
    %1567 = vmatprep.subr.mxu0 0.0
    %1568 = vmatpush1.msra.mxu0 0.0
    %1569 = vmatprep.subr.mxu0 0.0
    %1570 = vmatpush1.msra.mxu0 0.0
    %1571 = vmatprep.subr.mxu0 0.0
    %1572 = vmatpush1.msra.mxu0 0.0
    %1573 = vmatprep.subr.mxu0 0.0
    %1574 = vmatpush1.msra.mxu0 0.0
    %1575 = vmatprep.subr.mxu0 0.0
    %1576 = vmatpush1.msra.mxu0 0.0
    %1577 = vmatprep.subr.mxu0 0.0
    %1578 = vmatpush1.msra.mxu0 0.0
    %1579 = vmatprep.subr.mxu0 0.0
    %1580 = vmatpush1.msra.mxu0 0.0
    %1581 = vmatprep.subr.mxu0 0.0
    %1582 = vmatpush1.msra.mxu0 0.0
    %1583 = vmatprep.subr.mxu0 0.0
    %1584 = vmatpush1.msra.mxu0 0.0
    %1585 = vmatprep.subr.mxu0 0.0
    %1586 = vmatpush1.msra.mxu0 0.0
    %1587 = vmatprep.subr.mxu0 0.0
    %1588 = vmatpush1.msra.mxu0 0.0
    %1589 = vmatprep.subr.mxu0 0.0
    %1590 = vmatpush1.msra.mxu0 0.0
    %1591 = vmatprep.subr.mxu0 0.0
    %1592 = vmatpush1.msra.mxu0 0.0
    %1593 = vmatprep.subr.mxu0 0.0
    %1594 = vmatpush1.msra.mxu0 0.0
    %1595 = vmatprep.subr.mxu0 0.0
    %1596 = vmatpush1.msra.mxu0 0.0
    %1597 = vmatprep.mubr.f32.mxu0 0.0
    %1598 = vmatmul.mubr.f32.gmra.mrb[0].mxu0 %v1528
    %v1599 = vpop.f32.mrb[0].mxu0
    %v1600 = vadd.f32 0.0, %v1599
    %v1601 = vpop.f32.mrb[0].mxu0
    %1602 = vmatprep.mubr.f32.mxu0 0.0
    %1603 = vmatmul.mubr.f32.gmra.mrb[0].mxu0 %v1531
    %v1604 = vpop.f32.mrb[0].mxu0
    %v1605 = vadd.f32 0.0, %v1604
    %v1606 = vpop.f32.mrb[0].mxu0
    %1607 = vdwg.mxu0
    %v1608 = vrcp.pop %v1517
    %v1609 = vmul.f32 %v1600, %v1608
    %v1610 = vrcp.pop %v1520
    %v1611 = vmul.f32 %v1605, %v1610
    %1612 = vrot.lane.b32.xlu0 %v1406, 120
    %v1613 = vpop.permute.xlu0 %1612
    %1614 = vrot.lane.b32.xlu0 %v1411, 120
    %v1615 = vpop.permute.xlu0 %1614
    %1616 = vrot.lane.b32.xlu0 %v1406, 88
    %v1617 = vpop.permute.xlu0 %1616
    %1618 = vrot.lane.b32.xlu0 %v1411, 88
    %v1619 = vpop.permute.xlu0 %1618
    %v1620 = vsel %vm136, %v1613, 0
    %v1622 = vsel %vm136, %v1615, 0
    %v1624 = vsel %vm136, %v1617, 0
    %v1626 = vsel %vm136, %v1619, 0
    %1628 = vmatprep.subr.mxu0 0.0
    %1629 = vmatpush1.xpose.msra.mxu0 %v1624
    %1630 = vmatprep.subr.mxu0 0.0
    %1631 = vmatpush1.xpose.msra.mxu0 %v1626
    %1632 = vmatprep.subr.mxu0 0.0
    %1633 = vmatpush1.xpose.msra.mxu0 0.0
    %1634 = vmatprep.subr.mxu0 0.0
    %1635 = vmatpush1.xpose.msra.mxu0 0.0
    %1636 = vmatprep.subr.mxu0 0.0
    %1637 = vmatpush1.xpose.msra.mxu0 0.0
    %1638 = vmatprep.subr.mxu0 0.0
    %1639 = vmatpush1.xpose.msra.mxu0 0.0
    %1640 = vmatprep.subr.mxu0 0.0
    %1641 = vmatpush1.xpose.msra.mxu0 0.0
    %1642 = vmatprep.subr.mxu0 0.0
    %1643 = vmatpush1.xpose.msra.mxu0 0.0
    %1644 = vmatprep.subr.mxu0 0.0
    %1645 = vmatpush1.xpose.msra.mxu0 0.0
    %1646 = vmatprep.subr.mxu0 0.0
    %1647 = vmatpush1.xpose.msra.mxu0 0.0
    %1648 = vmatprep.subr.mxu0 0.0
    %1649 = vmatpush1.xpose.msra.mxu0 0.0
    %1650 = vmatprep.subr.mxu0 0.0
    %1651 = vmatpush1.xpose.msra.mxu0 0.0
    %1652 = vmatprep.subr.mxu0 0.0
    %1653 = vmatpush1.xpose.msra.mxu0 0.0
    %1654 = vmatprep.subr.mxu0 0.0
    %1655 = vmatpush1.xpose.msra.mxu0 0.0
    %1656 = vmatprep.subr.mxu0 0.0
    %1657 = vmatpush1.xpose.msra.mxu0 0.0
    %1658 = vmatprep.subr.mxu0 0.0
    %1659 = vmatpush1.xpose.msra.mxu0 0.0
    %1660 = vmatprep.subr.mxu0 0.0
    %1661 = vmatpush1.xpose.msra.mxu0 0.0
    %1662 = vmatprep.subr.mxu0 0.0
    %1663 = vmatpush1.xpose.msra.mxu0 0.0
    %1664 = vmatprep.subr.mxu0 0.0
    %1665 = vmatpush1.xpose.msra.mxu0 0.0
    %1666 = vmatprep.subr.mxu0 0.0
    %1667 = vmatpush1.xpose.msra.mxu0 0.0
    %1668 = vmatprep.subr.mxu0 0.0
    %1669 = vmatpush1.xpose.msra.mxu0 0.0
    %1670 = vmatprep.subr.mxu0 0.0
    %1671 = vmatpush1.xpose.msra.mxu0 0.0
    %1672 = vmatprep.subr.mxu0 0.0
    %1673 = vmatpush1.xpose.msra.mxu0 0.0
    %1674 = vmatprep.subr.mxu0 0.0
    %1675 = vmatpush1.xpose.msra.mxu0 0.0
    %1676 = vmatprep.subr.mxu0 0.0
    %1677 = vmatpush1.xpose.msra.mxu0 0.0
    %1678 = vmatprep.subr.mxu0 0.0
    %1679 = vmatpush1.xpose.msra.mxu0 0.0
    %1680 = vmatprep.subr.mxu0 0.0
    %1681 = vmatpush1.xpose.msra.mxu0 0.0
    %1682 = vmatprep.subr.mxu0 0.0
    %1683 = vmatpush1.xpose.msra.mxu0 0.0
    %1684 = vmatprep.subr.mxu0 0.0
    %1685 = vmatpush1.xpose.msra.mxu0 0.0
    %1686 = vmatprep.subr.mxu0 0.0
    %1687 = vmatpush1.xpose.msra.mxu0 0.0
    %1688 = vmatprep.subr.mxu0 0.0
    %1689 = vmatpush1.xpose.msra.mxu0 0.0
    %1690 = vmatprep.subr.mxu0 0.0
    %1691 = vmatpush1.xpose.msra.mxu0 0.0
    %1692 = vmatprep.mubr.f32.mxu0 0.0
    %1693 = vmatmul.mubr.f32.gmra.mrb[0].mxu0 %v1620
    %v1694 = vpop.f32.mrb[0].mxu0
    %v1695 = vadd.f32 0.0, %v1694
    %v1696 = vpop.f32.mrb[0].mxu0
    %1697 = vmatprep.mubr.f32.mxu0 0.0
    %1698 = vmatmul.mubr.f32.gmra.mrb[0].mxu0 %v1622
    %v1699 = vpop.f32.mrb[0].mxu0
    %v1700 = vadd.f32 0.0, %v1699
    %v1701 = vpop.f32.mrb[0].mxu0
    %1702 = vdwg.mxu0
    %v1703 = vsel %vm220, %v1695, -inf
    %1704 = vmax.xlane.f32.xlu0 %v1703
    %v1705 = vpop.xlane.xlu0 %1704
    %v1706 = vsel %vm220, %v1700, -inf
    %1707 = vmax.xlane.f32.xlu0 %v1706
    %v1708 = vpop.xlane.xlu0 %1707
    %v1709 = vsub.f32 %v1695, %v1705
    %v1710 = vsub.f32 %v1700, %v1708
    %v1711 = vmul.f32 %v1709, 1.442695
    %v1712 = vpow.pop %v1711
    %v1713 = vmul.f32 %v1710, 1.442695
    %v1714 = vpow.pop %v1713
    %v1715 = vsel %vm220, %v1712, 0.0
    %1716 = vadd.xlane.f32.xlu0 %v1715
    %v1717 = vpop.xlane.xlu0 %1716
    %v1718 = vsel %vm220, %v1714, 0.0
    %1719 = vadd.xlane.f32.xlu0 %v1718
    %v1720 = vpop.xlane.xlu0 %1719
    %1721 = vrot.lane.b32.xlu0 %v1406, 56
    %v1722 = vpop.permute.xlu0 %1721
    %1723 = vrot.lane.b32.xlu0 %v1411, 56
    %v1724 = vpop.permute.xlu0 %1723
    %v1728 = vsel %vm220, %v1712, 0
    %v1731 = vsel %vm220, %v1714, 0
    %1733 = vmatprep.subr.mxu0 0.0
    %1734 = vmatpush1.msra.mxu0 %v1722
    %1735 = vmatprep.subr.mxu0 0.0
    %1736 = vmatpush1.msra.mxu0 %v1724
    %1737 = vmatprep.subr.mxu0 0.0
    %1738 = vmatpush1.msra.mxu0 0.0
    %1739 = vmatprep.subr.mxu0 0.0
    %1740 = vmatpush1.msra.mxu0 0.0
    %1741 = vmatprep.subr.mxu0 0.0
    %1742 = vmatpush1.msra.mxu0 0.0
    %1743 = vmatprep.subr.mxu0 0.0
    %1744 = vmatpush1.msra.mxu0 0.0
    %1745 = vmatprep.subr.mxu0 0.0
    %1746 = vmatpush1.msra.mxu0 0.0
    %1747 = vmatprep.subr.mxu0 0.0
    %1748 = vmatpush1.msra.mxu0 0.0
    %1749 = vmatprep.subr.mxu0 0.0
    %1750 = vmatpush1.msra.mxu0 0.0
    %1751 = vmatprep.subr.mxu0 0.0
    %1752 = vmatpush1.msra.mxu0 0.0
    %1753 = vmatprep.subr.mxu0 0.0
    %1754 = vmatpush1.msra.mxu0 0.0
    %1755 = vmatprep.subr.mxu0 0.0
    %1756 = vmatpush1.msra.mxu0 0.0
    %1757 = vmatprep.subr.mxu0 0.0
    %1758 = vmatpush1.msra.mxu0 0.0
    %1759 = vmatprep.subr.mxu0 0.0
    %1760 = vmatpush1.msra.mxu0 0.0
    %1761 = vmatprep.subr.mxu0 0.0
    %1762 = vmatpush1.msra.mxu0 0.0
    %1763 = vmatprep.subr.mxu0 0.0
    %1764 = vmatpush1.msra.mxu0 0.0
    %1765 = vmatprep.subr.mxu0 0.0
    %1766 = vmatpush1.msra.mxu0 0.0
    %1767 = vmatprep.subr.mxu0 0.0
    %1768 = vmatpush1.msra.mxu0 0.0
    %1769 = vmatprep.subr.mxu0 0.0
    %1770 = vmatpush1.msra.mxu0 0.0
    %1771 = vmatprep.subr.mxu0 0.0
    %1772 = vmatpush1.msra.mxu0 0.0
    %1773 = vmatprep.subr.mxu0 0.0
    %1774 = vmatpush1.msra.mxu0 0.0
    %1775 = vmatprep.subr.mxu0 0.0
    %1776 = vmatpush1.msra.mxu0 0.0
    %1777 = vmatprep.subr.mxu0 0.0
    %1778 = vmatpush1.msra.mxu0 0.0
    %1779 = vmatprep.subr.mxu0 0.0
    %1780 = vmatpush1.msra.mxu0 0.0
    %1781 = vmatprep.subr.mxu0 0.0
    %1782 = vmatpush1.msra.mxu0 0.0
    %1783 = vmatprep.subr.mxu0 0.0
    %1784 = vmatpush1.msra.mxu0 0.0
    %1785 = vmatprep.subr.mxu0 0.0
    %1786 = vmatpush1.msra.mxu0 0.0
    %1787 = vmatprep.subr.mxu0 0.0
    %1788 = vmatpush1.msra.mxu0 0.0
    %1789 = vmatprep.subr.mxu0 0.0
    %1790 = vmatpush1.msra.mxu0 0.0
    %1791 = vmatprep.subr.mxu0 0.0
    %1792 = vmatpush1.msra.mxu0 0.0
    %1793 = vmatprep.subr.mxu0 0.0
    %1794 = vmatpush1.msra.mxu0 0.0
    %1795 = vmatprep.subr.mxu0 0.0
    %1796 = vmatpush1.msra.mxu0 0.0
    %1797 = vmatprep.mubr.f32.mxu0 0.0
    %1798 = vmatmul.mubr.f32.gmra.mrb[0].mxu0 %v1728
    %v1799 = vpop.f32.mrb[0].mxu0
    %v1800 = vadd.f32 0.0, %v1799
    %v1801 = vpop.f32.mrb[0].mxu0
    %1802 = vmatprep.mubr.f32.mxu0 0.0
    %1803 = vmatmul.mubr.f32.gmra.mrb[0].mxu0 %v1731
    %v1804 = vpop.f32.mrb[0].mxu0
    %v1805 = vadd.f32 0.0, %v1804
    %v1806 = vpop.f32.mrb[0].mxu0
    %1807 = vdwg.mxu0
    %v1808 = vrcp.pop %v1717
    %v1809 = vmul.f32 %v1800, %v1808
    %v1810 = vrcp.pop %v1720
    %v1811 = vmul.f32 %v1805, %v1810
    %1812 = vrot.lane.b32.xlu0 %v1406, 112
    %v1813 = vpop.permute.xlu0 %1812
    %1814 = vrot.lane.b32.xlu0 %v1411, 112
    %v1815 = vpop.permute.xlu0 %1814
    %1816 = vrot.lane.b32.xlu0 %v1406, 80
    %v1817 = vpop.permute.xlu0 %1816
    %1818 = vrot.lane.b32.xlu0 %v1411, 80
    %v1819 = vpop.permute.xlu0 %1818
    %v1820 = vsel %vm136, %v1813, 0
    %v1822 = vsel %vm136, %v1815, 0
    %v1824 = vsel %vm136, %v1817, 0
    %v1826 = vsel %vm136, %v1819, 0
    %1828 = vmatprep.subr.mxu0 0.0
    %1829 = vmatpush1.xpose.msra.mxu0 %v1824
    %1830 = vmatprep.subr.mxu0 0.0
    %1831 = vmatpush1.xpose.msra.mxu0 %v1826
    %1832 = vmatprep.subr.mxu0 0.0
    %1833 = vmatpush1.xpose.msra.mxu0 0.0
    %1834 = vmatprep.subr.mxu0 0.0
    %1835 = vmatpush1.xpose.msra.mxu0 0.0
    %1836 = vmatprep.subr.mxu0 0.0
    %1837 = vmatpush1.xpose.msra.mxu0 0.0
    %1838 = vmatprep.subr.mxu0 0.0
    %1839 = vmatpush1.xpose.msra.mxu0 0.0
    %1840 = vmatprep.subr.mxu0 0.0
    %1841 = vmatpush1.xpose.msra.mxu0 0.0
    %1842 = vmatprep.subr.mxu0 0.0
    %1843 = vmatpush1.xpose.msra.mxu0 0.0
    %1844 = vmatprep.subr.mxu0 0.0
    %1845 = vmatpush1.xpose.msra.mxu0 0.0
    %1846 = vmatprep.subr.mxu0 0.0
    %1847 = vmatpush1.xpose.msra.mxu0 0.0
    %1848 = vmatprep.subr.mxu0 0.0
    %1849 = vmatpush1.xpose.msra.mxu0 0.0
    %1850 = vmatprep.subr.mxu0 0.0
    %1851 = vmatpush1.xpose.msra.mxu0 0.0
    %1852 = vmatprep.subr.mxu0 0.0
    %1853 = vmatpush1.xpose.msra.mxu0 0.0
    %1854 = vmatprep.subr.mxu0 0.0
    %1855 = vmatpush1.xpose.msra.mxu0 0.0
    %1856 = vmatprep.subr.mxu0 0.0
    %1857 = vmatpush1.xpose.msra.mxu0 0.0
    %1858 = vmatprep.subr.mxu0 0.0
    %1859 = vmatpush1.xpose.msra.mxu0 0.0
    %1860 = vmatprep.subr.mxu0 0.0
    %1861 = vmatpush1.xpose.msra.mxu0 0.0
    %1862 = vmatprep.subr.mxu0 0.0
    %1863 = vmatpush1.xpose.msra.mxu0 0.0
    %1864 = vmatprep.subr.mxu0 0.0
    %1865 = vmatpush1.xpose.msra.mxu0 0.0
    %1866 = vmatprep.subr.mxu0 0.0
    %1867 = vmatpush1.xpose.msra.mxu0 0.0
    %1868 = vmatprep.subr.mxu0 0.0
    %1869 = vmatpush1.xpose.msra.mxu0 0.0
    %1870 = vmatprep.subr.mxu0 0.0
    %1871 = vmatpush1.xpose.msra.mxu0 0.0
    %1872 = vmatprep.subr.mxu0 0.0
    %1873 = vmatpush1.xpose.msra.mxu0 0.0
    %1874 = vmatprep.subr.mxu0 0.0
    %1875 = vmatpush1.xpose.msra.mxu0 0.0
    %1876 = vmatprep.subr.mxu0 0.0
    %1877 = vmatpush1.xpose.msra.mxu0 0.0
    %1878 = vmatprep.subr.mxu0 0.0
    %1879 = vmatpush1.xpose.msra.mxu0 0.0
    %1880 = vmatprep.subr.mxu0 0.0
    %1881 = vmatpush1.xpose.msra.mxu0 0.0
    %1882 = vmatprep.subr.mxu0 0.0
    %1883 = vmatpush1.xpose.msra.mxu0 0.0
    %1884 = vmatprep.subr.mxu0 0.0
    %1885 = vmatpush1.xpose.msra.mxu0 0.0
    %1886 = vmatprep.subr.mxu0 0.0
    %1887 = vmatpush1.xpose.msra.mxu0 0.0
    %1888 = vmatprep.subr.mxu0 0.0
    %1889 = vmatpush1.xpose.msra.mxu0 0.0
    %1890 = vmatprep.subr.mxu0 0.0
    %1891 = vmatpush1.xpose.msra.mxu0 0.0
    %1892 = vmatprep.mubr.f32.mxu0 0.0
    %1893 = vmatmul.mubr.f32.gmra.mrb[0].mxu0 %v1820
    %v1894 = vpop.f32.mrb[0].mxu0
    %v1895 = vadd.f32 0.0, %v1894
    %v1896 = vpop.f32.mrb[0].mxu0
    %1897 = vmatprep.mubr.f32.mxu0 0.0
    %1898 = vmatmul.mubr.f32.gmra.mrb[0].mxu0 %v1822
    %v1899 = vpop.f32.mrb[0].mxu0
    %v1900 = vadd.f32 0.0, %v1899
    %v1901 = vpop.f32.mrb[0].mxu0
    %1902 = vdwg.mxu0
    %v1903 = vsel %vm220, %v1895, -inf
    %1904 = vmax.xlane.f32.xlu0 %v1903
    %v1905 = vpop.xlane.xlu0 %1904
    %v1906 = vsel %vm220, %v1900, -inf
    %1907 = vmax.xlane.f32.xlu0 %v1906
    %v1908 = vpop.xlane.xlu0 %1907
    %v1909 = vsub.f32 %v1895, %v1905
    %v1910 = vsub.f32 %v1900, %v1908
    %v1911 = vmul.f32 %v1909, 1.442695
    %v1912 = vpow.pop %v1911
    %v1913 = vmul.f32 %v1910, 1.442695
    %v1914 = vpow.pop %v1913
    %v1915 = vsel %vm220, %v1912, 0.0
    %1916 = vadd.xlane.f32.xlu0 %v1915
    %v1917 = vpop.xlane.xlu0 %1916
    %v1918 = vsel %vm220, %v1914, 0.0
    %1919 = vadd.xlane.f32.xlu0 %v1918
    %v1920 = vpop.xlane.xlu0 %1919
    %1921 = vrot.lane.b32.xlu0 %v1406, 48
    %v1922 = vpop.permute.xlu0 %1921
    %1923 = vrot.lane.b32.xlu0 %v1411, 48
    %v1924 = vpop.permute.xlu0 %1923
    %v1928 = vsel %vm220, %v1912, 0
    %v1931 = vsel %vm220, %v1914, 0
    %1933 = vmatprep.subr.mxu0 0.0
    %1934 = vmatpush1.msra.mxu0 %v1922
    %1935 = vmatprep.subr.mxu0 0.0
    %1936 = vmatpush1.msra.mxu0 %v1924
    %1937 = vmatprep.subr.mxu0 0.0
    %1938 = vmatpush1.msra.mxu0 0.0
    %1939 = vmatprep.subr.mxu0 0.0
    %1940 = vmatpush1.msra.mxu0 0.0
    %1941 = vmatprep.subr.mxu0 0.0
    %1942 = vmatpush1.msra.mxu0 0.0
    %1943 = vmatprep.subr.mxu0 0.0
    %1944 = vmatpush1.msra.mxu0 0.0
    %1945 = vmatprep.subr.mxu0 0.0
    %1946 = vmatpush1.msra.mxu0 0.0
    %1947 = vmatprep.subr.mxu0 0.0
    %1948 = vmatpush1.msra.mxu0 0.0
    %1949 = vmatprep.subr.mxu0 0.0
    %1950 = vmatpush1.msra.mxu0 0.0
    %1951 = vmatprep.subr.mxu0 0.0
    %1952 = vmatpush1.msra.mxu0 0.0
    %1953 = vmatprep.subr.mxu0 0.0
    %1954 = vmatpush1.msra.mxu0 0.0
    %1955 = vmatprep.subr.mxu0 0.0
    %1956 = vmatpush1.msra.mxu0 0.0
    %1957 = vmatprep.subr.mxu0 0.0
    %1958 = vmatpush1.msra.mxu0 0.0
    %1959 = vmatprep.subr.mxu0 0.0
    %1960 = vmatpush1.msra.mxu0 0.0
    %1961 = vmatprep.subr.mxu0 0.0
    %1962 = vmatpush1.msra.mxu0 0.0
    %1963 = vmatprep.subr.mxu0 0.0
    %1964 = vmatpush1.msra.mxu0 0.0
    %1965 = vmatprep.subr.mxu0 0.0
    %1966 = vmatpush1.msra.mxu0 0.0
    %1967 = vmatprep.subr.mxu0 0.0
    %1968 = vmatpush1.msra.mxu0 0.0
    %1969 = vmatprep.subr.mxu0 0.0
    %1970 = vmatpush1.msra.mxu0 0.0
    %1971 = vmatprep.subr.mxu0 0.0
    %1972 = vmatpush1.msra.mxu0 0.0
    %1973 = vmatprep.subr.mxu0 0.0
    %1974 = vmatpush1.msra.mxu0 0.0
    %1975 = vmatprep.subr.mxu0 0.0
    %1976 = vmatpush1.msra.mxu0 0.0
    %1977 = vmatprep.subr.mxu0 0.0
    %1978 = vmatpush1.msra.mxu0 0.0
    %1979 = vmatprep.subr.mxu0 0.0
    %1980 = vmatpush1.msra.mxu0 0.0
    %1981 = vmatprep.subr.mxu0 0.0
    %1982 = vmatpush1.msra.mxu0 0.0
    %1983 = vmatprep.subr.mxu0 0.0
    %1984 = vmatpush1.msra.mxu0 0.0
    %1985 = vmatprep.subr.mxu0 0.0
    %1986 = vmatpush1.msra.mxu0 0.0
    %1987 = vmatprep.subr.mxu0 0.0
    %1988 = vmatpush1.msra.mxu0 0.0
    %1989 = vmatprep.subr.mxu0 0.0
    %1990 = vmatpush1.msra.mxu0 0.0
    %1991 = vmatprep.subr.mxu0 0.0
    %1992 = vmatpush1.msra.mxu0 0.0
    %1993 = vmatprep.subr.mxu0 0.0
    %1994 = vmatpush1.msra.mxu0 0.0
    %1995 = vmatprep.subr.mxu0 0.0
    %1996 = vmatpush1.msra.mxu0 0.0
    %1997 = vmatprep.mubr.f32.mxu0 0.0
    %1998 = vmatmul.mubr.f32.gmra.mrb[0].mxu0 %v1928
    %v1999 = vpop.f32.mrb[0].mxu0
    %v2000 = vadd.f32 0.0, %v1999
    %v2001 = vpop.f32.mrb[0].mxu0
    %2002 = vmatprep.mubr.f32.mxu0 0.0
    %2003 = vmatmul.mubr.f32.gmra.mrb[0].mxu0 %v1931
    %v2004 = vpop.f32.mrb[0].mxu0
    %v2005 = vadd.f32 0.0, %v2004
    %v2006 = vpop.f32.mrb[0].mxu0
    %2007 = vdwg.mxu0
    %v2008 = vrcp.pop %v1917
    %v2009 = vmul.f32 %v2000, %v2008
    %v2010 = vrcp.pop %v1920
    %v2011 = vmul.f32 %v2005, %v2010
    %2012 = vrot.lane.b32.xlu0 %v1406, 104
    %v2013 = vpop.permute.xlu0 %2012
    %2014 = vrot.lane.b32.xlu0 %v1411, 104
    %v2015 = vpop.permute.xlu0 %2014
    %2016 = vrot.lane.b32.xlu0 %v1406, 72
    %v2017 = vpop.permute.xlu0 %2016
    %2018 = vrot.lane.b32.xlu0 %v1411, 72
    %v2019 = vpop.permute.xlu0 %2018
    %v2020 = vsel %vm136, %v2013, 0
    %v2022 = vsel %vm136, %v2015, 0
    %v2024 = vsel %vm136, %v2017, 0
    %v2026 = vsel %vm136, %v2019, 0
    %2028 = vmatprep.subr.mxu0 0.0
    %2029 = vmatpush1.xpose.msra.mxu0 %v2024
    %2030 = vmatprep.subr.mxu0 0.0
    %2031 = vmatpush1.xpose.msra.mxu0 %v2026
    %2032 = vmatprep.subr.mxu0 0.0
    %2033 = vmatpush1.xpose.msra.mxu0 0.0
    %2034 = vmatprep.subr.mxu0 0.0
    %2035 = vmatpush1.xpose.msra.mxu0 0.0
    %2036 = vmatprep.subr.mxu0 0.0
    %2037 = vmatpush1.xpose.msra.mxu0 0.0
    %2038 = vmatprep.subr.mxu0 0.0
    %2039 = vmatpush1.xpose.msra.mxu0 0.0
    %2040 = vmatprep.subr.mxu0 0.0
    %2041 = vmatpush1.xpose.msra.mxu0 0.0
    %2042 = vmatprep.subr.mxu0 0.0
    %2043 = vmatpush1.xpose.msra.mxu0 0.0
    %2044 = vmatprep.subr.mxu0 0.0
    %2045 = vmatpush1.xpose.msra.mxu0 0.0
    %2046 = vmatprep.subr.mxu0 0.0
    %2047 = vmatpush1.xpose.msra.mxu0 0.0
    %2048 = vmatprep.subr.mxu0 0.0
    %2049 = vmatpush1.xpose.msra.mxu0 0.0
    %2050 = vmatprep.subr.mxu0 0.0
    %2051 = vmatpush1.xpose.msra.mxu0 0.0
    %2052 = vmatprep.subr.mxu0 0.0
    %2053 = vmatpush1.xpose.msra.mxu0 0.0
    %2054 = vmatprep.subr.mxu0 0.0
    %2055 = vmatpush1.xpose.msra.mxu0 0.0
    %2056 = vmatprep.subr.mxu0 0.0
    %2057 = vmatpush1.xpose.msra.mxu0 0.0
    %2058 = vmatprep.subr.mxu0 0.0
    %2059 = vmatpush1.xpose.msra.mxu0 0.0
    %2060 = vmatprep.subr.mxu0 0.0
    %2061 = vmatpush1.xpose.msra.mxu0 0.0
    %2062 = vmatprep.subr.mxu0 0.0
    %2063 = vmatpush1.xpose.msra.mxu0 0.0
    %2064 = vmatprep.subr.mxu0 0.0
    %2065 = vmatpush1.xpose.msra.mxu0 0.0
    %2066 = vmatprep.subr.mxu0 0.0
    %2067 = vmatpush1.xpose.msra.mxu0 0.0
    %2068 = vmatprep.subr.mxu0 0.0
    %2069 = vmatpush1.xpose.msra.mxu0 0.0
    %2070 = vmatprep.subr.mxu0 0.0
    %2071 = vmatpush1.xpose.msra.mxu0 0.0
    %2072 = vmatprep.subr.mxu0 0.0
    %2073 = vmatpush1.xpose.msra.mxu0 0.0
    %2074 = vmatprep.subr.mxu0 0.0
    %2075 = vmatpush1.xpose.msra.mxu0 0.0
    %2076 = vmatprep.subr.mxu0 0.0
    %2077 = vmatpush1.xpose.msra.mxu0 0.0
    %2078 = vmatprep.subr.mxu0 0.0
    %2079 = vmatpush1.xpose.msra.mxu0 0.0
    %2080 = vmatprep.subr.mxu0 0.0
    %2081 = vmatpush1.xpose.msra.mxu0 0.0
    %2082 = vmatprep.subr.mxu0 0.0
    %2083 = vmatpush1.xpose.msra.mxu0 0.0
    %2084 = vmatprep.subr.mxu0 0.0
    %2085 = vmatpush1.xpose.msra.mxu0 0.0
    %2086 = vmatprep.subr.mxu0 0.0
    %2087 = vmatpush1.xpose.msra.mxu0 0.0
    %2088 = vmatprep.subr.mxu0 0.0
    %2089 = vmatpush1.xpose.msra.mxu0 0.0
    %2090 = vmatprep.subr.mxu0 0.0
    %2091 = vmatpush1.xpose.msra.mxu0 0.0
    %2092 = vmatprep.mubr.f32.mxu0 0.0
    %2093 = vmatmul.mubr.f32.gmra.mrb[0].mxu0 %v2020
    %v2094 = vpop.f32.mrb[0].mxu0
    %v2095 = vadd.f32 0.0, %v2094
    %v2096 = vpop.f32.mrb[0].mxu0
    %2097 = vmatprep.mubr.f32.mxu0 0.0
    %2098 = vmatmul.mubr.f32.gmra.mrb[0].mxu0 %v2022
    %v2099 = vpop.f32.mrb[0].mxu0
    %v2100 = vadd.f32 0.0, %v2099
    %v2101 = vpop.f32.mrb[0].mxu0
    %2102 = vdwg.mxu0
    %v2103 = vsel %vm220, %v2095, -inf
    %2104 = vmax.xlane.f32.xlu0 %v2103
    %v2105 = vpop.xlane.xlu0 %2104
    %v2106 = vsel %vm220, %v2100, -inf
    %2107 = vmax.xlane.f32.xlu0 %v2106
    %v2108 = vpop.xlane.xlu0 %2107
    %v2109 = vsub.f32 %v2095, %v2105
    %v2110 = vsub.f32 %v2100, %v2108
    %v2111 = vmul.f32 %v2109, 1.442695
    %v2112 = vpow.pop %v2111
    %v2113 = vmul.f32 %v2110, 1.442695
    %v2114 = vpow.pop %v2113
    %v2115 = vsel %vm220, %v2112, 0.0
    %2116 = vadd.xlane.f32.xlu0 %v2115
    %v2117 = vpop.xlane.xlu0 %2116
    %v2118 = vsel %vm220, %v2114, 0.0
    %2119 = vadd.xlane.f32.xlu0 %v2118
    %v2120 = vpop.xlane.xlu0 %2119
    %2121 = vrot.lane.b32.xlu0 %v1406, 40
    %v2122 = vpop.permute.xlu0 %2121
    %2123 = vrot.lane.b32.xlu0 %v1411, 40
    %v2124 = vpop.permute.xlu0 %2123
    %v2128 = vsel %vm220, %v2112, 0
    %v2131 = vsel %vm220, %v2114, 0
    %2133 = vmatprep.subr.mxu0 0.0
    %2134 = vmatpush1.msra.mxu0 %v2122
    %2135 = vmatprep.subr.mxu0 0.0
    %2136 = vmatpush1.msra.mxu0 %v2124
    %2137 = vmatprep.subr.mxu0 0.0
    %2138 = vmatpush1.msra.mxu0 0.0
    %2139 = vmatprep.subr.mxu0 0.0
    %2140 = vmatpush1.msra.mxu0 0.0
    %2141 = vmatprep.subr.mxu0 0.0
    %2142 = vmatpush1.msra.mxu0 0.0
    %2143 = vmatprep.subr.mxu0 0.0
    %2144 = vmatpush1.msra.mxu0 0.0
    %2145 = vmatprep.subr.mxu0 0.0
    %2146 = vmatpush1.msra.mxu0 0.0
    %2147 = vmatprep.subr.mxu0 0.0
    %2148 = vmatpush1.msra.mxu0 0.0
    %2149 = vmatprep.subr.mxu0 0.0
    %2150 = vmatpush1.msra.mxu0 0.0
    %2151 = vmatprep.subr.mxu0 0.0
    %2152 = vmatpush1.msra.mxu0 0.0
    %2153 = vmatprep.subr.mxu0 0.0
    %2154 = vmatpush1.msra.mxu0 0.0
    %2155 = vmatprep.subr.mxu0 0.0
    %2156 = vmatpush1.msra.mxu0 0.0
    %2157 = vmatprep.subr.mxu0 0.0
    %2158 = vmatpush1.msra.mxu0 0.0
    %2159 = vmatprep.subr.mxu0 0.0
    %2160 = vmatpush1.msra.mxu0 0.0
    %2161 = vmatprep.subr.mxu0 0.0
    %2162 = vmatpush1.msra.mxu0 0.0
    %2163 = vmatprep.subr.mxu0 0.0
    %2164 = vmatpush1.msra.mxu0 0.0
    %2165 = vmatprep.subr.mxu0 0.0
    %2166 = vmatpush1.msra.mxu0 0.0
    %2167 = vmatprep.subr.mxu0 0.0
    %2168 = vmatpush1.msra.mxu0 0.0
    %2169 = vmatprep.subr.mxu0 0.0
    %2170 = vmatpush1.msra.mxu0 0.0
    %2171 = vmatprep.subr.mxu0 0.0
    %2172 = vmatpush1.msra.mxu0 0.0
    %2173 = vmatprep.subr.mxu0 0.0
    %2174 = vmatpush1.msra.mxu0 0.0
    %2175 = vmatprep.subr.mxu0 0.0
    %2176 = vmatpush1.msra.mxu0 0.0
    %2177 = vmatprep.subr.mxu0 0.0
    %2178 = vmatpush1.msra.mxu0 0.0
    %2179 = vmatprep.subr.mxu0 0.0
    %2180 = vmatpush1.msra.mxu0 0.0
    %2181 = vmatprep.subr.mxu0 0.0
    %2182 = vmatpush1.msra.mxu0 0.0
    %2183 = vmatprep.subr.mxu0 0.0
    %2184 = vmatpush1.msra.mxu0 0.0
    %2185 = vmatprep.subr.mxu0 0.0
    %2186 = vmatpush1.msra.mxu0 0.0
    %2187 = vmatprep.subr.mxu0 0.0
    %2188 = vmatpush1.msra.mxu0 0.0
    %2189 = vmatprep.subr.mxu0 0.0
    %2190 = vmatpush1.msra.mxu0 0.0
    %2191 = vmatprep.subr.mxu0 0.0
    %2192 = vmatpush1.msra.mxu0 0.0
    %2193 = vmatprep.subr.mxu0 0.0
    %2194 = vmatpush1.msra.mxu0 0.0
    %2195 = vmatprep.subr.mxu0 0.0
    %2196 = vmatpush1.msra.mxu0 0.0
    %2197 = vmatprep.mubr.f32.mxu0 0.0
    %2198 = vmatmul.mubr.f32.gmra.mrb[0].mxu0 %v2128
    %v2199 = vpop.f32.mrb[0].mxu0
    %v2200 = vadd.f32 0.0, %v2199
    %v2201 = vpop.f32.mrb[0].mxu0
    %2202 = vmatprep.mubr.f32.mxu0 0.0
    %2203 = vmatmul.mubr.f32.gmra.mrb[0].mxu0 %v2131
    %v2204 = vpop.f32.mrb[0].mxu0
    %v2205 = vadd.f32 0.0, %v2204
    %v2206 = vpop.f32.mrb[0].mxu0
    %2207 = vdwg.mxu0
    %v2208 = vrcp.pop %v2117
    %v2209 = vmul.f32 %v2200, %v2208
    %v2210 = vrcp.pop %v2120
    %v2211 = vmul.f32 %v2205, %v2210
    %2214 = vrot.lane.b32.xlu0 %v1809, 8
    %v2215 = vpop.permute.xlu0 %2214
    %2216 = vrot.lane.b32.xlu0 %v1811, 8
    %v2217 = vpop.permute.xlu0 %2216
    %2222 = vrot.lane.b32.xlu0 %v2009, 16
    %v2223 = vpop.permute.xlu0 %2222
    %2224 = vrot.lane.b32.xlu0 %v2011, 16
    %v2225 = vpop.permute.xlu0 %2224
    %2230 = vrot.lane.b32.xlu0 %v2209, 24
    %v2231 = vpop.permute.xlu0 %2230
    %2232 = vrot.lane.b32.xlu0 %v2211, 24
    %v2233 = vpop.permute.xlu0 %2232
    %v2236 = vsel %vm136, %v1609, %v2215
    %v2237 = vsel %vm136, %v1611, %v2217
    %v2238 = vsel %vm220, %v2236, %v2223
    %v2239 = vsel %vm220, %v2237, %v2225
    %v2240 = vsel %vm958, %v2238, %v2231
    %v2241 = vsel %vm958, %v2239, %v2233
    %v2242 = vlaneseq
    %v2243 = vshrl.u32 %v2242, 7
    %v2244 = vsub.s32 1, %v2243
    %v2245 = vrot.slane %v1328, %v2244
    %v2247 = vsel %vm48, %v2240, 0
    %v2250 = vsel %vm48, %v2241, 0
    %2252 = vmatprep.subr.mxu0 0.0
    %2253 = vmatpush1.msra.mxu0 %v1316
    %2254 = vmatprep.subr.mxu0 0.0
    %2255 = vmatpush1.msra.mxu0 %v1317
    %2256 = vmatprep.subr.mxu0 0.0
    %2257 = vmatpush1.msra.mxu0 %v1318
    %2258 = vmatprep.subr.mxu0 0.0
    %2259 = vmatpush1.msra.mxu0 %v1319
    %2260 = vmatprep.subr.mxu0 0.0
    %2261 = vmatpush1.msra.mxu0 0.0
    %2262 = vmatprep.subr.mxu0 0.0
    %2263 = vmatpush1.msra.mxu0 0.0
    %2264 = vmatprep.subr.mxu0 0.0
    %2265 = vmatpush1.msra.mxu0 0.0
    %2266 = vmatprep.subr.mxu0 0.0
    %2267 = vmatpush1.msra.mxu0 0.0
    %2268 = vmatprep.subr.mxu0 0.0
    %2269 = vmatpush1.msra.mxu0 0.0
    %2270 = vmatprep.subr.mxu0 0.0
    %2271 = vmatpush1.msra.mxu0 0.0
    %2272 = vmatprep.subr.mxu0 0.0
    %2273 = vmatpush1.msra.mxu0 0.0
    %2274 = vmatprep.subr.mxu0 0.0
    %2275 = vmatpush1.msra.mxu0 0.0
    %2276 = vmatprep.subr.mxu0 0.0
    %2277 = vmatpush1.msra.mxu0 0.0
    %2278 = vmatprep.subr.mxu0 0.0
    %2279 = vmatpush1.msra.mxu0 0.0
    %2280 = vmatprep.subr.mxu0 0.0
    %2281 = vmatpush1.msra.mxu0 0.0
    %2282 = vmatprep.subr.mxu0 0.0
    %2283 = vmatpush1.msra.mxu0 0.0
    %2284 = vmatprep.subr.mxu0 0.0
    %2285 = vmatpush1.msra.mxu0 0.0
    %2286 = vmatprep.subr.mxu0 0.0
    %2287 = vmatpush1.msra.mxu0 0.0
    %2288 = vmatprep.subr.mxu0 0.0
    %2289 = vmatpush1.msra.mxu0 0.0
    %2290 = vmatprep.subr.mxu0 0.0
    %2291 = vmatpush1.msra.mxu0 0.0
    %2292 = vmatprep.subr.mxu0 0.0
    %2293 = vmatpush1.msra.mxu0 0.0
    %2294 = vmatprep.subr.mxu0 0.0
    %2295 = vmatpush1.msra.mxu0 0.0
    %2296 = vmatprep.subr.mxu0 0.0
    %2297 = vmatpush1.msra.mxu0 0.0
    %2298 = vmatprep.subr.mxu0 0.0
    %2299 = vmatpush1.msra.mxu0 0.0
    %2300 = vmatprep.subr.mxu0 0.0
    %2301 = vmatpush1.msra.mxu0 0.0
    %2302 = vmatprep.subr.mxu0 0.0
    %2303 = vmatpush1.msra.mxu0 0.0
    %2304 = vmatprep.subr.mxu0 0.0
    %2305 = vmatpush1.msra.mxu0 0.0
    %2306 = vmatprep.subr.mxu0 0.0
    %2307 = vmatpush1.msra.mxu0 0.0
    %2308 = vmatprep.subr.mxu0 0.0
    %2309 = vmatpush1.msra.mxu0 0.0
    %2310 = vmatprep.subr.mxu0 0.0
    %2311 = vmatpush1.msra.mxu0 0.0
    %2312 = vmatprep.subr.mxu0 0.0
    %2313 = vmatpush1.msra.mxu0 0.0
    %2314 = vmatprep.subr.mxu0 0.0
    %2315 = vmatpush1.msra.mxu0 0.0
    %2316 = vmatprep.mubr.f32.mxu0 0.0
    %2317 = vmatmul.mubr.f32.gmra.mrb[0].mxu0 %v2247
    %v2318 = vpop.f32.mrb[0].mxu0
    %v2319 = vadd.f32 %v2245, %v2318
    %v2320 = vpop.f32.mrb[0].mxu0
    %2321 = vmatprep.mubr.f32.mxu0 0.0
    %2322 = vmatmul.mubr.f32.gmra.mrb[0].mxu0 %v2250
    %v2323 = vpop.f32.mrb[0].mxu0
    %v2324 = vadd.f32 %v2245, %v2323
    %v2325 = vpop.f32.mrb[0].mxu0
    %2326 = vdwg.mxu0
    %v2327 = vadd.f32 %v1306, %v2319
    %v2328 = vadd.f32 %v1307, %v2324
    %v2329 = vsel %vm48, %v2327, 0.0
    %2330 = vadd.xlane.f32.xlu0 %v2329
    %v2331 = vpop.xlane.xlu0 %2330
    %v2332 = vsel %vm48, %v2328, 0.0
    %2333 = vadd.xlane.f32.xlu0 %v2332
    %v2334 = vpop.xlane.xlu0 %2333
    %v2335 = vmul.f32 %v2331, %v1054
    %v2336 = vmul.f32 %v2334, %v1054
    %v2337 = vmul.f32 %v2327, %v2327
    %v2338 = vmul.f32 %v2328, %v2328
    %v2339 = vsel %vm48, %v2337, 0.0
    %2340 = vadd.xlane.f32.xlu0 %v2339
    %v2341 = vpop.xlane.xlu0 %2340
    %v2342 = vsel %vm48, %v2338, 0.0
    %2343 = vadd.xlane.f32.xlu0 %v2342
    %v2344 = vpop.xlane.xlu0 %2343
    %v2345 = vmul.f32 %v2341, %v1054
    %v2346 = vmul.f32 %v2344, %v1054
    %v2347 = vmul.f32 %v2335, %v2335
    %v2348 = vmul.f32 %v2336, %v2336
    %v2349 = vsub.f32 %v2345, %v2347
    %v2350 = vsub.f32 %v2346, %v2348
    %v2351 = vsub.f32 %v2327, %v2335
    %v2352 = vsub.f32 %v2328, %v2336
    %v2353 = vadd.f32 %v2349, 1e-05
    %v2354 = vadd.f32 %v2350, 1e-05
    %v2355 = vrsqrt.pop %v2353
    %v2356 = vrsqrt.pop %v2354
    %v2357 = vmul.f32 %v2351, %v2355
    %v2358 = vmul.f32 %v2352, %v2356
    %v2359 = vlaneseq
    %v2360 = vshrl.u32 %v2359, 7
    %v2361 = vsub.s32 4, %v2360
    %v2362 = vrot.slane %v1328, %v2361
    %v2363 = vmul.f32 %v2357, %v2362
    %v2364 = vmul.f32 %v2358, %v2362
    %v2365 = vlaneseq
    %v2366 = vshrl.u32 %v2365, 7
    %v2367 = vsub.s32 5, %v2366
    %v2368 = vrot.slane %v1328, %v2367
    %v2369 = vadd.f32 %v2363, %v2368
    %v2370 = vadd.f32 %v2364, %v2368
    %v2371 = vlaneseq
    %v2372 = vshrl.u32 %v2371, 7
    %v2373 = vsub.s32 2, %v2372
    %v2374 = vrot.slane %v1328, %v2373
    %v2376 = vsel %vm48, %v2369, 0
    %v2379 = vsel %vm48, %v2370, 0
    %2381 = vmatprep.subr.mxu0 0.0
    %2382 = vmatpush1.msra.mxu0 %v1312
    %2383 = vmatprep.subr.mxu0 0.0
    %2384 = vmatpush1.msra.mxu0 %v1313
    %2385 = vmatprep.subr.mxu0 0.0
    %2386 = vmatpush1.msra.mxu0 %v1314
    %2387 = vmatprep.subr.mxu0 0.0
    %2388 = vmatpush1.msra.mxu0 %v1315
    %2389 = vmatprep.subr.mxu0 0.0
    %2390 = vmatpush1.msra.mxu0 0.0
    %2391 = vmatprep.subr.mxu0 0.0
    %2392 = vmatpush1.msra.mxu0 0.0
    %2393 = vmatprep.subr.mxu0 0.0
    %2394 = vmatpush1.msra.mxu0 0.0
    %2395 = vmatprep.subr.mxu0 0.0
    %2396 = vmatpush1.msra.mxu0 0.0
    %2397 = vmatprep.subr.mxu0 0.0
    %2398 = vmatpush1.msra.mxu0 0.0
    %2399 = vmatprep.subr.mxu0 0.0
    %2400 = vmatpush1.msra.mxu0 0.0
    %2401 = vmatprep.subr.mxu0 0.0
    %2402 = vmatpush1.msra.mxu0 0.0
    %2403 = vmatprep.subr.mxu0 0.0
    %2404 = vmatpush1.msra.mxu0 0.0
    %2405 = vmatprep.subr.mxu0 0.0
    %2406 = vmatpush1.msra.mxu0 0.0
    %2407 = vmatprep.subr.mxu0 0.0
    %2408 = vmatpush1.msra.mxu0 0.0
    %2409 = vmatprep.subr.mxu0 0.0
    %2410 = vmatpush1.msra.mxu0 0.0
    %2411 = vmatprep.subr.mxu0 0.0
    %2412 = vmatpush1.msra.mxu0 0.0
    %2413 = vmatprep.subr.mxu0 0.0
    %2414 = vmatpush1.msra.mxu0 0.0
    %2415 = vmatprep.subr.mxu0 0.0
    %2416 = vmatpush1.msra.mxu0 0.0
    %2417 = vmatprep.subr.mxu0 0.0
    %2418 = vmatpush1.msra.mxu0 0.0
    %2419 = vmatprep.subr.mxu0 0.0
    %2420 = vmatpush1.msra.mxu0 0.0
    %2421 = vmatprep.subr.mxu0 0.0
    %2422 = vmatpush1.msra.mxu0 0.0
    %2423 = vmatprep.subr.mxu0 0.0
    %2424 = vmatpush1.msra.mxu0 0.0
    %2425 = vmatprep.subr.mxu0 0.0
    %2426 = vmatpush1.msra.mxu0 0.0
    %2427 = vmatprep.subr.mxu0 0.0
    %2428 = vmatpush1.msra.mxu0 0.0
    %2429 = vmatprep.subr.mxu0 0.0
    %2430 = vmatpush1.msra.mxu0 0.0
    %2431 = vmatprep.subr.mxu0 0.0
    %2432 = vmatpush1.msra.mxu0 0.0
    %2433 = vmatprep.subr.mxu0 0.0
    %2434 = vmatpush1.msra.mxu0 0.0
    %2435 = vmatprep.subr.mxu0 0.0
    %2436 = vmatpush1.msra.mxu0 0.0
    %2437 = vmatprep.subr.mxu0 0.0
    %2438 = vmatpush1.msra.mxu0 0.0
    %2439 = vmatprep.subr.mxu0 0.0
    %2440 = vmatpush1.msra.mxu0 0.0
    %2441 = vmatprep.subr.mxu0 0.0
    %2442 = vmatpush1.msra.mxu0 0.0
    %2443 = vmatprep.subr.mxu0 0.0
    %2444 = vmatpush1.msra.mxu0 0.0
    %2445 = vmatprep.mubr.f32.mxu0 0.0
    %2446 = vmatmul.mubr.f32.gmra.mrb[0].mxu0 %v2376
    %v2447 = vpop.f32.mrb[0].mxu0
    %v2448 = vadd.f32 %v2374, %v2447
    %v2449 = vpop.f32.mrb[0].mxu0
    %2450 = vmatprep.mubr.f32.mxu0 0.0
    %2451 = vmatmul.mubr.f32.gmra.mrb[0].mxu0 %v2379
    %v2452 = vpop.f32.mrb[0].mxu0
    %v2453 = vadd.f32 %v2374, %v2452
    %v2454 = vpop.f32.mrb[0].mxu0
    %2455 = vdwg.mxu0
    %v2456 = vmax.f32 %v2448, 0.0
    %v2457 = vmax.f32 %v2453, 0.0
    %v2458 = vlaneseq
    %v2459 = vshrl.u32 %v2458, 7
    %v2460 = vsub.s32 3, %v2459
    %v2461 = vrot.slane %v1328, %v2460
    %v2463 = vsel %vm1182, %v2456, 0
    %v2466 = vsel %vm1182, %v2457, 0
    %2468 = vmatprep.subr.mxu0 0.0
    %2469 = vmatpush1.msra.mxu0 %v1320
    %2470 = vmatprep.subr.mxu0 0.0
    %2471 = vmatpush1.msra.mxu0 %v1321
    %2472 = vmatprep.subr.mxu0 0.0
    %2473 = vmatpush1.msra.mxu0 %v1322
    %2474 = vmatprep.subr.mxu0 0.0
    %2475 = vmatpush1.msra.mxu0 %v1323
    %2476 = vmatprep.subr.mxu0 0.0
    %2477 = vmatpush1.msra.mxu0 %v1324
    %2478 = vmatprep.subr.mxu0 0.0
    %2479 = vmatpush1.msra.mxu0 %v1325
    %2480 = vmatprep.subr.mxu0 0.0
    %2481 = vmatpush1.msra.mxu0 %v1326
    %2482 = vmatprep.subr.mxu0 0.0
    %2483 = vmatpush1.msra.mxu0 %v1327
    %2484 = vmatprep.subr.mxu0 0.0
    %2485 = vmatpush1.msra.mxu0 0.0
    %2486 = vmatprep.subr.mxu0 0.0
    %2487 = vmatpush1.msra.mxu0 0.0
    %2488 = vmatprep.subr.mxu0 0.0
    %2489 = vmatpush1.msra.mxu0 0.0
    %2490 = vmatprep.subr.mxu0 0.0
    %2491 = vmatpush1.msra.mxu0 0.0
    %2492 = vmatprep.subr.mxu0 0.0
    %2493 = vmatpush1.msra.mxu0 0.0
    %2494 = vmatprep.subr.mxu0 0.0
    %2495 = vmatpush1.msra.mxu0 0.0
    %2496 = vmatprep.subr.mxu0 0.0
    %2497 = vmatpush1.msra.mxu0 0.0
    %2498 = vmatprep.subr.mxu0 0.0
    %2499 = vmatpush1.msra.mxu0 0.0
    %2500 = vmatprep.subr.mxu0 0.0
    %2501 = vmatpush1.msra.mxu0 0.0
    %2502 = vmatprep.subr.mxu0 0.0
    %2503 = vmatpush1.msra.mxu0 0.0
    %2504 = vmatprep.subr.mxu0 0.0
    %2505 = vmatpush1.msra.mxu0 0.0
    %2506 = vmatprep.subr.mxu0 0.0
    %2507 = vmatpush1.msra.mxu0 0.0
    %2508 = vmatprep.subr.mxu0 0.0
    %2509 = vmatpush1.msra.mxu0 0.0
    %2510 = vmatprep.subr.mxu0 0.0
    %2511 = vmatpush1.msra.mxu0 0.0
    %2512 = vmatprep.subr.mxu0 0.0
    %2513 = vmatpush1.msra.mxu0 0.0
    %2514 = vmatprep.subr.mxu0 0.0
    %2515 = vmatpush1.msra.mxu0 0.0
    %2516 = vmatprep.subr.mxu0 0.0
    %2517 = vmatpush1.msra.mxu0 0.0
    %2518 = vmatprep.subr.mxu0 0.0
    %2519 = vmatpush1.msra.mxu0 0.0
    %2520 = vmatprep.subr.mxu0 0.0
    %2521 = vmatpush1.msra.mxu0 0.0
    %2522 = vmatprep.subr.mxu0 0.0
    %2523 = vmatpush1.msra.mxu0 0.0
    %2524 = vmatprep.subr.mxu0 0.0
    %2525 = vmatpush1.msra.mxu0 0.0
    %2526 = vmatprep.subr.mxu0 0.0
    %2527 = vmatpush1.msra.mxu0 0.0
    %2528 = vmatprep.subr.mxu0 0.0
    %2529 = vmatpush1.msra.mxu0 0.0
    %2530 = vmatprep.subr.mxu0 0.0
    %2531 = vmatpush1.msra.mxu0 0.0
    %2532 = vmatprep.mubr.f32.mxu0 0.0
    %2533 = vmatmul.mubr.f32.gmra.mrb[0].mxu0 %v2463
    %v2534 = vpop.f32.mrb[0].mxu0
    %v2535 = vadd.f32 %v2461, %v2534
    %v2536 = vpop.f32.mrb[0].mxu0
    %2537 = vmatprep.mubr.f32.mxu0 0.0
    %2538 = vmatmul.mubr.f32.gmra.mrb[0].mxu0 %v2466
    %v2539 = vpop.f32.mrb[0].mxu0
    %v2540 = vadd.f32 %v2461, %v2539
    %v2541 = vpop.f32.mrb[0].mxu0
    %2542 = vdwg.mxu0
    %v2543 = vadd.f32 %v2369, %v2535
    %v2544 = vadd.f32 %v2370, %v2540
    %v2545 = vsel %vm48, %v2543, 0.0
    %2546 = vadd.xlane.f32.xlu0 %v2545
    %v2547 = vpop.xlane.xlu0 %2546
    %v2548 = vsel %vm48, %v2544, 0.0
    %2549 = vadd.xlane.f32.xlu0 %v2548
    %v2550 = vpop.xlane.xlu0 %2549
    %v2551 = vmul.f32 %v2547, %v1054
    %v2552 = vmul.f32 %v2550, %v1054
    %v2553 = vmul.f32 %v2543, %v2543
    %v2554 = vmul.f32 %v2544, %v2544
    %v2555 = vsel %vm48, %v2553, 0.0
    %2556 = vadd.xlane.f32.xlu0 %v2555
    %v2557 = vpop.xlane.xlu0 %2556
    %v2558 = vsel %vm48, %v2554, 0.0
    %2559 = vadd.xlane.f32.xlu0 %v2558
    %v2560 = vpop.xlane.xlu0 %2559
    %v2561 = vmul.f32 %v2557, %v1054
    %v2562 = vmul.f32 %v2560, %v1054
    %v2563 = vmul.f32 %v2551, %v2551
    %v2564 = vmul.f32 %v2552, %v2552
    %v2565 = vsub.f32 %v2561, %v2563
    %v2566 = vsub.f32 %v2562, %v2564
    %v2567 = vsub.f32 %v2543, %v2551
    %v2568 = vsub.f32 %v2544, %v2552
    %v2569 = vadd.f32 %v2565, 1e-05
    %v2570 = vadd.f32 %v2566, 1e-05
    %v2571 = vrsqrt.pop %v2569
    %v2572 = vrsqrt.pop %v2570
    %v2573 = vmul.f32 %v2567, %v2571
    %v2574 = vmul.f32 %v2568, %v2572
    %v2575 = vlaneseq
    %v2576 = vshrl.u32 %v2575, 7
    %v2577 = vsub.s32 6, %v2576
    %v2578 = vrot.slane %v1328, %v2577
    %v2579 = vmul.f32 %v2573, %v2578
    %v2580 = vmul.f32 %v2574, %v2578
    %v2581 = vlaneseq
    %v2582 = vshrl.u32 %v2581, 7
    %v2583 = vsub.s32 7, %v2582
    %v2584 = vrot.slane %v1328, %v2583
    %v2585 = vadd.f32 %v2579, %v2584
    %v2586 = vadd.f32 %v2580, %v2584
    %v2587 = vld [vmem:[%s3 + $0xc0] sm:$0xff]
    %v2588 = vld [vmem:[%s3 + $0xc8] sm:$0xff]
    %v2589 = vld [vmem:[%s3 + $0xd0] sm:$0xff]
    %v2590 = vld [vmem:[%s3 + $0xd8] sm:$0xff]
    %v2591 = vld [vmem:[%s3 + $0xe0] sm:$0xff]
    %v2592 = vld [vmem:[%s3 + $0xe8] sm:$0xff]
    %v2593 = vld [vmem:[%s3 + $0xf0] sm:$0xff]
    %v2594 = vld [vmem:[%s3 + $0xf8] sm:$0xff]
    %v2595 = vld [vmem:[%s4 + $0x10] sm:$0x3]
    %v2596 = vlaneseq
    %v2597 = vshrl.u32 %v2596, 7
    %v2598 = vsub.s32 0, %v2597
    %v2599 = vrot.slane %v2595, %v2598
    %v2601 = vsel %vm48, %v2585, 0
    %v2604 = vsel %vm48, %v2586, 0
    %2606 = vmatprep.subr.mxu0 0.0
    %2607 = vmatpush1.msra.mxu0 %v2587
    %2608 = vmatprep.subr.mxu0 0.0
    %2609 = vmatpush1.msra.mxu0 %v2588
    %2610 = vmatprep.subr.mxu0 0.0
    %2611 = vmatpush1.msra.mxu0 %v2589
    %2612 = vmatprep.subr.mxu0 0.0
    %2613 = vmatpush1.msra.mxu0 %v2590
    %2614 = vmatprep.subr.mxu0 0.0
    %2615 = vmatpush1.msra.mxu0 0.0
    %2616 = vmatprep.subr.mxu0 0.0
    %2617 = vmatpush1.msra.mxu0 0.0
    %2618 = vmatprep.subr.mxu0 0.0
    %2619 = vmatpush1.msra.mxu0 0.0
    %2620 = vmatprep.subr.mxu0 0.0
    %2621 = vmatpush1.msra.mxu0 0.0
    %2622 = vmatprep.subr.mxu0 0.0
    %2623 = vmatpush1.msra.mxu0 0.0
    %2624 = vmatprep.subr.mxu0 0.0
    %2625 = vmatpush1.msra.mxu0 0.0
    %2626 = vmatprep.subr.mxu0 0.0
    %2627 = vmatpush1.msra.mxu0 0.0
    %2628 = vmatprep.subr.mxu0 0.0
    %2629 = vmatpush1.msra.mxu0 0.0
    %2630 = vmatprep.subr.mxu0 0.0
    %2631 = vmatpush1.msra.mxu0 0.0
    %2632 = vmatprep.subr.mxu0 0.0
    %2633 = vmatpush1.msra.mxu0 0.0
    %2634 = vmatprep.subr.mxu0 0.0
    %2635 = vmatpush1.msra.mxu0 0.0
    %2636 = vmatprep.subr.mxu0 0.0
    %2637 = vmatpush1.msra.mxu0 0.0
    %2638 = vmatprep.subr.mxu0 0.0
    %2639 = vmatpush1.msra.mxu0 0.0
    %2640 = vmatprep.subr.mxu0 0.0
    %2641 = vmatpush1.msra.mxu0 0.0
    %2642 = vmatprep.subr.mxu0 0.0
    %2643 = vmatpush1.msra.mxu0 0.0
    %2644 = vmatprep.subr.mxu0 0.0
    %2645 = vmatpush1.msra.mxu0 0.0
    %2646 = vmatprep.subr.mxu0 0.0
    %2647 = vmatpush1.msra.mxu0 0.0
    %2648 = vmatprep.subr.mxu0 0.0
    %2649 = vmatpush1.msra.mxu0 0.0
    %2650 = vmatprep.subr.mxu0 0.0
    %2651 = vmatpush1.msra.mxu0 0.0
    %2652 = vmatprep.subr.mxu0 0.0
    %2653 = vmatpush1.msra.mxu0 0.0
    %2654 = vmatprep.subr.mxu0 0.0
    %2655 = vmatpush1.msra.mxu0 0.0
    %2656 = vmatprep.subr.mxu0 0.0
    %2657 = vmatpush1.msra.mxu0 0.0
    %2658 = vmatprep.subr.mxu0 0.0
    %2659 = vmatpush1.msra.mxu0 0.0
    %2660 = vmatprep.subr.mxu0 0.0
    %2661 = vmatpush1.msra.mxu0 0.0
    %2662 = vmatprep.subr.mxu0 0.0
    %2663 = vmatpush1.msra.mxu0 0.0
    %2664 = vmatprep.subr.mxu0 0.0
    %2665 = vmatpush1.msra.mxu0 0.0
    %2666 = vmatprep.subr.mxu0 0.0
    %2667 = vmatpush1.msra.mxu0 0.0
    %2668 = vmatprep.subr.mxu0 0.0
    %2669 = vmatpush1.msra.mxu0 0.0
    %2670 = vmatprep.mubr.f32.mxu0 0.0
    %2671 = vmatmul.mubr.f32.gmra.mrb[0].mxu0 %v2601
    %v2672 = vpop.f32.mrb[0].mxu0
    %v2673 = vadd.f32 %v2599, %v2672
    %v2674 = vpop.f32.mrb[0].mxu0
    %2675 = vmatprep.mubr.f32.mxu0 0.0
    %2676 = vmatmul.mubr.f32.gmra.mrb[0].mxu0 %v2604
    %v2677 = vpop.f32.mrb[0].mxu0
    %v2678 = vadd.f32 %v2599, %v2677
    %v2679 = vpop.f32.mrb[0].mxu0
    %2680 = vdwg.mxu0
    %v2681 = vxor.u32 %v2673, 2147483648
    %v2682 = vxor.u32 %v2678, 2147483648
    %v2683 = vmul.f32 %v2681, 1.442695
    %v2684 = vpow.pop %v2683
    %v2685 = vmul.f32 %v2682, 1.442695
    %v2686 = vpow.pop %v2685
    %v2687 = vadd.f32 %v2684, 1.0
    %v2688 = vadd.f32 %v2686, 1.0
    %v2689 = vrcp.pop %v2687
    %v2690 = vmul.f32 1.0, %v2689
    %v2691 = vrcp.pop %v2688
    %v2692 = vmul.f32 1.0, %v2691
    %v2693 = vmul.f32 %v2673, %v2690
    %v2694 = vmul.f32 %v2678, %v2692
    %v2695 = vlaneseq
    %v2696 = vshrl.u32 %v2695, 7
    %v2697 = vsub.s32 1, %v2696
    %v2698 = vrot.slane %v2595, %v2697
    %v2700 = vsel %vm48, %v2693, 0
    %v2703 = vsel %vm48, %v2694, 0
    %2705 = vmatprep.subr.mxu0 0.0
    %2706 = vmatpush1.msra.mxu0 %v2591
    %2707 = vmatprep.subr.mxu0 0.0
    %2708 = vmatpush1.msra.mxu0 %v2592
    %2709 = vmatprep.subr.mxu0 0.0
    %2710 = vmatpush1.msra.mxu0 %v2593
    %2711 = vmatprep.subr.mxu0 0.0
    %2712 = vmatpush1.msra.mxu0 %v2594
    %2713 = vmatprep.subr.mxu0 0.0
    %2714 = vmatpush1.msra.mxu0 0.0
    %2715 = vmatprep.subr.mxu0 0.0
    %2716 = vmatpush1.msra.mxu0 0.0
    %2717 = vmatprep.subr.mxu0 0.0
    %2718 = vmatpush1.msra.mxu0 0.0
    %2719 = vmatprep.subr.mxu0 0.0
    %2720 = vmatpush1.msra.mxu0 0.0
    %2721 = vmatprep.subr.mxu0 0.0
    %2722 = vmatpush1.msra.mxu0 0.0
    %2723 = vmatprep.subr.mxu0 0.0
    %2724 = vmatpush1.msra.mxu0 0.0
    %2725 = vmatprep.subr.mxu0 0.0
    %2726 = vmatpush1.msra.mxu0 0.0
    %2727 = vmatprep.subr.mxu0 0.0
    %2728 = vmatpush1.msra.mxu0 0.0
    %2729 = vmatprep.subr.mxu0 0.0
    %2730 = vmatpush1.msra.mxu0 0.0
    %2731 = vmatprep.subr.mxu0 0.0
    %2732 = vmatpush1.msra.mxu0 0.0
    %2733 = vmatprep.subr.mxu0 0.0
    %2734 = vmatpush1.msra.mxu0 0.0
    %2735 = vmatprep.subr.mxu0 0.0
    %2736 = vmatpush1.msra.mxu0 0.0
    %2737 = vmatprep.subr.mxu0 0.0
    %2738 = vmatpush1.msra.mxu0 0.0
    %2739 = vmatprep.subr.mxu0 0.0
    %2740 = vmatpush1.msra.mxu0 0.0
    %2741 = vmatprep.subr.mxu0 0.0
    %2742 = vmatpush1.msra.mxu0 0.0
    %2743 = vmatprep.subr.mxu0 0.0
    %2744 = vmatpush1.msra.mxu0 0.0
    %2745 = vmatprep.subr.mxu0 0.0
    %2746 = vmatpush1.msra.mxu0 0.0
    %2747 = vmatprep.subr.mxu0 0.0
    %2748 = vmatpush1.msra.mxu0 0.0
    %2749 = vmatprep.subr.mxu0 0.0
    %2750 = vmatpush1.msra.mxu0 0.0
    %2751 = vmatprep.subr.mxu0 0.0
    %2752 = vmatpush1.msra.mxu0 0.0
    %2753 = vmatprep.subr.mxu0 0.0
    %2754 = vmatpush1.msra.mxu0 0.0
    %2755 = vmatprep.subr.mxu0 0.0
    %2756 = vmatpush1.msra.mxu0 0.0
    %2757 = vmatprep.subr.mxu0 0.0
    %2758 = vmatpush1.msra.mxu0 0.0
    %2759 = vmatprep.subr.mxu0 0.0
    %2760 = vmatpush1.msra.mxu0 0.0
    %2761 = vmatprep.subr.mxu0 0.0
    %2762 = vmatpush1.msra.mxu0 0.0
    %2763 = vmatprep.subr.mxu0 0.0
    %2764 = vmatpush1.msra.mxu0 0.0
    %2765 = vmatprep.subr.mxu0 0.0
    %2766 = vmatpush1.msra.mxu0 0.0
    %2767 = vmatprep.subr.mxu0 0.0
    %2768 = vmatpush1.msra.mxu0 0.0
    %2769 = vmatprep.mubr.f32.mxu0 0.0
    %2770 = vmatmul.mubr.f32.gmra.mrb[0].mxu0 %v2700
    %v2771 = vpop.f32.mrb[0].mxu0
    %v2772 = vadd.f32 %v2698, %v2771
    %v2773 = vpop.f32.mrb[0].mxu0
    %2774 = vmatprep.mubr.f32.mxu0 0.0
    %2775 = vmatmul.mubr.f32.gmra.mrb[0].mxu0 %v2703
    %v2776 = vpop.f32.mrb[0].mxu0
    %v2777 = vadd.f32 %v2698, %v2776
    %v2778 = vpop.f32.mrb[0].mxu0
    %2779 = vdwg.mxu0
    %2780 = vst.msk [vmem:[#allocation2] sm:$0xff] %vm48, %v2772
    %2781 = vst.msk [vmem:[#allocation2 + $0x8] sm:$0xff] %vm48, %v2777
    // Predicated region
    $region22: #{tpu_custom_call.1} parent=1 // pred_check
      _
    $region23: #{tpu_custom_call.1} parent=1 // pred_check_branch
      %2783 = sbr.rel (0) target = $region25
    $region24: #{tpu_custom_call.1} parent=1 // pred_region
      %s2785 = ssub.s32 256, 256
      %2786 = vsyncadd [#allocation3], %s2785
      %s2787 = sshll.u32 [#allocation2], 4
      %s2788 = int_to_ptr.vmem [resolvable:$true] %s2787
      %2793 = dma.vmem_to_hbm [thread:$0]  %s2788, 256, %s5, [#allocation3], 128, 128, 8
    $region25: #{tpu_custom_call.1} parent=1 // pred_fallthru
      _
    // Predicated region
    $region26: #{tpu_custom_call.1} parent=1 // pred_check
      _
    $region27: #{tpu_custom_call.1} parent=1 // pred_check_branch
      %2795 = sbr.rel (0) target = $region29
    $region28: #{tpu_custom_call.1} parent=1 // pred_region
      %2796 = dma.done [#allocation3], 256
    $region29: #{tpu_custom_call.1} parent=1 // pred_fallthru
      _
    %2797 = vsyncpa [#allocation3], 1

</llo_original>
